<compile_context>
chip_gen: v6e
topology: v6e:2x2x1
jax: 0.10.0
libtpu: 0.0.40
codegen_flags: <defaults>
</compile_context>

<pallas_src>
import functools

import jax
import jax.numpy as jnp
from jax import lax
from jax.experimental import pallas as pl
from jax.experimental.pallas import tpu as pltpu


_NOUT = 128  # classifier lanes padded to a full vreg row (lane-dense final store)


# ----------------------------------------------------------------------------
# Fused forward kernel
# ----------------------------------------------------------------------------
def _lenet_kernel(x_ref, t1_ref, b1_ref, p1we_ref, p1wo_ref,
                  t2_ref, b2_ref, p2we_ref, p2wo_ref,
                  wfc1_ref, bfc1_ref, wfc2_ref, bfc2_ref,
                  wcls_ref, bcls_ref, out_ref, xpad_ref, yp_ref):
    f32 = jnp.float32
    bf16 = jnp.bfloat16
    tb = x_ref.shape[1]                  # batch tile; x block is (28, TB, 28)

    def mm(a, w):
        # bf16 x bf16 -> f32 MXU matmul, M = rows (batch folded into M).
        return jnp.dot(a.astype(bf16), w, preferred_element_type=f32)

    # ---- stage 0: height-pad the input (28 -> 32 rows) into a VMEM scratch ----
    # Scratch rows are ordered h-major / batch-minor: row = h_padded*TB + b.
    # Width padding is folded into the conv1 Toeplitz weights (t1).
    zrows = jnp.zeros((2 * tb, 28), f32)
    xpad_ref[0:2 * tb, :] = zrows
    xpad_ref[30 * tb:32 * tb, :] = zrows
    for h in range(28):
        xpad_ref[(h + 2) * tb:(h + 3) * tb, :] = x_ref[h]

    # ---- conv1 (1->6, k5, pad 2) + bias + ReLU : (28*TB, 6*28) ----
    # t1[ki] is a (28, 168) Toeplitz slab (contraction over input W + kj,
    # output lanes packed as co*28 + j); sum over the 5 vertical taps ki.
    y = mm(xpad_ref[0:28 * tb, :], t1_ref[0])
    for ki in range(1, 5):
        y = y + mm(xpad_ref[ki * tb:(ki + 28) * tb, :], t1_ref[ki])
    y = jnp.maximum(y + b1_ref[...], 0.0)

    # ---- maxpool 2x2/2 : W via 0/1 selection matmuls, H via row-pair max ----
    yw = jnp.maximum(mm(y, p1we_ref[...]), mm(y, p1wo_ref[...]))      # (28*TB, 84)
    for i in range(14):
        yp_ref[i * tb:(i + 1) * tb, :] = jnp.maximum(
            yw[(2 * i) * tb:(2 * i + 1) * tb, :],
            yw[(2 * i + 1) * tb:(2 * i + 2) * tb, :])                 # (14*TB, 84)

    # ---- conv2 (6->16, k5, valid) + bias + ReLU : (10*TB, 16*10) ----
    # t2[ki] is (84, 160): contracts over (cin, pooled W, kj) in one matmul.
    z = mm(yp_ref[0:10 * tb, :], t2_ref[0])
    for ki in range(1, 5):
        z = z + mm(yp_ref[ki * tb:(ki + 10) * tb, :], t2_ref[ki])
    z = jnp.maximum(z + b2_ref[...], 0.0)

    # ---- maxpool 2x2/2 fused with fc1 + ReLU : (TB, 120) ----
    zw = jnp.maximum(mm(z, p2we_ref[...]), mm(z, p2wo_ref[...]))      # (10*TB, 80)
    h = None
    for p in range(5):
        zp = jnp.maximum(zw[(2 * p) * tb:(2 * p + 1) * tb, :],
                         zw[(2 * p + 1) * tb:(2 * p + 2) * tb, :])    # (TB, 80)
        c = mm(zp, wfc1_ref[p])   # PyTorch (C,H,W) flatten folded into wfc1 slabs
        h = c if h is None else h + c
    h = jnp.maximum(h + bfc1_ref[...], 0.0)

    # ---- fc2 + ReLU : (TB, 84) ----
    h = jnp.maximum(mm(h, wfc2_ref[...]) + bfc2_ref[...], 0.0)

    # ---- classifier (lanes padded to 128) : dense (TB, 128) store ----
    out_ref[...] = (mm(h, wcls_ref[...]) + bcls_ref[...]).astype(out_ref.dtype)


# ----------------------------------------------------------------------------
# Host-side parameter packing (pure weight re-indexing, done once per call)
# ----------------------------------------------------------------------------
def _conv_toeplitz(w, w_in, w_out, pad):
    """w: (Cout, Cin, 5, kw) -> (5, Cin*w_in, Cout*w_out) with
    T[ki, ci*w_in + wi, co*w_out + j] = w[co, ci, ki, wi - j + pad]
    whenever 0 <= wi - j + pad < kw (zero otherwise)."""
    cout, cin, kh, kw = w.shape
    wi = jnp.arange(w_in)[:, None]                # (w_in, 1)
    j = jnp.arange(w_out)[None, :]                # (1, w_out)
    kj = wi - j + pad                             # (w_in, w_out)
    valid = (kj >= 0) & (kj < kw)
    kj_c = jnp.clip(kj, 0, kw - 1)
    g = w[:, :, :, kj_c]                          # (Cout, Cin, kh, w_in, w_out)
    g = jnp.where(valid[None, None, None], g, 0.0)
    g = g.transpose(2, 1, 3, 0, 4).reshape(kh, cin * w_in, cout * w_out)
    return g


def _pool_w_select(c, w_in, parity):
    """(c*w_in, c*(w_in//2)) 0/1 matrix selecting lane co*w_in + (2j+parity)."""
    w_half = w_in // 2
    r = jnp.arange(c * w_in)
    col = jnp.arange(c * w_half)
    co_r, wr = r // w_in, r % w_in
    co_c, jc = col // w_half, col % w_half
    m = (co_r[:, None] == co_c[None, :]) & (wr[:, None] == 2 * jc[None, :] + parity)
    return m.astype(jnp.float32)


def _prepare_constants(params, n_classes):
    f32, bf16 = jnp.float32, jnp.bfloat16
    w1 = params["conv1_w"].astype(f32)            # (6, 1, 5, 5)
    w2 = params["conv2_w"].astype(f32)            # (16, 6, 5, 5)

    # conv1: width padding (pad=2) folded into the Toeplitz; conv2: valid.
    t1 = _conv_toeplitz(w1, w_in=28, w_out=28, pad=2).astype(bf16)   # (5, 28, 168)
    t2 = _conv_toeplitz(w2, w_in=14, w_out=10, pad=0).astype(bf16)   # (5, 84, 160)
    b1 = jnp.repeat(params["conv1_b"].astype(f32), 28).reshape(1, 6 * 28)
    b2 = jnp.repeat(params["conv2_b"].astype(f32), 10).reshape(1, 16 * 10)

    # 0/1 even/odd W-selection matrices (exact in bf16).
    p1we = _pool_w_select(6, 28, 0).astype(bf16)                     # (168, 84)
    p1wo = _pool_w_select(6, 28, 1).astype(bf16)
    p2we = _pool_w_select(16, 10, 0).astype(bf16)                    # (160, 80)
    p2wo = _pool_w_select(16, 10, 1).astype(bf16)

    # fc1: PyTorch feature order is co*25 + p*5 + j; repack as 5 per-pooled-row
    # slabs (p, co*5 + j, n) so the lane-packed pooled conv output feeds it
    # directly (no transpose between the conv and FC stacks).
    wfc1 = params["fc1_w"].astype(f32).reshape(120, 16, 5, 5)
    wfc1 = wfc1.transpose(2, 1, 3, 0).reshape(5, 80, 120).astype(bf16)
    bfc1 = params["fc1_b"].astype(f32).reshape(1, 120)

    wfc2 = params["fc2_w"].astype(f32).T.astype(bf16)                # (120, 84)
    bfc2 = params["fc2_b"].astype(f32).reshape(1, 84)

    wcls = jnp.zeros((84, _NOUT), f32).at[:, :n_classes].set(
        params["cls_w"].astype(f32).T).astype(bf16)
    bcls = jnp.zeros((1, _NOUT), f32).at[0, :n_classes].set(
        params["cls_b"].astype(f32))

    return (t1, b1, p1we, p1wo, t2, b2, p2we, p2wo,
            wfc1, bfc1, wfc2, bfc2, wcls, bcls)


# ----------------------------------------------------------------------------
# Pallas wrapper: whole forward in one pallas_call, grid over batch tiles
# ----------------------------------------------------------------------------
def _const_spec(arr):
    if arr.ndim == 2:
        return pl.BlockSpec(arr.shape, lambda b: (0, 0))
    return pl.BlockSpec(arr.shape, lambda b: (0, 0, 0))


def lenet_forward(x_nchw, params, n_classes=10):
    """x_nchw: (B, 1, 28, 28) float32 -> logits (B, n_classes)."""
    B = x_nchw.shape[0]
    assert x_nchw.shape[1:] == (1, 28, 28), x_nchw.shape

    # H-leading layout (28, B, 28): batch lands on the sublane axis inside the
    # kernel, so every matmul folds batch into M.  (Replaces the old host pad.)
    xt = jnp.transpose(x_nchw[:, 0].astype(jnp.float32), (1, 0, 2))

    # Batch tile: up to 128 images per grid step (fits scoped VMEM on all
    # generations); batch is zero-padded to a multiple of the tile, so any
    # batch size is accepted.  Grid over batch is "parallel" (v7x megacore).
    Bp = ((B + 7) // 8) * 8
    TB = min(Bp, 128)
    Bp = ((Bp + TB - 1) // TB) * TB
    if Bp != B:
        xt = jnp.pad(xt, ((0, 0), (0, Bp - B), (0, 0)))

    consts = _prepare_constants(params, n_classes)

    in_specs = [pl.BlockSpec((28, TB, 28), lambda b: (0, b, 0))]
    in_specs += [_const_spec(c) for c in consts]

    out = pl.pallas_call(
        _lenet_kernel,
        out_shape=jax.ShapeDtypeStruct((Bp, _NOUT), jnp.float32),
        grid=(Bp // TB,),
        in_specs=in_specs,
        out_specs=pl.BlockSpec((TB, _NOUT), lambda b: (b, 0)),
        scratch_shapes=[
            pltpu.VMEM((32 * TB, 28), jnp.float32),   # height-padded input rows
            pltpu.VMEM((14 * TB, 84), jnp.float32),   # pool1 output rows
        ],
        compiler_params=pltpu.CompilerParams(dimension_semantics=("parallel",)),
    )(xt, *consts)

    return out[:B, :n_classes]


# ----------------------------------------------------------------------------
# Pure-JAX reference (for a sanity check) and deterministic parameter init
# ----------------------------------------------------------------------------
def lenet_reference(x, params):
    dn = ("NCHW", "OIHW", "NCHW")
    y = lax.conv_general_dilated(x, params["conv1_w"], (1, 1), ((2, 2), (2, 2)),
                                 dimension_numbers=dn)
    y = jax.nn.relu(y + params["conv1_b"][None, :, None, None])
    y = lax.reduce_window(y, -jnp.inf, lax.max, (1, 1, 2, 2), (1, 1, 2, 2), "VALID")
    y = lax.conv_general_dilated(y, params["conv2_w"], (1, 1), ((0, 0), (0, 0)),
                                 dimension_numbers=dn)
    y = jax.nn.relu(y + params["conv2_b"][None, :, None, None])
    y = lax.reduce_window(y, -jnp.inf, lax.max, (1, 1, 2, 2), (1, 1, 2, 2), "VALID")
    f = y.reshape(y.shape[0], -1)
    h = jax.nn.relu(f @ params["fc1_w"].T + params["fc1_b"])
    h = jax.nn.relu(h @ params["fc2_w"].T + params["fc2_b"])
    return h @ params["cls_w"].T + params["cls_b"]


def init_params(key, n_classes=10):
    ks = jax.random.split(key, 10)

    def w_init(k, shape, fan_in):
        return jax.random.normal(k, shape, jnp.float32) / jnp.sqrt(jnp.float32(fan_in))

    return {
        "conv1_w": w_init(ks[0], (6, 1, 5, 5), 1 * 5 * 5),
        "conv1_b": w_init(ks[1], (6,), 1 * 5 * 5),
        "conv2_w": w_init(ks[2], (16, 6, 5, 5), 6 * 5 * 5),
        "conv2_b": w_init(ks[3], (16,), 6 * 5 * 5),
        "fc1_w":   w_init(ks[4], (120, 400), 400),
        "fc1_b":   w_init(ks[5], (120,), 400),
        "fc2_w":   w_init(ks[6], (84, 120), 120),
        "fc2_b":   w_init(ks[7], (84,), 120),
        "cls_w":   w_init(ks[8], (n_classes, 84), 84),
        "cls_b":   w_init(ks[9], (n_classes,), 84),
    }


if __name__ == "__main__":
    key = jax.random.PRNGKey(0)
    k_params, k_x = jax.random.split(key)

    n_classes = 10
    params = init_params(k_params, n_classes)

    # fMNIST-shaped input (28x28 is required by the 16*5*5 flatten), batch=2.
    x = jax.random.normal(k_x, (2, 1, 28, 28), jnp.float32)

    fwd = jax.jit(functools.partial(lenet_forward, n_classes=n_classes))
    logits = jax.block_until_ready(fwd(x, params))

    assert logits.shape == (2, n_classes), logits.shape
    assert logits.dtype == jnp.float32

    # Sanity check against a plain-JAX f32 reference.  Tolerance is loose
    # because the kernel intentionally runs MXU operands in bf16 (f32 accum).
    ref = jax.block_until_ready(jax.jit(lenet_reference)(x, params))
    max_err = float(jnp.max(jnp.abs(logits - ref)))
    assert max_err < 1e-1, f"max abs error vs reference: {max_err}"

    print("KERNEL_OK")
</pallas_src>

<mosaic_0001>
module attributes {stable_mosaic.version = 11 : i64} {
  func.func @_lenet_kernel(%arg0: i32, %arg1: memref<28x8x28xf32, #tpu.memory_space<vmem>>, %arg2: memref<5x28x168xbf16, #tpu.memory_space<vmem>>, %arg3: memref<1x168xf32, #tpu.memory_space<vmem>>, %arg4: memref<168x84xbf16, #tpu.memory_space<vmem>>, %arg5: memref<168x84xbf16, #tpu.memory_space<vmem>>, %arg6: memref<5x84x160xbf16, #tpu.memory_space<vmem>>, %arg7: memref<1x160xf32, #tpu.memory_space<vmem>>, %arg8: memref<160x80xbf16, #tpu.memory_space<vmem>>, %arg9: memref<160x80xbf16, #tpu.memory_space<vmem>>, %arg10: memref<5x80x120xbf16, #tpu.memory_space<vmem>>, %arg11: memref<1x120xf32, #tpu.memory_space<vmem>>, %arg12: memref<120x84xbf16, #tpu.memory_space<vmem>>, %arg13: memref<1x84xf32, #tpu.memory_space<vmem>>, %arg14: memref<84x128xbf16, #tpu.memory_space<vmem>>, %arg15: memref<1x128xf32, #tpu.memory_space<vmem>>, %arg16: memref<8x128xf32, #tpu.memory_space<vmem>>, %arg17: memref<256x28xf32, #tpu.memory_space<vmem>>, %arg18: memref<112x84xf32, #tpu.memory_space<vmem>>) attributes {dimension_semantics = [#tpu.dimension_semantics<parallel>], iteration_bounds = array<i64: 1>, scalar_prefetch = 0 : i64, scratch_operands = 2 : i64, tpu.core_type = #tpu.core_type<tc>, window_params = [{transform_indices = @transform_0, window_bounds = array<i64: 28, 8, 28>}, {pipeline_mode = #tpu.pipeline_mode<synchronous>, transform_indices = @transform_1, window_bounds = array<i64: 5, 28, 168>}, {pipeline_mode = #tpu.pipeline_mode<synchronous>, transform_indices = @transform_2, window_bounds = array<i64: 1, 168>}, {pipeline_mode = #tpu.pipeline_mode<synchronous>, transform_indices = @transform_3, window_bounds = array<i64: 168, 84>}, {pipeline_mode = #tpu.pipeline_mode<synchronous>, transform_indices = @transform_4, window_bounds = array<i64: 168, 84>}, {pipeline_mode = #tpu.pipeline_mode<synchronous>, transform_indices = @transform_5, window_bounds = array<i64: 5, 84, 160>}, {pipeline_mode = #tpu.pipeline_mode<synchronous>, transform_indices = @transform_6, window_bounds = array<i64: 1, 160>}, {pipeline_mode = #tpu.pipeline_mode<synchronous>, transform_indices = @transform_7, window_bounds = array<i64: 160, 80>}, {pipeline_mode = #tpu.pipeline_mode<synchronous>, transform_indices = @transform_8, window_bounds = array<i64: 160, 80>}, {pipeline_mode = #tpu.pipeline_mode<synchronous>, transform_indices = @transform_9, window_bounds = array<i64: 5, 80, 120>}, {pipeline_mode = #tpu.pipeline_mode<synchronous>, transform_indices = @transform_10, window_bounds = array<i64: 1, 120>}, {pipeline_mode = #tpu.pipeline_mode<synchronous>, transform_indices = @transform_11, window_bounds = array<i64: 120, 84>}, {pipeline_mode = #tpu.pipeline_mode<synchronous>, transform_indices = @transform_12, window_bounds = array<i64: 1, 84>}, {pipeline_mode = #tpu.pipeline_mode<synchronous>, transform_indices = @transform_13, window_bounds = array<i64: 84, 128>}, {pipeline_mode = #tpu.pipeline_mode<synchronous>, transform_indices = @transform_14, window_bounds = array<i64: 1, 128>}, {transform_indices = @transform_15, window_bounds = array<i64: 8, 128>}]} {
    %cst = arith.constant 0.000000e+00 : f32
    %0 = vector.broadcast %cst : f32 to vector<16x28xf32>
    %c0 = arith.constant 0 : index
    %c0_0 = arith.constant 0 : index
    %1 = vector.load %arg17[%c0, %c0_0] : memref<256x28xf32, #tpu.memory_space<vmem>>, vector<16x28xf32>
    tpu.vector_store %arg17[%c0, %c0_0], %0 {strides = array<i32>} : memref<256x28xf32, #tpu.memory_space<vmem>>, vector<16x28xf32>,
    %c240 = arith.constant 240 : index
    %c0_1 = arith.constant 0 : index
    %2 = vector.load %arg17[%c240, %c0_1] : memref<256x28xf32, #tpu.memory_space<vmem>>, vector<16x28xf32>
    tpu.vector_store %arg17[%c240, %c0_1], %0 {strides = array<i32>} : memref<256x28xf32, #tpu.memory_space<vmem>>, vector<16x28xf32>,
    %c0_2 = arith.constant 0 : index
    %c0_3 = arith.constant 0 : index
    %c0_4 = arith.constant 0 : index
    %3 = vector.load %arg1[%c0_2, %c0_3, %c0_4] : memref<28x8x28xf32, #tpu.memory_space<vmem>>, vector<1x8x28xf32>
    %4 = vector.shape_cast %3 : vector<1x8x28xf32> to vector<8x28xf32>
    %c16 = arith.constant 16 : index
    %c0_5 = arith.constant 0 : index
    %5 = vector.load %arg17[%c16, %c0_5] : memref<256x28xf32, #tpu.memory_space<vmem>>, vector<8x28xf32>
    tpu.vector_store %arg17[%c16, %c0_5], %4 {strides = array<i32>} : memref<256x28xf32, #tpu.memory_space<vmem>>, vector<8x28xf32>,
    %c1 = arith.constant 1 : index
    %c0_6 = arith.constant 0 : index
    %c0_7 = arith.constant 0 : index
    %6 = vector.load %arg1[%c1, %c0_6, %c0_7] : memref<28x8x28xf32, #tpu.memory_space<vmem>>, vector<1x8x28xf32>
    %7 = vector.shape_cast %6 : vector<1x8x28xf32> to vector<8x28xf32>
    %c24 = arith.constant 24 : index
    %c0_8 = arith.constant 0 : index
    %8 = vector.load %arg17[%c24, %c0_8] : memref<256x28xf32, #tpu.memory_space<vmem>>, vector<8x28xf32>
    tpu.vector_store %arg17[%c24, %c0_8], %7 {strides = array<i32>} : memref<256x28xf32, #tpu.memory_space<vmem>>, vector<8x28xf32>,
    %c2 = arith.constant 2 : index
    %c0_9 = arith.constant 0 : index
    %c0_10 = arith.constant 0 : index
    %9 = vector.load %arg1[%c2, %c0_9, %c0_10] : memref<28x8x28xf32, #tpu.memory_space<vmem>>, vector<1x8x28xf32>
    %10 = vector.shape_cast %9 : vector<1x8x28xf32> to vector<8x28xf32>
    %c32 = arith.constant 32 : index
    %c0_11 = arith.constant 0 : index
    %11 = vector.load %arg17[%c32, %c0_11] : memref<256x28xf32, #tpu.memory_space<vmem>>, vector<8x28xf32>
    tpu.vector_store %arg17[%c32, %c0_11], %10 {strides = array<i32>} : memref<256x28xf32, #tpu.memory_space<vmem>>, vector<8x28xf32>,
    %c3 = arith.constant 3 : index
    %c0_12 = arith.constant 0 : index
    %c0_13 = arith.constant 0 : index
    %12 = vector.load %arg1[%c3, %c0_12, %c0_13] : memref<28x8x28xf32, #tpu.memory_space<vmem>>, vector<1x8x28xf32>
    %13 = vector.shape_cast %12 : vector<1x8x28xf32> to vector<8x28xf32>
    %c40 = arith.constant 40 : index
    %c0_14 = arith.constant 0 : index
    %14 = vector.load %arg17[%c40, %c0_14] : memref<256x28xf32, #tpu.memory_space<vmem>>, vector<8x28xf32>
    tpu.vector_store %arg17[%c40, %c0_14], %13 {strides = array<i32>} : memref<256x28xf32, #tpu.memory_space<vmem>>, vector<8x28xf32>,
    %c4 = arith.constant 4 : index
    %c0_15 = arith.constant 0 : index
    %c0_16 = arith.constant 0 : index
    %15 = vector.load %arg1[%c4, %c0_15, %c0_16] : memref<28x8x28xf32, #tpu.memory_space<vmem>>, vector<1x8x28xf32>
    %16 = vector.shape_cast %15 : vector<1x8x28xf32> to vector<8x28xf32>
    %c48 = arith.constant 48 : index
    %c0_17 = arith.constant 0 : index
    %17 = vector.load %arg17[%c48, %c0_17] : memref<256x28xf32, #tpu.memory_space<vmem>>, vector<8x28xf32>
    tpu.vector_store %arg17[%c48, %c0_17], %16 {strides = array<i32>} : memref<256x28xf32, #tpu.memory_space<vmem>>, vector<8x28xf32>,
    %c5 = arith.constant 5 : index
    %c0_18 = arith.constant 0 : index
    %c0_19 = arith.constant 0 : index
    %18 = vector.load %arg1[%c5, %c0_18, %c0_19] : memref<28x8x28xf32, #tpu.memory_space<vmem>>, vector<1x8x28xf32>
    %19 = vector.shape_cast %18 : vector<1x8x28xf32> to vector<8x28xf32>
    %c56 = arith.constant 56 : index
    %c0_20 = arith.constant 0 : index
    %20 = vector.load %arg17[%c56, %c0_20] : memref<256x28xf32, #tpu.memory_space<vmem>>, vector<8x28xf32>
    tpu.vector_store %arg17[%c56, %c0_20], %19 {strides = array<i32>} : memref<256x28xf32, #tpu.memory_space<vmem>>, vector<8x28xf32>,
    %c6 = arith.constant 6 : index
    %c0_21 = arith.constant 0 : index
    %c0_22 = arith.constant 0 : index
    %21 = vector.load %arg1[%c6, %c0_21, %c0_22] : memref<28x8x28xf32, #tpu.memory_space<vmem>>, vector<1x8x28xf32>
    %22 = vector.shape_cast %21 : vector<1x8x28xf32> to vector<8x28xf32>
    %c64 = arith.constant 64 : index
    %c0_23 = arith.constant 0 : index
    %23 = vector.load %arg17[%c64, %c0_23] : memref<256x28xf32, #tpu.memory_space<vmem>>, vector<8x28xf32>
    tpu.vector_store %arg17[%c64, %c0_23], %22 {strides = array<i32>} : memref<256x28xf32, #tpu.memory_space<vmem>>, vector<8x28xf32>,
    %c7 = arith.constant 7 : index
    %c0_24 = arith.constant 0 : index
    %c0_25 = arith.constant 0 : index
    %24 = vector.load %arg1[%c7, %c0_24, %c0_25] : memref<28x8x28xf32, #tpu.memory_space<vmem>>, vector<1x8x28xf32>
    %25 = vector.shape_cast %24 : vector<1x8x28xf32> to vector<8x28xf32>
    %c72 = arith.constant 72 : index
    %c0_26 = arith.constant 0 : index
    %26 = vector.load %arg17[%c72, %c0_26] : memref<256x28xf32, #tpu.memory_space<vmem>>, vector<8x28xf32>
    tpu.vector_store %arg17[%c72, %c0_26], %25 {strides = array<i32>} : memref<256x28xf32, #tpu.memory_space<vmem>>, vector<8x28xf32>,
    %c8 = arith.constant 8 : index
    %c0_27 = arith.constant 0 : index
    %c0_28 = arith.constant 0 : index
    %27 = vector.load %arg1[%c8, %c0_27, %c0_28] : memref<28x8x28xf32, #tpu.memory_space<vmem>>, vector<1x8x28xf32>
    %28 = vector.shape_cast %27 : vector<1x8x28xf32> to vector<8x28xf32>
    %c80 = arith.constant 80 : index
    %c0_29 = arith.constant 0 : index
    %29 = vector.load %arg17[%c80, %c0_29] : memref<256x28xf32, #tpu.memory_space<vmem>>, vector<8x28xf32>
    tpu.vector_store %arg17[%c80, %c0_29], %28 {strides = array<i32>} : memref<256x28xf32, #tpu.memory_space<vmem>>, vector<8x28xf32>,
    %c9 = arith.constant 9 : index
    %c0_30 = arith.constant 0 : index
    %c0_31 = arith.constant 0 : index
    %30 = vector.load %arg1[%c9, %c0_30, %c0_31] : memref<28x8x28xf32, #tpu.memory_space<vmem>>, vector<1x8x28xf32>
    %31 = vector.shape_cast %30 : vector<1x8x28xf32> to vector<8x28xf32>
    %c88 = arith.constant 88 : index
    %c0_32 = arith.constant 0 : index
    %32 = vector.load %arg17[%c88, %c0_32] : memref<256x28xf32, #tpu.memory_space<vmem>>, vector<8x28xf32>
    tpu.vector_store %arg17[%c88, %c0_32], %31 {strides = array<i32>} : memref<256x28xf32, #tpu.memory_space<vmem>>, vector<8x28xf32>,
    %c10 = arith.constant 10 : index
    %c0_33 = arith.constant 0 : index
    %c0_34 = arith.constant 0 : index
    %33 = vector.load %arg1[%c10, %c0_33, %c0_34] : memref<28x8x28xf32, #tpu.memory_space<vmem>>, vector<1x8x28xf32>
    %34 = vector.shape_cast %33 : vector<1x8x28xf32> to vector<8x28xf32>
    %c96 = arith.constant 96 : index
    %c0_35 = arith.constant 0 : index
    %35 = vector.load %arg17[%c96, %c0_35] : memref<256x28xf32, #tpu.memory_space<vmem>>, vector<8x28xf32>
    tpu.vector_store %arg17[%c96, %c0_35], %34 {strides = array<i32>} : memref<256x28xf32, #tpu.memory_space<vmem>>, vector<8x28xf32>,
    %c11 = arith.constant 11 : index
    %c0_36 = arith.constant 0 : index
    %c0_37 = arith.constant 0 : index
    %36 = vector.load %arg1[%c11, %c0_36, %c0_37] : memref<28x8x28xf32, #tpu.memory_space<vmem>>, vector<1x8x28xf32>
    %37 = vector.shape_cast %36 : vector<1x8x28xf32> to vector<8x28xf32>
    %c104 = arith.constant 104 : index
    %c0_38 = arith.constant 0 : index
    %38 = vector.load %arg17[%c104, %c0_38] : memref<256x28xf32, #tpu.memory_space<vmem>>, vector<8x28xf32>
    tpu.vector_store %arg17[%c104, %c0_38], %37 {strides = array<i32>} : memref<256x28xf32, #tpu.memory_space<vmem>>, vector<8x28xf32>,
    %c12 = arith.constant 12 : index
    %c0_39 = arith.constant 0 : index
    %c0_40 = arith.constant 0 : index
    %39 = vector.load %arg1[%c12, %c0_39, %c0_40] : memref<28x8x28xf32, #tpu.memory_space<vmem>>, vector<1x8x28xf32>
    %40 = vector.shape_cast %39 : vector<1x8x28xf32> to vector<8x28xf32>
    %c112 = arith.constant 112 : index
    %c0_41 = arith.constant 0 : index
    %41 = vector.load %arg17[%c112, %c0_41] : memref<256x28xf32, #tpu.memory_space<vmem>>, vector<8x28xf32>
    tpu.vector_store %arg17[%c112, %c0_41], %40 {strides = array<i32>} : memref<256x28xf32, #tpu.memory_space<vmem>>, vector<8x28xf32>,
    %c13 = arith.constant 13 : index
    %c0_42 = arith.constant 0 : index
    %c0_43 = arith.constant 0 : index
    %42 = vector.load %arg1[%c13, %c0_42, %c0_43] : memref<28x8x28xf32, #tpu.memory_space<vmem>>, vector<1x8x28xf32>
    %43 = vector.shape_cast %42 : vector<1x8x28xf32> to vector<8x28xf32>
    %c120 = arith.constant 120 : index
    %c0_44 = arith.constant 0 : index
    %44 = vector.load %arg17[%c120, %c0_44] : memref<256x28xf32, #tpu.memory_space<vmem>>, vector<8x28xf32>
    tpu.vector_store %arg17[%c120, %c0_44], %43 {strides = array<i32>} : memref<256x28xf32, #tpu.memory_space<vmem>>, vector<8x28xf32>,
    %c14 = arith.constant 14 : index
    %c0_45 = arith.constant 0 : index
    %c0_46 = arith.constant 0 : index
    %45 = vector.load %arg1[%c14, %c0_45, %c0_46] : memref<28x8x28xf32, #tpu.memory_space<vmem>>, vector<1x8x28xf32>
    %46 = vector.shape_cast %45 : vector<1x8x28xf32> to vector<8x28xf32>
    %c128 = arith.constant 128 : index
    %c0_47 = arith.constant 0 : index
    %47 = vector.load %arg17[%c128, %c0_47] : memref<256x28xf32, #tpu.memory_space<vmem>>, vector<8x28xf32>
    tpu.vector_store %arg17[%c128, %c0_47], %46 {strides = array<i32>} : memref<256x28xf32, #tpu.memory_space<vmem>>, vector<8x28xf32>,
    %c15 = arith.constant 15 : index
    %c0_48 = arith.constant 0 : index
    %c0_49 = arith.constant 0 : index
    %48 = vector.load %arg1[%c15, %c0_48, %c0_49] : memref<28x8x28xf32, #tpu.memory_space<vmem>>, vector<1x8x28xf32>
    %49 = vector.shape_cast %48 : vector<1x8x28xf32> to vector<8x28xf32>
    %c136 = arith.constant 136 : index
    %c0_50 = arith.constant 0 : index
    %50 = vector.load %arg17[%c136, %c0_50] : memref<256x28xf32, #tpu.memory_space<vmem>>, vector<8x28xf32>
    tpu.vector_store %arg17[%c136, %c0_50], %49 {strides = array<i32>} : memref<256x28xf32, #tpu.memory_space<vmem>>, vector<8x28xf32>,
    %c16_51 = arith.constant 16 : index
    %c0_52 = arith.constant 0 : index
    %c0_53 = arith.constant 0 : index
    %51 = vector.load %arg1[%c16_51, %c0_52, %c0_53] : memref<28x8x28xf32, #tpu.memory_space<vmem>>, vector<1x8x28xf32>
    %52 = vector.shape_cast %51 : vector<1x8x28xf32> to vector<8x28xf32>
    %c144 = arith.constant 144 : index
    %c0_54 = arith.constant 0 : index
    %53 = vector.load %arg17[%c144, %c0_54] : memref<256x28xf32, #tpu.memory_space<vmem>>, vector<8x28xf32>
    tpu.vector_store %arg17[%c144, %c0_54], %52 {strides = array<i32>} : memref<256x28xf32, #tpu.memory_space<vmem>>, vector<8x28xf32>,
    %c17 = arith.constant 17 : index
    %c0_55 = arith.constant 0 : index
    %c0_56 = arith.constant 0 : index
    %54 = vector.load %arg1[%c17, %c0_55, %c0_56] : memref<28x8x28xf32, #tpu.memory_space<vmem>>, vector<1x8x28xf32>
    %55 = vector.shape_cast %54 : vector<1x8x28xf32> to vector<8x28xf32>
    %c152 = arith.constant 152 : index
    %c0_57 = arith.constant 0 : index
    %56 = vector.load %arg17[%c152, %c0_57] : memref<256x28xf32, #tpu.memory_space<vmem>>, vector<8x28xf32>
    tpu.vector_store %arg17[%c152, %c0_57], %55 {strides = array<i32>} : memref<256x28xf32, #tpu.memory_space<vmem>>, vector<8x28xf32>,
    %c18 = arith.constant 18 : index
    %c0_58 = arith.constant 0 : index
    %c0_59 = arith.constant 0 : index
    %57 = vector.load %arg1[%c18, %c0_58, %c0_59] : memref<28x8x28xf32, #tpu.memory_space<vmem>>, vector<1x8x28xf32>
    %58 = vector.shape_cast %57 : vector<1x8x28xf32> to vector<8x28xf32>
    %c160 = arith.constant 160 : index
    %c0_60 = arith.constant 0 : index
    %59 = vector.load %arg17[%c160, %c0_60] : memref<256x28xf32, #tpu.memory_space<vmem>>, vector<8x28xf32>
    tpu.vector_store %arg17[%c160, %c0_60], %58 {strides = array<i32>} : memref<256x28xf32, #tpu.memory_space<vmem>>, vector<8x28xf32>,
    %c19 = arith.constant 19 : index
    %c0_61 = arith.constant 0 : index
    %c0_62 = arith.constant 0 : index
    %60 = vector.load %arg1[%c19, %c0_61, %c0_62] : memref<28x8x28xf32, #tpu.memory_space<vmem>>, vector<1x8x28xf32>
    %61 = vector.shape_cast %60 : vector<1x8x28xf32> to vector<8x28xf32>
    %c168 = arith.constant 168 : index
    %c0_63 = arith.constant 0 : index
    %62 = vector.load %arg17[%c168, %c0_63] : memref<256x28xf32, #tpu.memory_space<vmem>>, vector<8x28xf32>
    tpu.vector_store %arg17[%c168, %c0_63], %61 {strides = array<i32>} : memref<256x28xf32, #tpu.memory_space<vmem>>, vector<8x28xf32>,
    %c20 = arith.constant 20 : index
    %c0_64 = arith.constant 0 : index
    %c0_65 = arith.constant 0 : index
    %63 = vector.load %arg1[%c20, %c0_64, %c0_65] : memref<28x8x28xf32, #tpu.memory_space<vmem>>, vector<1x8x28xf32>
    %64 = vector.shape_cast %63 : vector<1x8x28xf32> to vector<8x28xf32>
    %c176 = arith.constant 176 : index
    %c0_66 = arith.constant 0 : index
    %65 = vector.load %arg17[%c176, %c0_66] : memref<256x28xf32, #tpu.memory_space<vmem>>, vector<8x28xf32>
    tpu.vector_store %arg17[%c176, %c0_66], %64 {strides = array<i32>} : memref<256x28xf32, #tpu.memory_space<vmem>>, vector<8x28xf32>,
    %c21 = arith.constant 21 : index
    %c0_67 = arith.constant 0 : index
    %c0_68 = arith.constant 0 : index
    %66 = vector.load %arg1[%c21, %c0_67, %c0_68] : memref<28x8x28xf32, #tpu.memory_space<vmem>>, vector<1x8x28xf32>
    %67 = vector.shape_cast %66 : vector<1x8x28xf32> to vector<8x28xf32>
    %c184 = arith.constant 184 : index
    %c0_69 = arith.constant 0 : index
    %68 = vector.load %arg17[%c184, %c0_69] : memref<256x28xf32, #tpu.memory_space<vmem>>, vector<8x28xf32>
    tpu.vector_store %arg17[%c184, %c0_69], %67 {strides = array<i32>} : memref<256x28xf32, #tpu.memory_space<vmem>>, vector<8x28xf32>,
    %c22 = arith.constant 22 : index
    %c0_70 = arith.constant 0 : index
    %c0_71 = arith.constant 0 : index
    %69 = vector.load %arg1[%c22, %c0_70, %c0_71] : memref<28x8x28xf32, #tpu.memory_space<vmem>>, vector<1x8x28xf32>
    %70 = vector.shape_cast %69 : vector<1x8x28xf32> to vector<8x28xf32>
    %c192 = arith.constant 192 : index
    %c0_72 = arith.constant 0 : index
    %71 = vector.load %arg17[%c192, %c0_72] : memref<256x28xf32, #tpu.memory_space<vmem>>, vector<8x28xf32>
    tpu.vector_store %arg17[%c192, %c0_72], %70 {strides = array<i32>} : memref<256x28xf32, #tpu.memory_space<vmem>>, vector<8x28xf32>,
    %c23 = arith.constant 23 : index
    %c0_73 = arith.constant 0 : index
    %c0_74 = arith.constant 0 : index
    %72 = vector.load %arg1[%c23, %c0_73, %c0_74] : memref<28x8x28xf32, #tpu.memory_space<vmem>>, vector<1x8x28xf32>
    %73 = vector.shape_cast %72 : vector<1x8x28xf32> to vector<8x28xf32>
    %c200 = arith.constant 200 : index
    %c0_75 = arith.constant 0 : index
    %74 = vector.load %arg17[%c200, %c0_75] : memref<256x28xf32, #tpu.memory_space<vmem>>, vector<8x28xf32>
    tpu.vector_store %arg17[%c200, %c0_75], %73 {strides = array<i32>} : memref<256x28xf32, #tpu.memory_space<vmem>>, vector<8x28xf32>,
    %c24_76 = arith.constant 24 : index
    %c0_77 = arith.constant 0 : index
    %c0_78 = arith.constant 0 : index
    %75 = vector.load %arg1[%c24_76, %c0_77, %c0_78] : memref<28x8x28xf32, #tpu.memory_space<vmem>>, vector<1x8x28xf32>
    %76 = vector.shape_cast %75 : vector<1x8x28xf32> to vector<8x28xf32>
    %c208 = arith.constant 208 : index
    %c0_79 = arith.constant 0 : index
    %77 = vector.load %arg17[%c208, %c0_79] : memref<256x28xf32, #tpu.memory_space<vmem>>, vector<8x28xf32>
    tpu.vector_store %arg17[%c208, %c0_79], %76 {strides = array<i32>} : memref<256x28xf32, #tpu.memory_space<vmem>>, vector<8x28xf32>,
    %c25 = arith.constant 25 : index
    %c0_80 = arith.constant 0 : index
    %c0_81 = arith.constant 0 : index
    %78 = vector.load %arg1[%c25, %c0_80, %c0_81] : memref<28x8x28xf32, #tpu.memory_space<vmem>>, vector<1x8x28xf32>
    %79 = vector.shape_cast %78 : vector<1x8x28xf32> to vector<8x28xf32>
    %c216 = arith.constant 216 : index
    %c0_82 = arith.constant 0 : index
    %80 = vector.load %arg17[%c216, %c0_82] : memref<256x28xf32, #tpu.memory_space<vmem>>, vector<8x28xf32>
    tpu.vector_store %arg17[%c216, %c0_82], %79 {strides = array<i32>} : memref<256x28xf32, #tpu.memory_space<vmem>>, vector<8x28xf32>,
    %c26 = arith.constant 26 : index
    %c0_83 = arith.constant 0 : index
    %c0_84 = arith.constant 0 : index
    %81 = vector.load %arg1[%c26, %c0_83, %c0_84] : memref<28x8x28xf32, #tpu.memory_space<vmem>>, vector<1x8x28xf32>
    %82 = vector.shape_cast %81 : vector<1x8x28xf32> to vector<8x28xf32>
    %c224 = arith.constant 224 : index
    %c0_85 = arith.constant 0 : index
    %83 = vector.load %arg17[%c224, %c0_85] : memref<256x28xf32, #tpu.memory_space<vmem>>, vector<8x28xf32>
    tpu.vector_store %arg17[%c224, %c0_85], %82 {strides = array<i32>} : memref<256x28xf32, #tpu.memory_space<vmem>>, vector<8x28xf32>,
    %c27 = arith.constant 27 : index
    %c0_86 = arith.constant 0 : index
    %c0_87 = arith.constant 0 : index
    %84 = vector.load %arg1[%c27, %c0_86, %c0_87] : memref<28x8x28xf32, #tpu.memory_space<vmem>>, vector<1x8x28xf32>
    %85 = vector.shape_cast %84 : vector<1x8x28xf32> to vector<8x28xf32>
    %c232 = arith.constant 232 : index
    %c0_88 = arith.constant 0 : index
    %86 = vector.load %arg17[%c232, %c0_88] : memref<256x28xf32, #tpu.memory_space<vmem>>, vector<8x28xf32>
    tpu.vector_store %arg17[%c232, %c0_88], %85 {strides = array<i32>} : memref<256x28xf32, #tpu.memory_space<vmem>>, vector<8x28xf32>,
    %c0_89 = arith.constant 0 : index
    %c0_90 = arith.constant 0 : index
    %87 = vector.load %arg17[%c0_89, %c0_90] : memref<256x28xf32, #tpu.memory_space<vmem>>, vector<224x28xf32>
    %c0_91 = arith.constant 0 : index
    %c0_92 = arith.constant 0 : index
    %c0_93 = arith.constant 0 : index
    %88 = vector.load %arg2[%c0_91, %c0_92, %c0_93] : memref<5x28x168xbf16, #tpu.memory_space<vmem>>, vector<1x28x168xbf16>
    %89 = vector.shape_cast %88 : vector<1x28x168xbf16> to vector<28x168xbf16>
    %90 = arith.truncf %87 : vector<224x28xf32> to vector<224x28xbf16>
    %cst_94 = arith.constant dense<0.000000e+00> : vector<224x168xf32>
    %91 = tpu.matmul %90, %89, %cst_94 {dimension_numbers = #tpu.dot_dimension_numbers<[1], [0], [0], [1], [0, 0, 1, 1], [], []>} : vector<224x28xbf16>, vector<28x168xbf16>, vector<224x168xf32> -> vector<224x168xf32>
    %c8_95 = arith.constant 8 : index
    %c0_96 = arith.constant 0 : index
    %92 = vector.load %arg17[%c8_95, %c0_96] : memref<256x28xf32, #tpu.memory_space<vmem>>, vector<224x28xf32>
    %c1_97 = arith.constant 1 : index
    %c0_98 = arith.constant 0 : index
    %c0_99 = arith.constant 0 : index
    %93 = vector.load %arg2[%c1_97, %c0_98, %c0_99] : memref<5x28x168xbf16, #tpu.memory_space<vmem>>, vector<1x28x168xbf16>
    %94 = vector.shape_cast %93 : vector<1x28x168xbf16> to vector<28x168xbf16>
    %95 = arith.truncf %92 : vector<224x28xf32> to vector<224x28xbf16>
    %cst_100 = arith.constant dense<0.000000e+00> : vector<224x168xf32>
    %96 = tpu.matmul %95, %94, %cst_100 {dimension_numbers = #tpu.dot_dimension_numbers<[1], [0], [0], [1], [0, 0, 1, 1], [], []>} : vector<224x28xbf16>, vector<28x168xbf16>, vector<224x168xf32> -> vector<224x168xf32>
    %97 = arith.addf %91, %96 : vector<224x168xf32>
    %c16_101 = arith.constant 16 : index
    %c0_102 = arith.constant 0 : index
    %98 = vector.load %arg17[%c16_101, %c0_102] : memref<256x28xf32, #tpu.memory_space<vmem>>, vector<224x28xf32>
    %c2_103 = arith.constant 2 : index
    %c0_104 = arith.constant 0 : index
    %c0_105 = arith.constant 0 : index
    %99 = vector.load %arg2[%c2_103, %c0_104, %c0_105] : memref<5x28x168xbf16, #tpu.memory_space<vmem>>, vector<1x28x168xbf16>
    %100 = vector.shape_cast %99 : vector<1x28x168xbf16> to vector<28x168xbf16>
    %101 = arith.truncf %98 : vector<224x28xf32> to vector<224x28xbf16>
    %cst_106 = arith.constant dense<0.000000e+00> : vector<224x168xf32>
    %102 = tpu.matmul %101, %100, %cst_106 {dimension_numbers = #tpu.dot_dimension_numbers<[1], [0], [0], [1], [0, 0, 1, 1], [], []>} : vector<224x28xbf16>, vector<28x168xbf16>, vector<224x168xf32> -> vector<224x168xf32>
    %103 = arith.addf %97, %102 : vector<224x168xf32>
    %c24_107 = arith.constant 24 : index
    %c0_108 = arith.constant 0 : index
    %104 = vector.load %arg17[%c24_107, %c0_108] : memref<256x28xf32, #tpu.memory_space<vmem>>, vector<224x28xf32>
    %c3_109 = arith.constant 3 : index
    %c0_110 = arith.constant 0 : index
    %c0_111 = arith.constant 0 : index
    %105 = vector.load %arg2[%c3_109, %c0_110, %c0_111] : memref<5x28x168xbf16, #tpu.memory_space<vmem>>, vector<1x28x168xbf16>
    %106 = vector.shape_cast %105 : vector<1x28x168xbf16> to vector<28x168xbf16>
    %107 = arith.truncf %104 : vector<224x28xf32> to vector<224x28xbf16>
    %cst_112 = arith.constant dense<0.000000e+00> : vector<224x168xf32>
    %108 = tpu.matmul %107, %106, %cst_112 {dimension_numbers = #tpu.dot_dimension_numbers<[1], [0], [0], [1], [0, 0, 1, 1], [], []>} : vector<224x28xbf16>, vector<28x168xbf16>, vector<224x168xf32> -> vector<224x168xf32>
    %109 = arith.addf %103, %108 : vector<224x168xf32>
    %c32_113 = arith.constant 32 : index
    %c0_114 = arith.constant 0 : index
    %110 = vector.load %arg17[%c32_113, %c0_114] : memref<256x28xf32, #tpu.memory_space<vmem>>, vector<224x28xf32>
    %c4_115 = arith.constant 4 : index
    %c0_116 = arith.constant 0 : index
    %c0_117 = arith.constant 0 : index
    %111 = vector.load %arg2[%c4_115, %c0_116, %c0_117] : memref<5x28x168xbf16, #tpu.memory_space<vmem>>, vector<1x28x168xbf16>
    %112 = vector.shape_cast %111 : vector<1x28x168xbf16> to vector<28x168xbf16>
    %113 = arith.truncf %110 : vector<224x28xf32> to vector<224x28xbf16>
    %cst_118 = arith.constant dense<0.000000e+00> : vector<224x168xf32>
    %114 = tpu.matmul %113, %112, %cst_118 {dimension_numbers = #tpu.dot_dimension_numbers<[1], [0], [0], [1], [0, 0, 1, 1], [], []>} : vector<224x28xbf16>, vector<28x168xbf16>, vector<224x168xf32> -> vector<224x168xf32>
    %115 = arith.addf %109, %114 : vector<224x168xf32>
    %c0_119 = arith.constant 0 : index
    %c0_120 = arith.constant 0 : index
    %116 = vector.load %arg3[%c0_119, %c0_120] : memref<1x168xf32, #tpu.memory_space<vmem>>, vector<1x168xf32>
    %117 = vector.broadcast %116 : vector<1x168xf32> to vector<224x168xf32>
    %118 = arith.addf %115, %117 : vector<224x168xf32>
    %cst_121 = arith.constant 0.000000e+00 : f32
    %119 = vector.broadcast %cst_121 : f32 to vector<224x168xf32>
    %120 = arith.maximumf %118, %119 : vector<224x168xf32>
    %c0_122 = arith.constant 0 : index
    %c0_123 = arith.constant 0 : index
    %121 = vector.load %arg4[%c0_122, %c0_123] : memref<168x84xbf16, #tpu.memory_space<vmem>>, vector<168x84xbf16>
    %122 = arith.truncf %120 : vector<224x168xf32> to vector<224x168xbf16>
    %cst_124 = arith.constant dense<0.000000e+00> : vector<224x84xf32>
    %123 = tpu.matmul %122, %121, %cst_124 {dimension_numbers = #tpu.dot_dimension_numbers<[1], [0], [0], [1], [0, 0, 1, 1], [], []>} : vector<224x168xbf16>, vector<168x84xbf16>, vector<224x84xf32> -> vector<224x84xf32>
    %c0_125 = arith.constant 0 : index
    %c0_126 = arith.constant 0 : index
    %124 = vector.load %arg5[%c0_125, %c0_126] : memref<168x84xbf16, #tpu.memory_space<vmem>>, vector<168x84xbf16>
    %125 = arith.truncf %120 : vector<224x168xf32> to vector<224x168xbf16>
    %cst_127 = arith.constant dense<0.000000e+00> : vector<224x84xf32>
    %126 = tpu.matmul %125, %124, %cst_127 {dimension_numbers = #tpu.dot_dimension_numbers<[1], [0], [0], [1], [0, 0, 1, 1], [], []>} : vector<224x168xbf16>, vector<168x84xbf16>, vector<224x84xf32> -> vector<224x84xf32>
    %127 = arith.maximumf %123, %126 : vector<224x84xf32>
    %128 = vector.extract_strided_slice %127 {offsets = [0, 0], sizes = [8, 84], strides = [1, 1]} : vector<224x84xf32> to vector<8x84xf32>
    %129 = vector.extract_strided_slice %127 {offsets = [8, 0], sizes = [8, 84], strides = [1, 1]} : vector<224x84xf32> to vector<8x84xf32>
    %130 = arith.maximumf %128, %129 : vector<8x84xf32>
    %c0_128 = arith.constant 0 : index
    %c0_129 = arith.constant 0 : index
    %131 = vector.load %arg18[%c0_128, %c0_129] : memref<112x84xf32, #tpu.memory_space<vmem>>, vector<8x84xf32>
    tpu.vector_store %arg18[%c0_128, %c0_129], %130 {strides = array<i32>} : memref<112x84xf32, #tpu.memory_space<vmem>>, vector<8x84xf32>,
    %132 = vector.extract_strided_slice %127 {offsets = [16, 0], sizes = [8, 84], strides = [1, 1]} : vector<224x84xf32> to vector<8x84xf32>
    %133 = vector.extract_strided_slice %127 {offsets = [24, 0], sizes = [8, 84], strides = [1, 1]} : vector<224x84xf32> to vector<8x84xf32>
    %134 = arith.maximumf %132, %133 : vector<8x84xf32>
    %c8_130 = arith.constant 8 : index
    %c0_131 = arith.constant 0 : index
    %135 = vector.load %arg18[%c8_130, %c0_131] : memref<112x84xf32, #tpu.memory_space<vmem>>, vector<8x84xf32>
    tpu.vector_store %arg18[%c8_130, %c0_131], %134 {strides = array<i32>} : memref<112x84xf32, #tpu.memory_space<vmem>>, vector<8x84xf32>,
    %136 = vector.extract_strided_slice %127 {offsets = [32, 0], sizes = [8, 84], strides = [1, 1]} : vector<224x84xf32> to vector<8x84xf32>
    %137 = vector.extract_strided_slice %127 {offsets = [40, 0], sizes = [8, 84], strides = [1, 1]} : vector<224x84xf32> to vector<8x84xf32>
    %138 = arith.maximumf %136, %137 : vector<8x84xf32>
    %c16_132 = arith.constant 16 : index
    %c0_133 = arith.constant 0 : index
    %139 = vector.load %arg18[%c16_132, %c0_133] : memref<112x84xf32, #tpu.memory_space<vmem>>, vector<8x84xf32>
    tpu.vector_store %arg18[%c16_132, %c0_133], %138 {strides = array<i32>} : memref<112x84xf32, #tpu.memory_space<vmem>>, vector<8x84xf32>,
    %140 = vector.extract_strided_slice %127 {offsets = [48, 0], sizes = [8, 84], strides = [1, 1]} : vector<224x84xf32> to vector<8x84xf32>
    %141 = vector.extract_strided_slice %127 {offsets = [56, 0], sizes = [8, 84], strides = [1, 1]} : vector<224x84xf32> to vector<8x84xf32>
    %142 = arith.maximumf %140, %141 : vector<8x84xf32>
    %c24_134 = arith.constant 24 : index
    %c0_135 = arith.constant 0 : index
    %143 = vector.load %arg18[%c24_134, %c0_135] : memref<112x84xf32, #tpu.memory_space<vmem>>, vector<8x84xf32>
    tpu.vector_store %arg18[%c24_134, %c0_135], %142 {strides = array<i32>} : memref<112x84xf32, #tpu.memory_space<vmem>>, vector<8x84xf32>,
    %144 = vector.extract_strided_slice %127 {offsets = [64, 0], sizes = [8, 84], strides = [1, 1]} : vector<224x84xf32> to vector<8x84xf32>
    %145 = vector.extract_strided_slice %127 {offsets = [72, 0], sizes = [8, 84], strides = [1, 1]} : vector<224x84xf32> to vector<8x84xf32>
    %146 = arith.maximumf %144, %145 : vector<8x84xf32>
    %c32_136 = arith.constant 32 : index
    %c0_137 = arith.constant 0 : index
    %147 = vector.load %arg18[%c32_136, %c0_137] : memref<112x84xf32, #tpu.memory_space<vmem>>, vector<8x84xf32>
    tpu.vector_store %arg18[%c32_136, %c0_137], %146 {strides = array<i32>} : memref<112x84xf32, #tpu.memory_space<vmem>>, vector<8x84xf32>,
    %148 = vector.extract_strided_slice %127 {offsets = [80, 0], sizes = [8, 84], strides = [1, 1]} : vector<224x84xf32> to vector<8x84xf32>
    %149 = vector.extract_strided_slice %127 {offsets = [88, 0], sizes = [8, 84], strides = [1, 1]} : vector<224x84xf32> to vector<8x84xf32>
    %150 = arith.maximumf %148, %149 : vector<8x84xf32>
    %c40_138 = arith.constant 40 : index
    %c0_139 = arith.constant 0 : index
    %151 = vector.load %arg18[%c40_138, %c0_139] : memref<112x84xf32, #tpu.memory_space<vmem>>, vector<8x84xf32>
    tpu.vector_store %arg18[%c40_138, %c0_139], %150 {strides = array<i32>} : memref<112x84xf32, #tpu.memory_space<vmem>>, vector<8x84xf32>,
    %152 = vector.extract_strided_slice %127 {offsets = [96, 0], sizes = [8, 84], strides = [1, 1]} : vector<224x84xf32> to vector<8x84xf32>
    %153 = vector.extract_strided_slice %127 {offsets = [104, 0], sizes = [8, 84], strides = [1, 1]} : vector<224x84xf32> to vector<8x84xf32>
    %154 = arith.maximumf %152, %153 : vector<8x84xf32>
    %c48_140 = arith.constant 48 : index
    %c0_141 = arith.constant 0 : index
    %155 = vector.load %arg18[%c48_140, %c0_141] : memref<112x84xf32, #tpu.memory_space<vmem>>, vector<8x84xf32>
    tpu.vector_store %arg18[%c48_140, %c0_141], %154 {strides = array<i32>} : memref<112x84xf32, #tpu.memory_space<vmem>>, vector<8x84xf32>,
    %156 = vector.extract_strided_slice %127 {offsets = [112, 0], sizes = [8, 84], strides = [1, 1]} : vector<224x84xf32> to vector<8x84xf32>
    %157 = vector.extract_strided_slice %127 {offsets = [120, 0], sizes = [8, 84], strides = [1, 1]} : vector<224x84xf32> to vector<8x84xf32>
    %158 = arith.maximumf %156, %157 : vector<8x84xf32>
    %c56_142 = arith.constant 56 : index
    %c0_143 = arith.constant 0 : index
    %159 = vector.load %arg18[%c56_142, %c0_143] : memref<112x84xf32, #tpu.memory_space<vmem>>, vector<8x84xf32>
    tpu.vector_store %arg18[%c56_142, %c0_143], %158 {strides = array<i32>} : memref<112x84xf32, #tpu.memory_space<vmem>>, vector<8x84xf32>,
    %160 = vector.extract_strided_slice %127 {offsets = [128, 0], sizes = [8, 84], strides = [1, 1]} : vector<224x84xf32> to vector<8x84xf32>
    %161 = vector.extract_strided_slice %127 {offsets = [136, 0], sizes = [8, 84], strides = [1, 1]} : vector<224x84xf32> to vector<8x84xf32>
    %162 = arith.maximumf %160, %161 : vector<8x84xf32>
    %c64_144 = arith.constant 64 : index
    %c0_145 = arith.constant 0 : index
    %163 = vector.load %arg18[%c64_144, %c0_145] : memref<112x84xf32, #tpu.memory_space<vmem>>, vector<8x84xf32>
    tpu.vector_store %arg18[%c64_144, %c0_145], %162 {strides = array<i32>} : memref<112x84xf32, #tpu.memory_space<vmem>>, vector<8x84xf32>,
    %164 = vector.extract_strided_slice %127 {offsets = [144, 0], sizes = [8, 84], strides = [1, 1]} : vector<224x84xf32> to vector<8x84xf32>
    %165 = vector.extract_strided_slice %127 {offsets = [152, 0], sizes = [8, 84], strides = [1, 1]} : vector<224x84xf32> to vector<8x84xf32>
    %166 = arith.maximumf %164, %165 : vector<8x84xf32>
    %c72_146 = arith.constant 72 : index
    %c0_147 = arith.constant 0 : index
    %167 = vector.load %arg18[%c72_146, %c0_147] : memref<112x84xf32, #tpu.memory_space<vmem>>, vector<8x84xf32>
    tpu.vector_store %arg18[%c72_146, %c0_147], %166 {strides = array<i32>} : memref<112x84xf32, #tpu.memory_space<vmem>>, vector<8x84xf32>,
    %168 = vector.extract_strided_slice %127 {offsets = [160, 0], sizes = [8, 84], strides = [1, 1]} : vector<224x84xf32> to vector<8x84xf32>
    %169 = vector.extract_strided_slice %127 {offsets = [168, 0], sizes = [8, 84], strides = [1, 1]} : vector<224x84xf32> to vector<8x84xf32>
    %170 = arith.maximumf %168, %169 : vector<8x84xf32>
    %c80_148 = arith.constant 80 : index
    %c0_149 = arith.constant 0 : index
    %171 = vector.load %arg18[%c80_148, %c0_149] : memref<112x84xf32, #tpu.memory_space<vmem>>, vector<8x84xf32>
    tpu.vector_store %arg18[%c80_148, %c0_149], %170 {strides = array<i32>} : memref<112x84xf32, #tpu.memory_space<vmem>>, vector<8x84xf32>,
    %172 = vector.extract_strided_slice %127 {offsets = [176, 0], sizes = [8, 84], strides = [1, 1]} : vector<224x84xf32> to vector<8x84xf32>
    %173 = vector.extract_strided_slice %127 {offsets = [184, 0], sizes = [8, 84], strides = [1, 1]} : vector<224x84xf32> to vector<8x84xf32>
    %174 = arith.maximumf %172, %173 : vector<8x84xf32>
    %c88_150 = arith.constant 88 : index
    %c0_151 = arith.constant 0 : index
    %175 = vector.load %arg18[%c88_150, %c0_151] : memref<112x84xf32, #tpu.memory_space<vmem>>, vector<8x84xf32>
    tpu.vector_store %arg18[%c88_150, %c0_151], %174 {strides = array<i32>} : memref<112x84xf32, #tpu.memory_space<vmem>>, vector<8x84xf32>,
    %176 = vector.extract_strided_slice %127 {offsets = [192, 0], sizes = [8, 84], strides = [1, 1]} : vector<224x84xf32> to vector<8x84xf32>
    %177 = vector.extract_strided_slice %127 {offsets = [200, 0], sizes = [8, 84], strides = [1, 1]} : vector<224x84xf32> to vector<8x84xf32>
    %178 = arith.maximumf %176, %177 : vector<8x84xf32>
    %c96_152 = arith.constant 96 : index
    %c0_153 = arith.constant 0 : index
    %179 = vector.load %arg18[%c96_152, %c0_153] : memref<112x84xf32, #tpu.memory_space<vmem>>, vector<8x84xf32>
    tpu.vector_store %arg18[%c96_152, %c0_153], %178 {strides = array<i32>} : memref<112x84xf32, #tpu.memory_space<vmem>>, vector<8x84xf32>,
    %180 = vector.extract_strided_slice %127 {offsets = [208, 0], sizes = [8, 84], strides = [1, 1]} : vector<224x84xf32> to vector<8x84xf32>
    %181 = vector.extract_strided_slice %127 {offsets = [216, 0], sizes = [8, 84], strides = [1, 1]} : vector<224x84xf32> to vector<8x84xf32>
    %182 = arith.maximumf %180, %181 : vector<8x84xf32>
    %c104_154 = arith.constant 104 : index
    %c0_155 = arith.constant 0 : index
    %183 = vector.load %arg18[%c104_154, %c0_155] : memref<112x84xf32, #tpu.memory_space<vmem>>, vector<8x84xf32>
    tpu.vector_store %arg18[%c104_154, %c0_155], %182 {strides = array<i32>} : memref<112x84xf32, #tpu.memory_space<vmem>>, vector<8x84xf32>,
    %c0_156 = arith.constant 0 : index
    %c0_157 = arith.constant 0 : index
    %184 = vector.load %arg18[%c0_156, %c0_157] : memref<112x84xf32, #tpu.memory_space<vmem>>, vector<80x84xf32>
    %c0_158 = arith.constant 0 : index
    %c0_159 = arith.constant 0 : index
    %c0_160 = arith.constant 0 : index
    %185 = vector.load %arg6[%c0_158, %c0_159, %c0_160] : memref<5x84x160xbf16, #tpu.memory_space<vmem>>, vector<1x84x160xbf16>
    %186 = vector.shape_cast %185 : vector<1x84x160xbf16> to vector<84x160xbf16>
    %187 = arith.truncf %184 : vector<80x84xf32> to vector<80x84xbf16>
    %cst_161 = arith.constant dense<0.000000e+00> : vector<80x160xf32>
    %188 = tpu.matmul %187, %186, %cst_161 {dimension_numbers = #tpu.dot_dimension_numbers<[1], [0], [0], [1], [0, 0, 1, 1], [], []>} : vector<80x84xbf16>, vector<84x160xbf16>, vector<80x160xf32> -> vector<80x160xf32>
    %c8_162 = arith.constant 8 : index
    %c0_163 = arith.constant 0 : index
    %189 = vector.load %arg18[%c8_162, %c0_163] : memref<112x84xf32, #tpu.memory_space<vmem>>, vector<80x84xf32>
    %c1_164 = arith.constant 1 : index
    %c0_165 = arith.constant 0 : index
    %c0_166 = arith.constant 0 : index
    %190 = vector.load %arg6[%c1_164, %c0_165, %c0_166] : memref<5x84x160xbf16, #tpu.memory_space<vmem>>, vector<1x84x160xbf16>
    %191 = vector.shape_cast %190 : vector<1x84x160xbf16> to vector<84x160xbf16>
    %192 = arith.truncf %189 : vector<80x84xf32> to vector<80x84xbf16>
    %cst_167 = arith.constant dense<0.000000e+00> : vector<80x160xf32>
    %193 = tpu.matmul %192, %191, %cst_167 {dimension_numbers = #tpu.dot_dimension_numbers<[1], [0], [0], [1], [0, 0, 1, 1], [], []>} : vector<80x84xbf16>, vector<84x160xbf16>, vector<80x160xf32> -> vector<80x160xf32>
    %194 = arith.addf %188, %193 : vector<80x160xf32>
    %c16_168 = arith.constant 16 : index
    %c0_169 = arith.constant 0 : index
    %195 = vector.load %arg18[%c16_168, %c0_169] : memref<112x84xf32, #tpu.memory_space<vmem>>, vector<80x84xf32>
    %c2_170 = arith.constant 2 : index
    %c0_171 = arith.constant 0 : index
    %c0_172 = arith.constant 0 : index
    %196 = vector.load %arg6[%c2_170, %c0_171, %c0_172] : memref<5x84x160xbf16, #tpu.memory_space<vmem>>, vector<1x84x160xbf16>
    %197 = vector.shape_cast %196 : vector<1x84x160xbf16> to vector<84x160xbf16>
    %198 = arith.truncf %195 : vector<80x84xf32> to vector<80x84xbf16>
    %cst_173 = arith.constant dense<0.000000e+00> : vector<80x160xf32>
    %199 = tpu.matmul %198, %197, %cst_173 {dimension_numbers = #tpu.dot_dimension_numbers<[1], [0], [0], [1], [0, 0, 1, 1], [], []>} : vector<80x84xbf16>, vector<84x160xbf16>, vector<80x160xf32> -> vector<80x160xf32>
    %200 = arith.addf %194, %199 : vector<80x160xf32>
    %c24_174 = arith.constant 24 : index
    %c0_175 = arith.constant 0 : index
    %201 = vector.load %arg18[%c24_174, %c0_175] : memref<112x84xf32, #tpu.memory_space<vmem>>, vector<80x84xf32>
    %c3_176 = arith.constant 3 : index
    %c0_177 = arith.constant 0 : index
    %c0_178 = arith.constant 0 : index
    %202 = vector.load %arg6[%c3_176, %c0_177, %c0_178] : memref<5x84x160xbf16, #tpu.memory_space<vmem>>, vector<1x84x160xbf16>
    %203 = vector.shape_cast %202 : vector<1x84x160xbf16> to vector<84x160xbf16>
    %204 = arith.truncf %201 : vector<80x84xf32> to vector<80x84xbf16>
    %cst_179 = arith.constant dense<0.000000e+00> : vector<80x160xf32>
    %205 = tpu.matmul %204, %203, %cst_179 {dimension_numbers = #tpu.dot_dimension_numbers<[1], [0], [0], [1], [0, 0, 1, 1], [], []>} : vector<80x84xbf16>, vector<84x160xbf16>, vector<80x160xf32> -> vector<80x160xf32>
    %206 = arith.addf %200, %205 : vector<80x160xf32>
    %c32_180 = arith.constant 32 : index
    %c0_181 = arith.constant 0 : index
    %207 = vector.load %arg18[%c32_180, %c0_181] : memref<112x84xf32, #tpu.memory_space<vmem>>, vector<80x84xf32>
    %c4_182 = arith.constant 4 : index
    %c0_183 = arith.constant 0 : index
    %c0_184 = arith.constant 0 : index
    %208 = vector.load %arg6[%c4_182, %c0_183, %c0_184] : memref<5x84x160xbf16, #tpu.memory_space<vmem>>, vector<1x84x160xbf16>
    %209 = vector.shape_cast %208 : vector<1x84x160xbf16> to vector<84x160xbf16>
    %210 = arith.truncf %207 : vector<80x84xf32> to vector<80x84xbf16>
    %cst_185 = arith.constant dense<0.000000e+00> : vector<80x160xf32>
    %211 = tpu.matmul %210, %209, %cst_185 {dimension_numbers = #tpu.dot_dimension_numbers<[1], [0], [0], [1], [0, 0, 1, 1], [], []>} : vector<80x84xbf16>, vector<84x160xbf16>, vector<80x160xf32> -> vector<80x160xf32>
    %212 = arith.addf %206, %211 : vector<80x160xf32>
    %c0_186 = arith.constant 0 : index
    %c0_187 = arith.constant 0 : index
    %213 = vector.load %arg7[%c0_186, %c0_187] : memref<1x160xf32, #tpu.memory_space<vmem>>, vector<1x160xf32>
    %214 = vector.broadcast %213 : vector<1x160xf32> to vector<80x160xf32>
    %215 = arith.addf %212, %214 : vector<80x160xf32>
    %cst_188 = arith.constant 0.000000e+00 : f32
    %216 = vector.broadcast %cst_188 : f32 to vector<80x160xf32>
    %217 = arith.maximumf %215, %216 : vector<80x160xf32>
    %c0_189 = arith.constant 0 : index
    %c0_190 = arith.constant 0 : index
    %218 = vector.load %arg8[%c0_189, %c0_190] : memref<160x80xbf16, #tpu.memory_space<vmem>>, vector<160x80xbf16>
    %219 = arith.truncf %217 : vector<80x160xf32> to vector<80x160xbf16>
    %cst_191 = arith.constant dense<0.000000e+00> : vector<80x80xf32>
    %220 = tpu.matmul %219, %218, %cst_191 {dimension_numbers = #tpu.dot_dimension_numbers<[1], [0], [0], [1], [0, 0, 1, 1], [], []>} : vector<80x160xbf16>, vector<160x80xbf16>, vector<80x80xf32> -> vector<80x80xf32>
    %c0_192 = arith.constant 0 : index
    %c0_193 = arith.constant 0 : index
    %221 = vector.load %arg9[%c0_192, %c0_193] : memref<160x80xbf16, #tpu.memory_space<vmem>>, vector<160x80xbf16>
    %222 = arith.truncf %217 : vector<80x160xf32> to vector<80x160xbf16>
    %cst_194 = arith.constant dense<0.000000e+00> : vector<80x80xf32>
    %223 = tpu.matmul %222, %221, %cst_194 {dimension_numbers = #tpu.dot_dimension_numbers<[1], [0], [0], [1], [0, 0, 1, 1], [], []>} : vector<80x160xbf16>, vector<160x80xbf16>, vector<80x80xf32> -> vector<80x80xf32>
    %224 = arith.maximumf %220, %223 : vector<80x80xf32>
    %225 = vector.extract_strided_slice %224 {offsets = [0, 0], sizes = [8, 80], strides = [1, 1]} : vector<80x80xf32> to vector<8x80xf32>
    %226 = vector.extract_strided_slice %224 {offsets = [8, 0], sizes = [8, 80], strides = [1, 1]} : vector<80x80xf32> to vector<8x80xf32>
    %227 = arith.maximumf %225, %226 : vector<8x80xf32>
    %c0_195 = arith.constant 0 : index
    %c0_196 = arith.constant 0 : index
    %c0_197 = arith.constant 0 : index
    %228 = vector.load %arg10[%c0_195, %c0_196, %c0_197] : memref<5x80x120xbf16, #tpu.memory_space<vmem>>, vector<1x80x120xbf16>
    %229 = vector.shape_cast %228 : vector<1x80x120xbf16> to vector<80x120xbf16>
    %230 = arith.truncf %227 : vector<8x80xf32> to vector<8x80xbf16>
    %cst_198 = arith.constant dense<0.000000e+00> : vector<8x120xf32>
    %231 = tpu.matmul %230, %229, %cst_198 {dimension_numbers = #tpu.dot_dimension_numbers<[1], [0], [0], [1], [0, 0, 1, 1], [], []>} : vector<8x80xbf16>, vector<80x120xbf16>, vector<8x120xf32> -> vector<8x120xf32>
    %232 = vector.extract_strided_slice %224 {offsets = [16, 0], sizes = [8, 80], strides = [1, 1]} : vector<80x80xf32> to vector<8x80xf32>
    %233 = vector.extract_strided_slice %224 {offsets = [24, 0], sizes = [8, 80], strides = [1, 1]} : vector<80x80xf32> to vector<8x80xf32>
    %234 = arith.maximumf %232, %233 : vector<8x80xf32>
    %c1_199 = arith.constant 1 : index
    %c0_200 = arith.constant 0 : index
    %c0_201 = arith.constant 0 : index
    %235 = vector.load %arg10[%c1_199, %c0_200, %c0_201] : memref<5x80x120xbf16, #tpu.memory_space<vmem>>, vector<1x80x120xbf16>
    %236 = vector.shape_cast %235 : vector<1x80x120xbf16> to vector<80x120xbf16>
    %237 = arith.truncf %234 : vector<8x80xf32> to vector<8x80xbf16>
    %cst_202 = arith.constant dense<0.000000e+00> : vector<8x120xf32>
    %238 = tpu.matmul %237, %236, %cst_202 {dimension_numbers = #tpu.dot_dimension_numbers<[1], [0], [0], [1], [0, 0, 1, 1], [], []>} : vector<8x80xbf16>, vector<80x120xbf16>, vector<8x120xf32> -> vector<8x120xf32>
    %239 = arith.addf %231, %238 : vector<8x120xf32>
    %240 = vector.extract_strided_slice %224 {offsets = [32, 0], sizes = [8, 80], strides = [1, 1]} : vector<80x80xf32> to vector<8x80xf32>
    %241 = vector.extract_strided_slice %224 {offsets = [40, 0], sizes = [8, 80], strides = [1, 1]} : vector<80x80xf32> to vector<8x80xf32>
    %242 = arith.maximumf %240, %241 : vector<8x80xf32>
    %c2_203 = arith.constant 2 : index
    %c0_204 = arith.constant 0 : index
    %c0_205 = arith.constant 0 : index
    %243 = vector.load %arg10[%c2_203, %c0_204, %c0_205] : memref<5x80x120xbf16, #tpu.memory_space<vmem>>, vector<1x80x120xbf16>
    %244 = vector.shape_cast %243 : vector<1x80x120xbf16> to vector<80x120xbf16>
    %245 = arith.truncf %242 : vector<8x80xf32> to vector<8x80xbf16>
    %cst_206 = arith.constant dense<0.000000e+00> : vector<8x120xf32>
    %246 = tpu.matmul %245, %244, %cst_206 {dimension_numbers = #tpu.dot_dimension_numbers<[1], [0], [0], [1], [0, 0, 1, 1], [], []>} : vector<8x80xbf16>, vector<80x120xbf16>, vector<8x120xf32> -> vector<8x120xf32>
    %247 = arith.addf %239, %246 : vector<8x120xf32>
    %248 = vector.extract_strided_slice %224 {offsets = [48, 0], sizes = [8, 80], strides = [1, 1]} : vector<80x80xf32> to vector<8x80xf32>
    %249 = vector.extract_strided_slice %224 {offsets = [56, 0], sizes = [8, 80], strides = [1, 1]} : vector<80x80xf32> to vector<8x80xf32>
    %250 = arith.maximumf %248, %249 : vector<8x80xf32>
    %c3_207 = arith.constant 3 : index
    %c0_208 = arith.constant 0 : index
    %c0_209 = arith.constant 0 : index
    %251 = vector.load %arg10[%c3_207, %c0_208, %c0_209] : memref<5x80x120xbf16, #tpu.memory_space<vmem>>, vector<1x80x120xbf16>
    %252 = vector.shape_cast %251 : vector<1x80x120xbf16> to vector<80x120xbf16>
    %253 = arith.truncf %250 : vector<8x80xf32> to vector<8x80xbf16>
    %cst_210 = arith.constant dense<0.000000e+00> : vector<8x120xf32>
    %254 = tpu.matmul %253, %252, %cst_210 {dimension_numbers = #tpu.dot_dimension_numbers<[1], [0], [0], [1], [0, 0, 1, 1], [], []>} : vector<8x80xbf16>, vector<80x120xbf16>, vector<8x120xf32> -> vector<8x120xf32>
    %255 = arith.addf %247, %254 : vector<8x120xf32>
    %256 = vector.extract_strided_slice %224 {offsets = [64, 0], sizes = [8, 80], strides = [1, 1]} : vector<80x80xf32> to vector<8x80xf32>
    %257 = vector.extract_strided_slice %224 {offsets = [72, 0], sizes = [8, 80], strides = [1, 1]} : vector<80x80xf32> to vector<8x80xf32>
    %258 = arith.maximumf %256, %257 : vector<8x80xf32>
    %c4_211 = arith.constant 4 : index
    %c0_212 = arith.constant 0 : index
    %c0_213 = arith.constant 0 : index
    %259 = vector.load %arg10[%c4_211, %c0_212, %c0_213] : memref<5x80x120xbf16, #tpu.memory_space<vmem>>, vector<1x80x120xbf16>
    %260 = vector.shape_cast %259 : vector<1x80x120xbf16> to vector<80x120xbf16>
    %261 = arith.truncf %258 : vector<8x80xf32> to vector<8x80xbf16>
    %cst_214 = arith.constant dense<0.000000e+00> : vector<8x120xf32>
    %262 = tpu.matmul %261, %260, %cst_214 {dimension_numbers = #tpu.dot_dimension_numbers<[1], [0], [0], [1], [0, 0, 1, 1], [], []>} : vector<8x80xbf16>, vector<80x120xbf16>, vector<8x120xf32> -> vector<8x120xf32>
    %263 = arith.addf %255, %262 : vector<8x120xf32>
    %c0_215 = arith.constant 0 : index
    %c0_216 = arith.constant 0 : index
    %264 = vector.load %arg11[%c0_215, %c0_216] : memref<1x120xf32, #tpu.memory_space<vmem>>, vector<1x120xf32>
    %265 = vector.broadcast %264 : vector<1x120xf32> to vector<8x120xf32>
    %266 = arith.addf %263, %265 : vector<8x120xf32>
    %cst_217 = arith.constant 0.000000e+00 : f32
    %267 = vector.broadcast %cst_217 : f32 to vector<8x120xf32>
    %268 = arith.maximumf %266, %267 : vector<8x120xf32>
    %c0_218 = arith.constant 0 : index
    %c0_219 = arith.constant 0 : index
    %269 = vector.load %arg12[%c0_218, %c0_219] : memref<120x84xbf16, #tpu.memory_space<vmem>>, vector<120x84xbf16>
    %270 = arith.truncf %268 : vector<8x120xf32> to vector<8x120xbf16>
    %cst_220 = arith.constant dense<0.000000e+00> : vector<8x84xf32>
    %271 = tpu.matmul %270, %269, %cst_220 {dimension_numbers = #tpu.dot_dimension_numbers<[1], [0], [0], [1], [0, 0, 1, 1], [], []>} : vector<8x120xbf16>, vector<120x84xbf16>, vector<8x84xf32> -> vector<8x84xf32>
    %c0_221 = arith.constant 0 : index
    %c0_222 = arith.constant 0 : index
    %272 = vector.load %arg13[%c0_221, %c0_222] : memref<1x84xf32, #tpu.memory_space<vmem>>, vector<1x84xf32>
    %273 = vector.broadcast %272 : vector<1x84xf32> to vector<8x84xf32>
    %274 = arith.addf %271, %273 : vector<8x84xf32>
    %cst_223 = arith.constant 0.000000e+00 : f32
    %275 = vector.broadcast %cst_223 : f32 to vector<8x84xf32>
    %276 = arith.maximumf %274, %275 : vector<8x84xf32>
    %c0_224 = arith.constant 0 : index
    %c0_225 = arith.constant 0 : index
    %277 = vector.load %arg14[%c0_224, %c0_225] : memref<84x128xbf16, #tpu.memory_space<vmem>>, vector<84x128xbf16>
    %278 = arith.truncf %276 : vector<8x84xf32> to vector<8x84xbf16>
    %cst_226 = arith.constant dense<0.000000e+00> : vector<8x128xf32>
    %279 = tpu.matmul %278, %277, %cst_226 {dimension_numbers = #tpu.dot_dimension_numbers<[1], [0], [0], [1], [0, 0, 1, 1], [], []>} : vector<8x84xbf16>, vector<84x128xbf16>, vector<8x128xf32> -> vector<8x128xf32>
    %c0_227 = arith.constant 0 : index
    %c0_228 = arith.constant 0 : index
    %280 = vector.load %arg15[%c0_227, %c0_228] : memref<1x128xf32, #tpu.memory_space<vmem>>, vector<1x128xf32>
    %281 = vector.broadcast %280 : vector<1x128xf32> to vector<8x128xf32>
    %282 = arith.addf %279, %281 : vector<8x128xf32>
    %c0_229 = arith.constant 0 : index
    %c0_230 = arith.constant 0 : index
    %283 = vector.load %arg16[%c0_229, %c0_230] : memref<8x128xf32, #tpu.memory_space<vmem>>, vector<8x128xf32>
    tpu.vector_store %arg16[%c0_229, %c0_230], %282 {strides = array<i32>} : memref<8x128xf32, #tpu.memory_space<vmem>>, vector<8x128xf32>,
    return
  }
  func.func @transform_0(%arg0: i32) -> (i32, i32, i32) {
    %c0_i32 = arith.constant 0 : i32
    %c0_i32_0 = arith.constant 0 : i32
    %c0_i32_1 = arith.constant 0 : i32
    return %c0_i32, %arg0, %c0_i32_0 : i32, i32, i32
  }
  func.func @transform_1(%arg0: i32) -> (i32, i32, i32) {
    %c0_i32 = arith.constant 0 : i32
    %c0_i32_0 = arith.constant 0 : i32
    %c0_i32_1 = arith.constant 0 : i32
    %c0_i32_2 = arith.constant 0 : i32
    return %c0_i32, %c0_i32_0, %c0_i32_1 : i32, i32, i32
  }
  func.func @transform_2(%arg0: i32) -> (i32, i32) {
    %c0_i32 = arith.constant 0 : i32
    %c0_i32_0 = arith.constant 0 : i32
    %c0_i32_1 = arith.constant 0 : i32
    return %c0_i32, %c0_i32_0 : i32, i32
  }
  func.func @transform_3(%arg0: i32) -> (i32, i32) {
    %c0_i32 = arith.constant 0 : i32
    %c0_i32_0 = arith.constant 0 : i32
    %c0_i32_1 = arith.constant 0 : i32
    return %c0_i32, %c0_i32_0 : i32, i32
  }
  func.func @transform_4(%arg0: i32) -> (i32, i32) {
    %c0_i32 = arith.constant 0 : i32
    %c0_i32_0 = arith.constant 0 : i32
    %c0_i32_1 = arith.constant 0 : i32
    return %c0_i32, %c0_i32_0 : i32, i32
  }
  func.func @transform_5(%arg0: i32) -> (i32, i32, i32) {
    %c0_i32 = arith.constant 0 : i32
    %c0_i32_0 = arith.constant 0 : i32
    %c0_i32_1 = arith.constant 0 : i32
    %c0_i32_2 = arith.constant 0 : i32
    return %c0_i32, %c0_i32_0, %c0_i32_1 : i32, i32, i32
  }
  func.func @transform_6(%arg0: i32) -> (i32, i32) {
    %c0_i32 = arith.constant 0 : i32
    %c0_i32_0 = arith.constant 0 : i32
    %c0_i32_1 = arith.constant 0 : i32
    return %c0_i32, %c0_i32_0 : i32, i32
  }
  func.func @transform_7(%arg0: i32) -> (i32, i32) {
    %c0_i32 = arith.constant 0 : i32
    %c0_i32_0 = arith.constant 0 : i32
    %c0_i32_1 = arith.constant 0 : i32
    return %c0_i32, %c0_i32_0 : i32, i32
  }
  func.func @transform_8(%arg0: i32) -> (i32, i32) {
    %c0_i32 = arith.constant 0 : i32
    %c0_i32_0 = arith.constant 0 : i32
    %c0_i32_1 = arith.constant 0 : i32
    return %c0_i32, %c0_i32_0 : i32, i32
  }
  func.func @transform_9(%arg0: i32) -> (i32, i32, i32) {
    %c0_i32 = arith.constant 0 : i32
    %c0_i32_0 = arith.constant 0 : i32
    %c0_i32_1 = arith.constant 0 : i32
    %c0_i32_2 = arith.constant 0 : i32
    return %c0_i32, %c0_i32_0, %c0_i32_1 : i32, i32, i32
  }
  func.func @transform_10(%arg0: i32) -> (i32, i32) {
    %c0_i32 = arith.constant 0 : i32
    %c0_i32_0 = arith.constant 0 : i32
    %c0_i32_1 = arith.constant 0 : i32
    return %c0_i32, %c0_i32_0 : i32, i32
  }
  func.func @transform_11(%arg0: i32) -> (i32, i32) {
    %c0_i32 = arith.constant 0 : i32
    %c0_i32_0 = arith.constant 0 : i32
    %c0_i32_1 = arith.constant 0 : i32
    return %c0_i32, %c0_i32_0 : i32, i32
  }
  func.func @transform_12(%arg0: i32) -> (i32, i32) {
    %c0_i32 = arith.constant 0 : i32
    %c0_i32_0 = arith.constant 0 : i32
    %c0_i32_1 = arith.constant 0 : i32
    return %c0_i32, %c0_i32_0 : i32, i32
  }
  func.func @transform_13(%arg0: i32) -> (i32, i32) {
    %c0_i32 = arith.constant 0 : i32
    %c0_i32_0 = arith.constant 0 : i32
    %c0_i32_1 = arith.constant 0 : i32
    return %c0_i32, %c0_i32_0 : i32, i32
  }
  func.func @transform_14(%arg0: i32) -> (i32, i32) {
    %c0_i32 = arith.constant 0 : i32
    %c0_i32_0 = arith.constant 0 : i32
    %c0_i32_1 = arith.constant 0 : i32
    return %c0_i32, %c0_i32_0 : i32, i32
  }
  func.func @transform_15(%arg0: i32) -> (i32, i32) {
    %c0_i32 = arith.constant 0 : i32
    %c0_i32_0 = arith.constant 0 : i32
    return %arg0, %c0_i32 : i32, i32
  }
}

</mosaic_0001>

<llo_original>
// kernel: lenet_forward.1
$region0: #{lenet_forward.1}
  #allocation0 [shape = 'u32[]', space=smem, size = 0x4, offset = 0x4, fixed_abs, tag = 'smem constant byte address 0x4 - core index']
  #allocation1 [shape = 'u32[144,128]{1,0:T(1,128)}', space=vmem, size = 0x12000, scoped, tag = 'internal scratch']
  #allocation2 [shape = 'f32[256,28]{1,0:T(8,128)}', space=vmem, size = 0x20000, scoped, tag = 'scratch operand']
  #allocation3 [shape = 'f32[112,84]{1,0:T(8,128)}', space=vmem, size = 0xe000, scoped, tag = 'scratch operand']
  %s0 = inlined_call_operand.vmem [shape: f32[28,8,28], index: 0, kind: input, shape index: {}]
  %s1 = inlined_call_operand.vmem [shape: bf16[5,28,168], index: 1, kind: input, shape index: {}]
  %s2 = inlined_call_operand.vmem [shape: f32[1,168], index: 2, kind: input, shape index: {}]
  %s3 = inlined_call_operand.vmem [shape: bf16[168,84], index: 3, kind: input, shape index: {}]
  %s4 = inlined_call_operand.vmem [shape: bf16[168,84], index: 4, kind: input, shape index: {}]
  %s5 = inlined_call_operand.vmem [shape: bf16[5,84,160], index: 5, kind: input, shape index: {}]
  %s6 = inlined_call_operand.vmem [shape: f32[1,160], index: 6, kind: input, shape index: {}]
  %s7 = inlined_call_operand.vmem [shape: bf16[160,80], index: 7, kind: input, shape index: {}]
  %s8 = inlined_call_operand.vmem [shape: bf16[160,80], index: 8, kind: input, shape index: {}]
  %s9 = inlined_call_operand.vmem [shape: bf16[5,80,120], index: 9, kind: input, shape index: {}]
  %s10 = inlined_call_operand.vmem [shape: f32[1,120], index: 10, kind: input, shape index: {}]
  %s11 = inlined_call_operand.vmem [shape: bf16[120,84], index: 11, kind: input, shape index: {}]
  %s12 = inlined_call_operand.vmem [shape: f32[1,84], index: 12, kind: input, shape index: {}]
  %s13 = inlined_call_operand.vmem [shape: bf16[84,128], index: 13, kind: input, shape index: {}]
  %s14 = inlined_call_operand.vmem [shape: f32[1,128], index: 14, kind: input, shape index: {}]
  %s15 = inlined_call_operand.vmem [shape: f32[8,128], index: 15, kind: output, shape index: {}]
  %s16 = sld [smem:[#allocation0]]
  $region70: #{lenet_forward.1} parent=0
    _
  %s18 = ssub.s32 1, %s16
  %s19 = scalar_select 0, %s18, %s16
  // Predicated region
  $region2: #{lenet_forward.1} parent=0 // pred_check
    _
  $region3: #{lenet_forward.1} parent=0 // pred_check_branch
    %21 = sbr.rel (0) target = $region5
  $region4: #{lenet_forward.1} parent=0 // pred_region
    _
  $region5: #{lenet_forward.1} parent=0 // pred_fallthru
    _
  // Predicated region
  $region6: #{lenet_forward.1} parent=0 // pred_check
    _
  $region7: #{lenet_forward.1} parent=0 // pred_check_branch
    %23 = sbr.rel (0) target = $region9
  $region8: #{lenet_forward.1} parent=0 // pred_region
    _
  $region9: #{lenet_forward.1} parent=0 // pred_fallthru
    _
  // Predicated region
  $region10: #{lenet_forward.1} parent=0 // pred_check
    _
  $region11: #{lenet_forward.1} parent=0 // pred_check_branch
    %25 = sbr.rel (0) target = $region13
  $region12: #{lenet_forward.1} parent=0 // pred_region
    _
  $region13: #{lenet_forward.1} parent=0 // pred_fallthru
    _
  // Predicated region
  $region14: #{lenet_forward.1} parent=0 // pred_check
    _
  $region15: #{lenet_forward.1} parent=0 // pred_check_branch
    %27 = sbr.rel (0) target = $region17
  $region16: #{lenet_forward.1} parent=0 // pred_region
    _
  $region17: #{lenet_forward.1} parent=0 // pred_fallthru
    _
  // Predicated region
  $region18: #{lenet_forward.1} parent=0 // pred_check
    _
  $region19: #{lenet_forward.1} parent=0 // pred_check_branch
    %29 = sbr.rel (0) target = $region21
  $region20: #{lenet_forward.1} parent=0 // pred_region
    _
  $region21: #{lenet_forward.1} parent=0 // pred_fallthru
    _
  // Predicated region
  $region22: #{lenet_forward.1} parent=0 // pred_check
    _
  $region23: #{lenet_forward.1} parent=0 // pred_check_branch
    %31 = sbr.rel (0) target = $region25
  $region24: #{lenet_forward.1} parent=0 // pred_region
    _
  $region25: #{lenet_forward.1} parent=0 // pred_fallthru
    _
  // Predicated region
  $region26: #{lenet_forward.1} parent=0 // pred_check
    _
  $region27: #{lenet_forward.1} parent=0 // pred_check_branch
    %33 = sbr.rel (0) target = $region29
  $region28: #{lenet_forward.1} parent=0 // pred_region
    _
  $region29: #{lenet_forward.1} parent=0 // pred_fallthru
    _
  // Predicated region
  $region30: #{lenet_forward.1} parent=0 // pred_check
    _
  $region31: #{lenet_forward.1} parent=0 // pred_check_branch
    %35 = sbr.rel (0) target = $region33
  $region32: #{lenet_forward.1} parent=0 // pred_region
    _
  $region33: #{lenet_forward.1} parent=0 // pred_fallthru
    _
  // Predicated region
  $region34: #{lenet_forward.1} parent=0 // pred_check
    _
  $region35: #{lenet_forward.1} parent=0 // pred_check_branch
    %37 = sbr.rel (0) target = $region37
  $region36: #{lenet_forward.1} parent=0 // pred_region
    _
  $region37: #{lenet_forward.1} parent=0 // pred_fallthru
    _
  // Predicated region
  $region38: #{lenet_forward.1} parent=0 // pred_check
    _
  $region39: #{lenet_forward.1} parent=0 // pred_check_branch
    %39 = sbr.rel (0) target = $region41
  $region40: #{lenet_forward.1} parent=0 // pred_region
    _
  $region41: #{lenet_forward.1} parent=0 // pred_fallthru
    _
  // Predicated region
  $region42: #{lenet_forward.1} parent=0 // pred_check
    _
  $region43: #{lenet_forward.1} parent=0 // pred_check_branch
    %41 = sbr.rel (0) target = $region45
  $region44: #{lenet_forward.1} parent=0 // pred_region
    _
  $region45: #{lenet_forward.1} parent=0 // pred_fallthru
    _
  // Predicated region
  $region46: #{lenet_forward.1} parent=0 // pred_check
    _
  $region47: #{lenet_forward.1} parent=0 // pred_check_branch
    %43 = sbr.rel (0) target = $region49
  $region48: #{lenet_forward.1} parent=0 // pred_region
    _
  $region49: #{lenet_forward.1} parent=0 // pred_fallthru
    _
  // Predicated region
  $region50: #{lenet_forward.1} parent=0 // pred_check
    _
  $region51: #{lenet_forward.1} parent=0 // pred_check_branch
    %45 = sbr.rel (0) target = $region53
  $region52: #{lenet_forward.1} parent=0 // pred_region
    _
  $region53: #{lenet_forward.1} parent=0 // pred_fallthru
    _
  // Predicated region
  $region54: #{lenet_forward.1} parent=0 // pred_check
    _
  $region55: #{lenet_forward.1} parent=0 // pred_check_branch
    %47 = sbr.rel (0) target = $region57
  $region56: #{lenet_forward.1} parent=0 // pred_region
    _
  $region57: #{lenet_forward.1} parent=0 // pred_fallthru
    _
  // Predicated region
  $region58: #{lenet_forward.1} parent=0 // pred_check
    _
  $region59: #{lenet_forward.1} parent=0 // pred_check_branch
    %49 = sbr.rel (0) target = $region61
  $region60: #{lenet_forward.1} parent=0 // pred_region
    _
  $region61: #{lenet_forward.1} parent=0 // pred_fallthru
    _
  %vm51 = vcmask 228352
  %52 = vst.msk [vmem:[#allocation2] sm:$0xff] %vm51, 0.0
  %53 = vst.msk [vmem:[#allocation2 + $0x8] sm:$0xff] %vm51, 0.0
  %54 = vst.msk [vmem:[#allocation2 + $0xf0] sm:$0xff] %vm51, 0.0
  %55 = vst.msk [vmem:[#allocation2 + $0xf8] sm:$0xff] %vm51, 0.0
  %v56 = vld [vmem:[%s0] sm:$0xff]
  %57 = vst.msk [vmem:[#allocation2 + $0x10] sm:$0xff] %vm51, %v56
  %s58 = scalar_lea.vmem %s0, 8
  %v59 = vld [vmem:[%s58] sm:$0xff]
  %60 = vst.msk [vmem:[#allocation2 + $0x18] sm:$0xff] %vm51, %v59
  %s61 = scalar_lea.vmem %s0, 16
  %v62 = vld [vmem:[%s61] sm:$0xff]
  %63 = vst.msk [vmem:[#allocation2 + $0x20] sm:$0xff] %vm51, %v62
  %s64 = scalar_lea.vmem %s0, 24
  %v65 = vld [vmem:[%s64] sm:$0xff]
  %66 = vst.msk [vmem:[#allocation2 + $0x28] sm:$0xff] %vm51, %v65
  %s67 = scalar_lea.vmem %s0, 32
  %v68 = vld [vmem:[%s67] sm:$0xff]
  %69 = vst.msk [vmem:[#allocation2 + $0x30] sm:$0xff] %vm51, %v68
  %s70 = scalar_lea.vmem %s0, 40
  %v71 = vld [vmem:[%s70] sm:$0xff]
  %72 = vst.msk [vmem:[#allocation2 + $0x38] sm:$0xff] %vm51, %v71
  %s73 = scalar_lea.vmem %s0, 48
  %v74 = vld [vmem:[%s73] sm:$0xff]
  %75 = vst.msk [vmem:[#allocation2 + $0x40] sm:$0xff] %vm51, %v74
  %s76 = scalar_lea.vmem %s0, 56
  %v77 = vld [vmem:[%s76] sm:$0xff]
  %78 = vst.msk [vmem:[#allocation2 + $0x48] sm:$0xff] %vm51, %v77
  %s79 = scalar_lea.vmem %s0, 64
  %v80 = vld [vmem:[%s79] sm:$0xff]
  %81 = vst.msk [vmem:[#allocation2 + $0x50] sm:$0xff] %vm51, %v80
  %s82 = scalar_lea.vmem %s0, 72
  %v83 = vld [vmem:[%s82] sm:$0xff]
  %84 = vst.msk [vmem:[#allocation2 + $0x58] sm:$0xff] %vm51, %v83
  %s85 = scalar_lea.vmem %s0, 80
  %v86 = vld [vmem:[%s85] sm:$0xff]
  %87 = vst.msk [vmem:[#allocation2 + $0x60] sm:$0xff] %vm51, %v86
  %s88 = scalar_lea.vmem %s0, 88
  %v89 = vld [vmem:[%s88] sm:$0xff]
  %90 = vst.msk [vmem:[#allocation2 + $0x68] sm:$0xff] %vm51, %v89
  %s91 = scalar_lea.vmem %s0, 96
  %v92 = vld [vmem:[%s91] sm:$0xff]
  %93 = vst.msk [vmem:[#allocation2 + $0x70] sm:$0xff] %vm51, %v92
  %s94 = scalar_lea.vmem %s0, 104
  %v95 = vld [vmem:[%s94] sm:$0xff]
  %96 = vst.msk [vmem:[#allocation2 + $0x78] sm:$0xff] %vm51, %v95
  %s97 = scalar_lea.vmem %s0, 112
  %v98 = vld [vmem:[%s97] sm:$0xff]
  %99 = vst.msk [vmem:[#allocation2 + $0x80] sm:$0xff] %vm51, %v98
  %s100 = scalar_lea.vmem %s0, 120
  %v101 = vld [vmem:[%s100] sm:$0xff]
  %102 = vst.msk [vmem:[#allocation2 + $0x88] sm:$0xff] %vm51, %v101
  %s103 = scalar_lea.vmem %s0, 128
  %v104 = vld [vmem:[%s103] sm:$0xff]
  %105 = vst.msk [vmem:[#allocation2 + $0x90] sm:$0xff] %vm51, %v104
  %s106 = scalar_lea.vmem %s0, 136
  %v107 = vld [vmem:[%s106] sm:$0xff]
  %108 = vst.msk [vmem:[#allocation2 + $0x98] sm:$0xff] %vm51, %v107
  %s109 = scalar_lea.vmem %s0, 144
  %v110 = vld [vmem:[%s109] sm:$0xff]
  %111 = vst.msk [vmem:[#allocation2 + $0xa0] sm:$0xff] %vm51, %v110
  %s112 = scalar_lea.vmem %s0, 152
  %v113 = vld [vmem:[%s112] sm:$0xff]
  %114 = vst.msk [vmem:[#allocation2 + $0xa8] sm:$0xff] %vm51, %v113
  %s115 = scalar_lea.vmem %s0, 160
  %v116 = vld [vmem:[%s115] sm:$0xff]
  %117 = vst.msk [vmem:[#allocation2 + $0xb0] sm:$0xff] %vm51, %v116
  %s118 = scalar_lea.vmem %s0, 168
  %v119 = vld [vmem:[%s118] sm:$0xff]
  %120 = vst.msk [vmem:[#allocation2 + $0xb8] sm:$0xff] %vm51, %v119
  %s121 = scalar_lea.vmem %s0, 176
  %v122 = vld [vmem:[%s121] sm:$0xff]
  %123 = vst.msk [vmem:[#allocation2 + $0xc0] sm:$0xff] %vm51, %v122
  %s124 = scalar_lea.vmem %s0, 184
  %v125 = vld [vmem:[%s124] sm:$0xff]
  %126 = vst.msk [vmem:[#allocation2 + $0xc8] sm:$0xff] %vm51, %v125
  %s127 = scalar_lea.vmem %s0, 192
  %v128 = vld [vmem:[%s127] sm:$0xff]
  %129 = vst.msk [vmem:[#allocation2 + $0xd0] sm:$0xff] %vm51, %v128
  %s130 = scalar_lea.vmem %s0, 200
  %v131 = vld [vmem:[%s130] sm:$0xff]
  %132 = vst.msk [vmem:[#allocation2 + $0xd8] sm:$0xff] %vm51, %v131
  %s133 = scalar_lea.vmem %s0, 208
  %v134 = vld [vmem:[%s133] sm:$0xff]
  %135 = vst.msk [vmem:[#allocation2 + $0xe0] sm:$0xff] %vm51, %v134
  %s136 = scalar_lea.vmem %s0, 216
  %v137 = vld [vmem:[%s136] sm:$0xff]
  %138 = vst.msk [vmem:[#allocation2 + $0xe8] sm:$0xff] %vm51, %v137
  %v139 = vld [vmem:[#allocation2] sm:$0xff]
  %v140 = vld [vmem:[#allocation2 + $0x8] sm:$0xff]
  %v141 = vld [vmem:[#allocation2 + $0x10] sm:$0xff]
  %v142 = vld [vmem:[#allocation2 + $0x18] sm:$0xff]
  %v143 = vld [vmem:[#allocation2 + $0x20] sm:$0xff]
  %v144 = vld [vmem:[#allocation2 + $0x28] sm:$0xff]
  %v145 = vld [vmem:[#allocation2 + $0x30] sm:$0xff]
  %v146 = vld [vmem:[#allocation2 + $0x38] sm:$0xff]
  %v147 = vld [vmem:[#allocation2 + $0x40] sm:$0xff]
  %v148 = vld [vmem:[#allocation2 + $0x48] sm:$0xff]
  %v149 = vld [vmem:[#allocation2 + $0x50] sm:$0xff]
  %v150 = vld [vmem:[#allocation2 + $0x58] sm:$0xff]
  %v151 = vld [vmem:[#allocation2 + $0x60] sm:$0xff]
  %v152 = vld [vmem:[#allocation2 + $0x68] sm:$0xff]
  %v153 = vld [vmem:[#allocation2 + $0x70] sm:$0xff]
  %v154 = vld [vmem:[#allocation2 + $0x78] sm:$0xff]
  %v155 = vld [vmem:[#allocation2 + $0x80] sm:$0xff]
  %v156 = vld [vmem:[#allocation2 + $0x88] sm:$0xff]
  %v157 = vld [vmem:[#allocation2 + $0x90] sm:$0xff]
  %v158 = vld [vmem:[#allocation2 + $0x98] sm:$0xff]
  %v159 = vld [vmem:[#allocation2 + $0xa0] sm:$0xff]
  %v160 = vld [vmem:[#allocation2 + $0xa8] sm:$0xff]
  %v161 = vld [vmem:[#allocation2 + $0xb0] sm:$0xff]
  %v162 = vld [vmem:[#allocation2 + $0xb8] sm:$0xff]
  %v163 = vld [vmem:[#allocation2 + $0xc0] sm:$0xff]
  %v164 = vld [vmem:[#allocation2 + $0xc8] sm:$0xff]
  %v165 = vld [vmem:[#allocation2 + $0xd0] sm:$0xff]
  %v166 = vld [vmem:[#allocation2 + $0xd8] sm:$0xff]
  %v167 = vld [vmem:[%s1] sm:$0xff]
  %v168 = vld [vmem:[%s1 + $0x8] sm:$0xff]
  %v169 = vld [vmem:[%s1 + $0x10] sm:$0xff]
  %v170 = vld [vmem:[%s1 + $0x18] sm:$0x33]
  %v171 = vpack.c.bf16 %v140, %v139
  %v172 = vpack.c.bf16 %v142, %v141
  %v173 = vpack.c.bf16 %v144, %v143
  %v174 = vpack.c.bf16 %v146, %v145
  %v175 = vpack.c.bf16 %v148, %v147
  %v176 = vpack.c.bf16 %v150, %v149
  %v177 = vpack.c.bf16 %v152, %v151
  %v178 = vpack.c.bf16 %v154, %v153
  %v179 = vpack.c.bf16 %v156, %v155
  %v180 = vpack.c.bf16 %v158, %v157
  %v181 = vpack.c.bf16 %v160, %v159
  %v182 = vpack.c.bf16 %v162, %v161
  %v183 = vpack.c.bf16 %v164, %v163
  %v184 = vpack.c.bf16 %v166, %v165
  %v185 = vld [vmem:[#allocation2 + $0xe0] sm:$0xff]
  %s186 = scalar_lea.vmem %s1, 32
  %v187 = vld [vmem:[%s186] sm:$0xff]
  %v188 = vld [vmem:[%s186 + $0x8] sm:$0xff]
  %v189 = vld [vmem:[%s186 + $0x10] sm:$0xff]
  %v190 = vld [vmem:[%s186 + $0x18] sm:$0x33]
  %v191 = vpack.c.bf16 %v141, %v140
  %v192 = vpack.c.bf16 %v143, %v142
  %v193 = vpack.c.bf16 %v145, %v144
  %v194 = vpack.c.bf16 %v147, %v146
  %v195 = vpack.c.bf16 %v149, %v148
  %v196 = vpack.c.bf16 %v151, %v150
  %v197 = vpack.c.bf16 %v153, %v152
  %v198 = vpack.c.bf16 %v155, %v154
  %v199 = vpack.c.bf16 %v157, %v156
  %v200 = vpack.c.bf16 %v159, %v158
  %v201 = vpack.c.bf16 %v161, %v160
  %v202 = vpack.c.bf16 %v163, %v162
  %v203 = vpack.c.bf16 %v165, %v164
  %v204 = vpack.c.bf16 %v185, %v166
  %v209 = vunpack.c.l.b16 %v187
  %v210 = vunpack.c.h.b16 %v187
  %v211 = vunpack.c.l.b16 %v188
  %v212 = vunpack.c.h.b16 %v188
  %v213 = vunpack.c.l.b16 %v189
  %v214 = vunpack.c.h.b16 %v189
  %v215 = vunpack.c.l.b16 %v190
  %v216 = vunpack.c.h.b16 %v190
  %v217 = vpack.c.b16 %v211, %v209
  %v218 = vpack.c.b16 %v212, %v210
  %v219 = vpack.c.b16 %v215, %v213
  %v220 = vpack.c.b16 %v216, %v214
  %v224 = vsel %vm51, %v191, 0
  %v227 = vsel %vm51, %v192, 0
  %v230 = vsel %vm51, %v193, 0
  %v233 = vsel %vm51, %v194, 0
  %v236 = vsel %vm51, %v195, 0
  %v239 = vsel %vm51, %v196, 0
  %v242 = vsel %vm51, %v197, 0
  %v245 = vsel %vm51, %v198, 0
  %v248 = vsel %vm51, %v199, 0
  %v251 = vsel %vm51, %v200, 0
  %v254 = vsel %vm51, %v201, 0
  %v257 = vsel %vm51, %v202, 0
  %v260 = vsel %vm51, %v203, 0
  %v263 = vsel %vm51, %v204, 0
  %vm265 = vcmask 1045504
  %v267 = vsel %vm265, %v219, 0
  %v270 = vsel %vm265, %v220, 0
  %272 = vmatprep.subr.bf16.mxu0 0
  %273 = vmatpush1.bf16.msra.mxu0 0
  %274 = vmatprep.subr.bf16.mxu0 0
  %275 = vmatpush1.bf16.msra.mxu0 0
  %276 = vmatprep.subr.bf16.mxu0 0
  %277 = vmatpush1.bf16.msra.mxu0 0
  %278 = vmatprep.subr.bf16.mxu0 0
  %279 = vmatpush1.bf16.msra.mxu0 0
  %280 = vmatprep.subr.bf16.mxu0 0
  %281 = vmatpush1.bf16.msra.mxu0 0
  %282 = vmatprep.subr.bf16.mxu0 0
  %283 = vmatpush1.bf16.msra.mxu0 0
  %284 = vmatprep.subr.bf16.mxu0 %v270
  %285 = vmatpush1.bf16.msra.mxu0 %v267
  %286 = vmatprep.subr.bf16.mxu0 %v218
  %287 = vmatpush1.bf16.msra.mxu0 %v217
  %288 = vmatprep.subr.bf16.mxu0 0
  %289 = vmatpush2.bf16.msra.mxu0 0
  %290 = vmatprep.subr.bf16.mxu0 0
  %291 = vmatpush2.bf16.msra.mxu0 0
  %292 = vmatprep.subr.bf16.mxu0 0
  %293 = vmatpush2.bf16.msra.mxu0 0
  %294 = vmatprep.subr.bf16.mxu0 0
  %295 = vmatpush2.bf16.msra.mxu0 0
  %296 = vmatprep.subr.bf16.mxu0 0
  %297 = vmatpush2.bf16.msra.mxu0 0
  %298 = vmatprep.subr.bf16.mxu0 0
  %299 = vmatpush2.bf16.msra.mxu0 0
  %300 = vmatprep.subr.bf16.mxu0 0
  %301 = vmatpush2.bf16.msra.mxu0 0
  %302 = vmatprep.subr.bf16.mxu0 0
  %303 = vmatpush2.bf16.msra.mxu0 0
  %304 = vmatprep.mubr.bf16.mxu0 0
  %305 = vmatmul.mubr.bf16.gmra.mxu0 %v224
  %v306 = vpop.f32.mrf.mxu0
  %v307 = vadd.f32 0.0, %v306
  %v308 = vpop.f32.mrf.mxu0
  %v309 = vadd.f32 0.0, %v308
  %v310 = vpop.f32.mrf.mxu0
  %v311 = vadd.f32 0.0, %v310
  %v312 = vpop.f32.mrf.mxu0
  %v313 = vadd.f32 0.0, %v312
  %314 = vmatprep.mubr.bf16.mxu0 0
  %315 = vmatmul.mubr.bf16.gmra.mxu0 %v227
  %v316 = vpop.f32.mrf.mxu0
  %v317 = vadd.f32 0.0, %v316
  %v318 = vpop.f32.mrf.mxu0
  %v319 = vadd.f32 0.0, %v318
  %v320 = vpop.f32.mrf.mxu0
  %v321 = vadd.f32 0.0, %v320
  %v322 = vpop.f32.mrf.mxu0
  %v323 = vadd.f32 0.0, %v322
  %324 = vmatprep.mubr.bf16.mxu0 0
  %325 = vmatmul.mubr.bf16.gmra.mxu0 %v230
  %v326 = vpop.f32.mrf.mxu0
  %v327 = vadd.f32 0.0, %v326
  %v328 = vpop.f32.mrf.mxu0
  %v329 = vadd.f32 0.0, %v328
  %v330 = vpop.f32.mrf.mxu0
  %v331 = vadd.f32 0.0, %v330
  %v332 = vpop.f32.mrf.mxu0
  %v333 = vadd.f32 0.0, %v332
  %334 = vmatprep.mubr.bf16.mxu0 0
  %335 = vmatmul.mubr.bf16.gmra.mxu0 %v233
  %v336 = vpop.f32.mrf.mxu0
  %v337 = vadd.f32 0.0, %v336
  %v338 = vpop.f32.mrf.mxu0
  %v339 = vadd.f32 0.0, %v338
  %v340 = vpop.f32.mrf.mxu0
  %v341 = vadd.f32 0.0, %v340
  %v342 = vpop.f32.mrf.mxu0
  %v343 = vadd.f32 0.0, %v342
  %344 = vmatprep.mubr.bf16.mxu0 0
  %345 = vmatmul.mubr.bf16.gmra.mxu0 %v236
  %v346 = vpop.f32.mrf.mxu0
  %v347 = vadd.f32 0.0, %v346
  %v348 = vpop.f32.mrf.mxu0
  %v349 = vadd.f32 0.0, %v348
  %v350 = vpop.f32.mrf.mxu0
  %v351 = vadd.f32 0.0, %v350
  %v352 = vpop.f32.mrf.mxu0
  %v353 = vadd.f32 0.0, %v352
  %354 = vmatprep.mubr.bf16.mxu0 0
  %355 = vmatmul.mubr.bf16.gmra.mxu0 %v239
  %v356 = vpop.f32.mrf.mxu0
  %v357 = vadd.f32 0.0, %v356
  %v358 = vpop.f32.mrf.mxu0
  %v359 = vadd.f32 0.0, %v358
  %v360 = vpop.f32.mrf.mxu0
  %v361 = vadd.f32 0.0, %v360
  %v362 = vpop.f32.mrf.mxu0
  %v363 = vadd.f32 0.0, %v362
  %364 = vmatprep.mubr.bf16.mxu0 0
  %365 = vmatmul.mubr.bf16.gmra.mxu0 %v242
  %v366 = vpop.f32.mrf.mxu0
  %v367 = vadd.f32 0.0, %v366
  %v368 = vpop.f32.mrf.mxu0
  %v369 = vadd.f32 0.0, %v368
  %v370 = vpop.f32.mrf.mxu0
  %v371 = vadd.f32 0.0, %v370
  %v372 = vpop.f32.mrf.mxu0
  %v373 = vadd.f32 0.0, %v372
  %374 = vmatprep.mubr.bf16.mxu0 0
  %375 = vmatmul.mubr.bf16.gmra.mxu0 %v245
  %v376 = vpop.f32.mrf.mxu0
  %v377 = vadd.f32 0.0, %v376
  %v378 = vpop.f32.mrf.mxu0
  %v379 = vadd.f32 0.0, %v378
  %v380 = vpop.f32.mrf.mxu0
  %v381 = vadd.f32 0.0, %v380
  %v382 = vpop.f32.mrf.mxu0
  %v383 = vadd.f32 0.0, %v382
  %384 = vmatprep.mubr.bf16.mxu0 0
  %385 = vmatmul.mubr.bf16.gmra.mxu0 %v248
  %v386 = vpop.f32.mrf.mxu0
  %v387 = vadd.f32 0.0, %v386
  %v388 = vpop.f32.mrf.mxu0
  %v389 = vadd.f32 0.0, %v388
  %v390 = vpop.f32.mrf.mxu0
  %v391 = vadd.f32 0.0, %v390
  %v392 = vpop.f32.mrf.mxu0
  %v393 = vadd.f32 0.0, %v392
  %394 = vmatprep.mubr.bf16.mxu0 0
  %395 = vmatmul.mubr.bf16.gmra.mxu0 %v251
  %v396 = vpop.f32.mrf.mxu0
  %v397 = vadd.f32 0.0, %v396
  %v398 = vpop.f32.mrf.mxu0
  %v399 = vadd.f32 0.0, %v398
  %v400 = vpop.f32.mrf.mxu0
  %v401 = vadd.f32 0.0, %v400
  %v402 = vpop.f32.mrf.mxu0
  %v403 = vadd.f32 0.0, %v402
  %404 = vmatprep.mubr.bf16.mxu0 0
  %405 = vmatmul.mubr.bf16.gmra.mxu0 %v254
  %v406 = vpop.f32.mrf.mxu0
  %v407 = vadd.f32 0.0, %v406
  %v408 = vpop.f32.mrf.mxu0
  %v409 = vadd.f32 0.0, %v408
  %v410 = vpop.f32.mrf.mxu0
  %v411 = vadd.f32 0.0, %v410
  %v412 = vpop.f32.mrf.mxu0
  %v413 = vadd.f32 0.0, %v412
  %414 = vmatprep.mubr.bf16.mxu0 0
  %415 = vmatmul.mubr.bf16.gmra.mxu0 %v257
  %v416 = vpop.f32.mrf.mxu0
  %v417 = vadd.f32 0.0, %v416
  %v418 = vpop.f32.mrf.mxu0
  %v419 = vadd.f32 0.0, %v418
  %v420 = vpop.f32.mrf.mxu0
  %v421 = vadd.f32 0.0, %v420
  %v422 = vpop.f32.mrf.mxu0
  %v423 = vadd.f32 0.0, %v422
  %424 = vmatprep.mubr.bf16.mxu0 0
  %425 = vmatmul.mubr.bf16.gmra.mxu0 %v260
  %v426 = vpop.f32.mrf.mxu0
  %v427 = vadd.f32 0.0, %v426
  %v428 = vpop.f32.mrf.mxu0
  %v429 = vadd.f32 0.0, %v428
  %v430 = vpop.f32.mrf.mxu0
  %v431 = vadd.f32 0.0, %v430
  %v432 = vpop.f32.mrf.mxu0
  %v433 = vadd.f32 0.0, %v432
  %434 = vmatprep.mubr.bf16.mxu0 0
  %435 = vmatmul.mubr.bf16.gmra.mxu0 %v263
  %v436 = vpop.f32.mrf.mxu0
  %v437 = vadd.f32 0.0, %v436
  %v438 = vpop.f32.mrf.mxu0
  %v439 = vadd.f32 0.0, %v438
  %v440 = vpop.f32.mrf.mxu0
  %v441 = vadd.f32 0.0, %v440
  %v442 = vpop.f32.mrf.mxu0
  %v443 = vadd.f32 0.0, %v442
  %444 = vdwg.mxu0
  %v449 = vunpack.c.l.b16 %v167
  %v450 = vunpack.c.h.b16 %v167
  %v451 = vunpack.c.l.b16 %v168
  %v452 = vunpack.c.h.b16 %v168
  %v453 = vunpack.c.l.b16 %v169
  %v454 = vunpack.c.h.b16 %v169
  %v455 = vunpack.c.l.b16 %v170
  %v456 = vunpack.c.h.b16 %v170
  %v457 = vpack.c.b16 %v451, %v449
  %v458 = vpack.c.b16 %v452, %v450
  %v459 = vpack.c.b16 %v455, %v453
  %v460 = vpack.c.b16 %v456, %v454
  %v464 = vsel %vm51, %v171, 0
  %v467 = vsel %vm51, %v172, 0
  %v470 = vsel %vm51, %v173, 0
  %v473 = vsel %vm51, %v174, 0
  %v476 = vsel %vm51, %v175, 0
  %v479 = vsel %vm51, %v176, 0
  %v482 = vsel %vm51, %v177, 0
  %v485 = vsel %vm51, %v178, 0
  %v488 = vsel %vm51, %v179, 0
  %v491 = vsel %vm51, %v180, 0
  %v494 = vsel %vm51, %v181, 0
  %v497 = vsel %vm51, %v182, 0
  %v500 = vsel %vm51, %v183, 0
  %v503 = vsel %vm51, %v184, 0
  %v506 = vsel %vm265, %v459, 0
  %v509 = vsel %vm265, %v460, 0
  %511 = vmatprep.subr.bf16.mxu0 0
  %512 = vmatpush1.bf16.msra.mxu0 0
  %513 = vmatprep.subr.bf16.mxu0 0
  %514 = vmatpush1.bf16.msra.mxu0 0
  %515 = vmatprep.subr.bf16.mxu0 0
  %516 = vmatpush1.bf16.msra.mxu0 0
  %517 = vmatprep.subr.bf16.mxu0 0
  %518 = vmatpush1.bf16.msra.mxu0 0
  %519 = vmatprep.subr.bf16.mxu0 0
  %520 = vmatpush1.bf16.msra.mxu0 0
  %521 = vmatprep.subr.bf16.mxu0 0
  %522 = vmatpush1.bf16.msra.mxu0 0
  %523 = vmatprep.subr.bf16.mxu0 %v509
  %524 = vmatpush1.bf16.msra.mxu0 %v506
  %525 = vmatprep.subr.bf16.mxu0 %v458
  %526 = vmatpush1.bf16.msra.mxu0 %v457
  %527 = vmatprep.subr.bf16.mxu0 0
  %528 = vmatpush2.bf16.msra.mxu0 0
  %529 = vmatprep.subr.bf16.mxu0 0
  %530 = vmatpush2.bf16.msra.mxu0 0
  %531 = vmatprep.subr.bf16.mxu0 0
  %532 = vmatpush2.bf16.msra.mxu0 0
  %533 = vmatprep.subr.bf16.mxu0 0
  %534 = vmatpush2.bf16.msra.mxu0 0
  %535 = vmatprep.subr.bf16.mxu0 0
  %536 = vmatpush2.bf16.msra.mxu0 0
  %537 = vmatprep.subr.bf16.mxu0 0
  %538 = vmatpush2.bf16.msra.mxu0 0
  %539 = vmatprep.subr.bf16.mxu0 0
  %540 = vmatpush2.bf16.msra.mxu0 0
  %541 = vmatprep.subr.bf16.mxu0 0
  %542 = vmatpush2.bf16.msra.mxu0 0
  %543 = vmatprep.mubr.bf16.mxu0 0
  %544 = vmatmul.mubr.bf16.gmra.mxu0 %v464
  %v545 = vpop.f32.mrf.mxu0
  %v546 = vadd.f32 %v307, %v545
  %v547 = vpop.f32.mrf.mxu0
  %v548 = vadd.f32 %v309, %v547
  %v549 = vpop.f32.mrf.mxu0
  %v550 = vadd.f32 %v311, %v549
  %v551 = vpop.f32.mrf.mxu0
  %v552 = vadd.f32 %v313, %v551
  %553 = vmatprep.mubr.bf16.mxu0 0
  %554 = vmatmul.mubr.bf16.gmra.mxu0 %v467
  %v555 = vpop.f32.mrf.mxu0
  %v556 = vadd.f32 %v317, %v555
  %v557 = vpop.f32.mrf.mxu0
  %v558 = vadd.f32 %v319, %v557
  %v559 = vpop.f32.mrf.mxu0
  %v560 = vadd.f32 %v321, %v559
  %v561 = vpop.f32.mrf.mxu0
  %v562 = vadd.f32 %v323, %v561
  %563 = vmatprep.mubr.bf16.mxu0 0
  %564 = vmatmul.mubr.bf16.gmra.mxu0 %v470
  %v565 = vpop.f32.mrf.mxu0
  %v566 = vadd.f32 %v327, %v565
  %v567 = vpop.f32.mrf.mxu0
  %v568 = vadd.f32 %v329, %v567
  %v569 = vpop.f32.mrf.mxu0
  %v570 = vadd.f32 %v331, %v569
  %v571 = vpop.f32.mrf.mxu0
  %v572 = vadd.f32 %v333, %v571
  %573 = vmatprep.mubr.bf16.mxu0 0
  %574 = vmatmul.mubr.bf16.gmra.mxu0 %v473
  %v575 = vpop.f32.mrf.mxu0
  %v576 = vadd.f32 %v337, %v575
  %v577 = vpop.f32.mrf.mxu0
  %v578 = vadd.f32 %v339, %v577
  %v579 = vpop.f32.mrf.mxu0
  %v580 = vadd.f32 %v341, %v579
  %v581 = vpop.f32.mrf.mxu0
  %v582 = vadd.f32 %v343, %v581
  %583 = vmatprep.mubr.bf16.mxu0 0
  %584 = vmatmul.mubr.bf16.gmra.mxu0 %v476
  %v585 = vpop.f32.mrf.mxu0
  %v586 = vadd.f32 %v347, %v585
  %v587 = vpop.f32.mrf.mxu0
  %v588 = vadd.f32 %v349, %v587
  %v589 = vpop.f32.mrf.mxu0
  %v590 = vadd.f32 %v351, %v589
  %v591 = vpop.f32.mrf.mxu0
  %v592 = vadd.f32 %v353, %v591
  %593 = vmatprep.mubr.bf16.mxu0 0
  %594 = vmatmul.mubr.bf16.gmra.mxu0 %v479
  %v595 = vpop.f32.mrf.mxu0
  %v596 = vadd.f32 %v357, %v595
  %v597 = vpop.f32.mrf.mxu0
  %v598 = vadd.f32 %v359, %v597
  %v599 = vpop.f32.mrf.mxu0
  %v600 = vadd.f32 %v361, %v599
  %v601 = vpop.f32.mrf.mxu0
  %v602 = vadd.f32 %v363, %v601
  %603 = vmatprep.mubr.bf16.mxu0 0
  %604 = vmatmul.mubr.bf16.gmra.mxu0 %v482
  %v605 = vpop.f32.mrf.mxu0
  %v606 = vadd.f32 %v367, %v605
  %v607 = vpop.f32.mrf.mxu0
  %v608 = vadd.f32 %v369, %v607
  %v609 = vpop.f32.mrf.mxu0
  %v610 = vadd.f32 %v371, %v609
  %v611 = vpop.f32.mrf.mxu0
  %v612 = vadd.f32 %v373, %v611
  %613 = vmatprep.mubr.bf16.mxu0 0
  %614 = vmatmul.mubr.bf16.gmra.mxu0 %v485
  %v615 = vpop.f32.mrf.mxu0
  %v616 = vadd.f32 %v377, %v615
  %v617 = vpop.f32.mrf.mxu0
  %v618 = vadd.f32 %v379, %v617
  %v619 = vpop.f32.mrf.mxu0
  %v620 = vadd.f32 %v381, %v619
  %v621 = vpop.f32.mrf.mxu0
  %v622 = vadd.f32 %v383, %v621
  %623 = vmatprep.mubr.bf16.mxu0 0
  %624 = vmatmul.mubr.bf16.gmra.mxu0 %v488
  %v625 = vpop.f32.mrf.mxu0
  %v626 = vadd.f32 %v387, %v625
  %v627 = vpop.f32.mrf.mxu0
  %v628 = vadd.f32 %v389, %v627
  %v629 = vpop.f32.mrf.mxu0
  %v630 = vadd.f32 %v391, %v629
  %v631 = vpop.f32.mrf.mxu0
  %v632 = vadd.f32 %v393, %v631
  %633 = vmatprep.mubr.bf16.mxu0 0
  %634 = vmatmul.mubr.bf16.gmra.mxu0 %v491
  %v635 = vpop.f32.mrf.mxu0
  %v636 = vadd.f32 %v397, %v635
  %v637 = vpop.f32.mrf.mxu0
  %v638 = vadd.f32 %v399, %v637
  %v639 = vpop.f32.mrf.mxu0
  %v640 = vadd.f32 %v401, %v639
  %v641 = vpop.f32.mrf.mxu0
  %v642 = vadd.f32 %v403, %v641
  %643 = vmatprep.mubr.bf16.mxu0 0
  %644 = vmatmul.mubr.bf16.gmra.mxu0 %v494
  %v645 = vpop.f32.mrf.mxu0
  %v646 = vadd.f32 %v407, %v645
  %v647 = vpop.f32.mrf.mxu0
  %v648 = vadd.f32 %v409, %v647
  %v649 = vpop.f32.mrf.mxu0
  %v650 = vadd.f32 %v411, %v649
  %v651 = vpop.f32.mrf.mxu0
  %v652 = vadd.f32 %v413, %v651
  %653 = vmatprep.mubr.bf16.mxu0 0
  %654 = vmatmul.mubr.bf16.gmra.mxu0 %v497
  %v655 = vpop.f32.mrf.mxu0
  %v656 = vadd.f32 %v417, %v655
  %v657 = vpop.f32.mrf.mxu0
  %v658 = vadd.f32 %v419, %v657
  %v659 = vpop.f32.mrf.mxu0
  %v660 = vadd.f32 %v421, %v659
  %v661 = vpop.f32.mrf.mxu0
  %v662 = vadd.f32 %v423, %v661
  %663 = vmatprep.mubr.bf16.mxu0 0
  %664 = vmatmul.mubr.bf16.gmra.mxu0 %v500
  %v665 = vpop.f32.mrf.mxu0
  %v666 = vadd.f32 %v427, %v665
  %v667 = vpop.f32.mrf.mxu0
  %v668 = vadd.f32 %v429, %v667
  %v669 = vpop.f32.mrf.mxu0
  %v670 = vadd.f32 %v431, %v669
  %v671 = vpop.f32.mrf.mxu0
  %v672 = vadd.f32 %v433, %v671
  %673 = vmatprep.mubr.bf16.mxu0 0
  %674 = vmatmul.mubr.bf16.gmra.mxu0 %v503
  %v675 = vpop.f32.mrf.mxu0
  %v676 = vadd.f32 %v437, %v675
  %v677 = vpop.f32.mrf.mxu0
  %v678 = vadd.f32 %v439, %v677
  %v679 = vpop.f32.mrf.mxu0
  %v680 = vadd.f32 %v441, %v679
  %v681 = vpop.f32.mrf.mxu0
  %v682 = vadd.f32 %v443, %v681
  %683 = vdwg.mxu0
  %v684 = vld [vmem:[#allocation2 + $0x10] sm:$0xff]
  %v685 = vld [vmem:[#allocation2 + $0x18] sm:$0xff]
  %v686 = vld [vmem:[#allocation2 + $0x20] sm:$0xff]
  %v687 = vld [vmem:[#allocation2 + $0x28] sm:$0xff]
  %v688 = vld [vmem:[#allocation2 + $0x30] sm:$0xff]
  %v689 = vld [vmem:[#allocation2 + $0x38] sm:$0xff]
  %v690 = vld [vmem:[#allocation2 + $0x40] sm:$0xff]
  %v691 = vld [vmem:[#allocation2 + $0x48] sm:$0xff]
  %v692 = vld [vmem:[#allocation2 + $0x50] sm:$0xff]
  %v693 = vld [vmem:[#allocation2 + $0x58] sm:$0xff]
  %v694 = vld [vmem:[#allocation2 + $0x60] sm:$0xff]
  %v695 = vld [vmem:[#allocation2 + $0x68] sm:$0xff]
  %v696 = vld [vmem:[#allocation2 + $0x70] sm:$0xff]
  %v697 = vld [vmem:[#allocation2 + $0x78] sm:$0xff]
  %v698 = vld [vmem:[#allocation2 + $0x80] sm:$0xff]
  %v699 = vld [vmem:[#allocation2 + $0x88] sm:$0xff]
  %v700 = vld [vmem:[#allocation2 + $0x90] sm:$0xff]
  %v701 = vld [vmem:[#allocation2 + $0x98] sm:$0xff]
  %v702 = vld [vmem:[#allocation2 + $0xa0] sm:$0xff]
  %v703 = vld [vmem:[#allocation2 + $0xa8] sm:$0xff]
  %v704 = vld [vmem:[#allocation2 + $0xb0] sm:$0xff]
  %v705 = vld [vmem:[#allocation2 + $0xb8] sm:$0xff]
  %v706 = vld [vmem:[#allocation2 + $0xc0] sm:$0xff]
  %v707 = vld [vmem:[#allocation2 + $0xc8] sm:$0xff]
  %v708 = vld [vmem:[#allocation2 + $0xd0] sm:$0xff]
  %v709 = vld [vmem:[#allocation2 + $0xd8] sm:$0xff]
  %v710 = vld [vmem:[#allocation2 + $0xe0] sm:$0xff]
  %v711 = vld [vmem:[#allocation2 + $0xe8] sm:$0xff]
  %s712 = scalar_lea.vmem %s1, 64
  %v713 = vld [vmem:[%s712] sm:$0xff]
  %v714 = vld [vmem:[%s712 + $0x8] sm:$0xff]
  %v715 = vld [vmem:[%s712 + $0x10] sm:$0xff]
  %v716 = vld [vmem:[%s712 + $0x18] sm:$0x33]
  %v717 = vpack.c.bf16 %v685, %v684
  %v718 = vpack.c.bf16 %v687, %v686
  %v719 = vpack.c.bf16 %v689, %v688
  %v720 = vpack.c.bf16 %v691, %v690
  %v721 = vpack.c.bf16 %v693, %v692
  %v722 = vpack.c.bf16 %v695, %v694
  %v723 = vpack.c.bf16 %v697, %v696
  %v724 = vpack.c.bf16 %v699, %v698
  %v725 = vpack.c.bf16 %v701, %v700
  %v726 = vpack.c.bf16 %v703, %v702
  %v727 = vpack.c.bf16 %v705, %v704
  %v728 = vpack.c.bf16 %v707, %v706
  %v729 = vpack.c.bf16 %v709, %v708
  %v730 = vpack.c.bf16 %v711, %v710
  %v735 = vunpack.c.l.b16 %v713
  %v736 = vunpack.c.h.b16 %v713
  %v737 = vunpack.c.l.b16 %v714
  %v738 = vunpack.c.h.b16 %v714
  %v739 = vunpack.c.l.b16 %v715
  %v740 = vunpack.c.h.b16 %v715
  %v741 = vunpack.c.l.b16 %v716
  %v742 = vunpack.c.h.b16 %v716
  %v743 = vpack.c.b16 %v737, %v735
  %v744 = vpack.c.b16 %v738, %v736
  %v745 = vpack.c.b16 %v741, %v739
  %v746 = vpack.c.b16 %v742, %v740
  %v750 = vsel %vm51, %v717, 0
  %v753 = vsel %vm51, %v718, 0
  %v756 = vsel %vm51, %v719, 0
  %v759 = vsel %vm51, %v720, 0
  %v762 = vsel %vm51, %v721, 0
  %v765 = vsel %vm51, %v722, 0
  %v768 = vsel %vm51, %v723, 0
  %v771 = vsel %vm51, %v724, 0
  %v774 = vsel %vm51, %v725, 0
  %v777 = vsel %vm51, %v726, 0
  %v780 = vsel %vm51, %v727, 0
  %v783 = vsel %vm51, %v728, 0
  %v786 = vsel %vm51, %v729, 0
  %v789 = vsel %vm51, %v730, 0
  %v792 = vsel %vm265, %v745, 0
  %v795 = vsel %vm265, %v746, 0
  %797 = vmatprep.subr.bf16.mxu0 0
  %798 = vmatpush1.bf16.msra.mxu0 0
  %799 = vmatprep.subr.bf16.mxu0 0
  %800 = vmatpush1.bf16.msra.mxu0 0
  %801 = vmatprep.subr.bf16.mxu0 0
  %802 = vmatpush1.bf16.msra.mxu0 0
  %803 = vmatprep.subr.bf16.mxu0 0
  %804 = vmatpush1.bf16.msra.mxu0 0
  %805 = vmatprep.subr.bf16.mxu0 0
  %806 = vmatpush1.bf16.msra.mxu0 0
  %807 = vmatprep.subr.bf16.mxu0 0
  %808 = vmatpush1.bf16.msra.mxu0 0
  %809 = vmatprep.subr.bf16.mxu0 %v795
  %810 = vmatpush1.bf16.msra.mxu0 %v792
  %811 = vmatprep.subr.bf16.mxu0 %v744
  %812 = vmatpush1.bf16.msra.mxu0 %v743
  %813 = vmatprep.subr.bf16.mxu0 0
  %814 = vmatpush2.bf16.msra.mxu0 0
  %815 = vmatprep.subr.bf16.mxu0 0
  %816 = vmatpush2.bf16.msra.mxu0 0
  %817 = vmatprep.subr.bf16.mxu0 0
  %818 = vmatpush2.bf16.msra.mxu0 0
  %819 = vmatprep.subr.bf16.mxu0 0
  %820 = vmatpush2.bf16.msra.mxu0 0
  %821 = vmatprep.subr.bf16.mxu0 0
  %822 = vmatpush2.bf16.msra.mxu0 0
  %823 = vmatprep.subr.bf16.mxu0 0
  %824 = vmatpush2.bf16.msra.mxu0 0
  %825 = vmatprep.subr.bf16.mxu0 0
  %826 = vmatpush2.bf16.msra.mxu0 0
  %827 = vmatprep.subr.bf16.mxu0 0
  %828 = vmatpush2.bf16.msra.mxu0 0
  %829 = vmatprep.mubr.bf16.mxu0 0
  %830 = vmatmul.mubr.bf16.gmra.mxu0 %v750
  %v831 = vpop.f32.mrf.mxu0
  %v832 = vadd.f32 0.0, %v831
  %v833 = vpop.f32.mrf.mxu0
  %v834 = vadd.f32 0.0, %v833
  %v835 = vpop.f32.mrf.mxu0
  %v836 = vadd.f32 0.0, %v835
  %v837 = vpop.f32.mrf.mxu0
  %v838 = vadd.f32 0.0, %v837
  %839 = vmatprep.mubr.bf16.mxu0 0
  %840 = vmatmul.mubr.bf16.gmra.mxu0 %v753
  %v841 = vpop.f32.mrf.mxu0
  %v842 = vadd.f32 0.0, %v841
  %v843 = vpop.f32.mrf.mxu0
  %v844 = vadd.f32 0.0, %v843
  %v845 = vpop.f32.mrf.mxu0
  %v846 = vadd.f32 0.0, %v845
  %v847 = vpop.f32.mrf.mxu0
  %v848 = vadd.f32 0.0, %v847
  %849 = vmatprep.mubr.bf16.mxu0 0
  %850 = vmatmul.mubr.bf16.gmra.mxu0 %v756
  %v851 = vpop.f32.mrf.mxu0
  %v852 = vadd.f32 0.0, %v851
  %v853 = vpop.f32.mrf.mxu0
  %v854 = vadd.f32 0.0, %v853
  %v855 = vpop.f32.mrf.mxu0
  %v856 = vadd.f32 0.0, %v855
  %v857 = vpop.f32.mrf.mxu0
  %v858 = vadd.f32 0.0, %v857
  %859 = vmatprep.mubr.bf16.mxu0 0
  %860 = vmatmul.mubr.bf16.gmra.mxu0 %v759
  %v861 = vpop.f32.mrf.mxu0
  %v862 = vadd.f32 0.0, %v861
  %v863 = vpop.f32.mrf.mxu0
  %v864 = vadd.f32 0.0, %v863
  %v865 = vpop.f32.mrf.mxu0
  %v866 = vadd.f32 0.0, %v865
  %v867 = vpop.f32.mrf.mxu0
  %v868 = vadd.f32 0.0, %v867
  %869 = vmatprep.mubr.bf16.mxu0 0
  %870 = vmatmul.mubr.bf16.gmra.mxu0 %v762
  %v871 = vpop.f32.mrf.mxu0
  %v872 = vadd.f32 0.0, %v871
  %v873 = vpop.f32.mrf.mxu0
  %v874 = vadd.f32 0.0, %v873
  %v875 = vpop.f32.mrf.mxu0
  %v876 = vadd.f32 0.0, %v875
  %v877 = vpop.f32.mrf.mxu0
  %v878 = vadd.f32 0.0, %v877
  %879 = vmatprep.mubr.bf16.mxu0 0
  %880 = vmatmul.mubr.bf16.gmra.mxu0 %v765
  %v881 = vpop.f32.mrf.mxu0
  %v882 = vadd.f32 0.0, %v881
  %v883 = vpop.f32.mrf.mxu0
  %v884 = vadd.f32 0.0, %v883
  %v885 = vpop.f32.mrf.mxu0
  %v886 = vadd.f32 0.0, %v885
  %v887 = vpop.f32.mrf.mxu0
  %v888 = vadd.f32 0.0, %v887
  %889 = vmatprep.mubr.bf16.mxu0 0
  %890 = vmatmul.mubr.bf16.gmra.mxu0 %v768
  %v891 = vpop.f32.mrf.mxu0
  %v892 = vadd.f32 0.0, %v891
  %v893 = vpop.f32.mrf.mxu0
  %v894 = vadd.f32 0.0, %v893
  %v895 = vpop.f32.mrf.mxu0
  %v896 = vadd.f32 0.0, %v895
  %v897 = vpop.f32.mrf.mxu0
  %v898 = vadd.f32 0.0, %v897
  %899 = vmatprep.mubr.bf16.mxu0 0
  %900 = vmatmul.mubr.bf16.gmra.mxu0 %v771
  %v901 = vpop.f32.mrf.mxu0
  %v902 = vadd.f32 0.0, %v901
  %v903 = vpop.f32.mrf.mxu0
  %v904 = vadd.f32 0.0, %v903
  %v905 = vpop.f32.mrf.mxu0
  %v906 = vadd.f32 0.0, %v905
  %v907 = vpop.f32.mrf.mxu0
  %v908 = vadd.f32 0.0, %v907
  %909 = vmatprep.mubr.bf16.mxu0 0
  %910 = vmatmul.mubr.bf16.gmra.mxu0 %v774
  %v911 = vpop.f32.mrf.mxu0
  %v912 = vadd.f32 0.0, %v911
  %v913 = vpop.f32.mrf.mxu0
  %v914 = vadd.f32 0.0, %v913
  %v915 = vpop.f32.mrf.mxu0
  %v916 = vadd.f32 0.0, %v915
  %v917 = vpop.f32.mrf.mxu0
  %v918 = vadd.f32 0.0, %v917
  %919 = vmatprep.mubr.bf16.mxu0 0
  %920 = vmatmul.mubr.bf16.gmra.mxu0 %v777
  %v921 = vpop.f32.mrf.mxu0
  %v922 = vadd.f32 0.0, %v921
  %v923 = vpop.f32.mrf.mxu0
  %v924 = vadd.f32 0.0, %v923
  %v925 = vpop.f32.mrf.mxu0
  %v926 = vadd.f32 0.0, %v925
  %v927 = vpop.f32.mrf.mxu0
  %v928 = vadd.f32 0.0, %v927
  %929 = vmatprep.mubr.bf16.mxu0 0
  %930 = vmatmul.mubr.bf16.gmra.mxu0 %v780
  %v931 = vpop.f32.mrf.mxu0
  %v932 = vadd.f32 0.0, %v931
  %v933 = vpop.f32.mrf.mxu0
  %v934 = vadd.f32 0.0, %v933
  %v935 = vpop.f32.mrf.mxu0
  %v936 = vadd.f32 0.0, %v935
  %v937 = vpop.f32.mrf.mxu0
  %v938 = vadd.f32 0.0, %v937
  %939 = vmatprep.mubr.bf16.mxu0 0
  %940 = vmatmul.mubr.bf16.gmra.mxu0 %v783
  %v941 = vpop.f32.mrf.mxu0
  %v942 = vadd.f32 0.0, %v941
  %v943 = vpop.f32.mrf.mxu0
  %v944 = vadd.f32 0.0, %v943
  %v945 = vpop.f32.mrf.mxu0
  %v946 = vadd.f32 0.0, %v945
  %v947 = vpop.f32.mrf.mxu0
  %v948 = vadd.f32 0.0, %v947
  %949 = vmatprep.mubr.bf16.mxu0 0
  %950 = vmatmul.mubr.bf16.gmra.mxu0 %v786
  %v951 = vpop.f32.mrf.mxu0
  %v952 = vadd.f32 0.0, %v951
  %v953 = vpop.f32.mrf.mxu0
  %v954 = vadd.f32 0.0, %v953
  %v955 = vpop.f32.mrf.mxu0
  %v956 = vadd.f32 0.0, %v955
  %v957 = vpop.f32.mrf.mxu0
  %v958 = vadd.f32 0.0, %v957
  %959 = vmatprep.mubr.bf16.mxu0 0
  %960 = vmatmul.mubr.bf16.gmra.mxu0 %v789
  %v961 = vpop.f32.mrf.mxu0
  %v962 = vadd.f32 0.0, %v961
  %v963 = vpop.f32.mrf.mxu0
  %v964 = vadd.f32 0.0, %v963
  %v965 = vpop.f32.mrf.mxu0
  %v966 = vadd.f32 0.0, %v965
  %v967 = vpop.f32.mrf.mxu0
  %v968 = vadd.f32 0.0, %v967
  %969 = vdwg.mxu0
  %v970 = vadd.f32 %v546, %v832
  %v971 = vadd.f32 %v548, %v834
  %v972 = vadd.f32 %v550, %v836
  %v973 = vadd.f32 %v552, %v838
  %v974 = vadd.f32 %v556, %v842
  %v975 = vadd.f32 %v558, %v844
  %v976 = vadd.f32 %v560, %v846
  %v977 = vadd.f32 %v562, %v848
  %v978 = vadd.f32 %v566, %v852
  %v979 = vadd.f32 %v568, %v854
  %v980 = vadd.f32 %v570, %v856
  %v981 = vadd.f32 %v572, %v858
  %v982 = vadd.f32 %v576, %v862
  %v983 = vadd.f32 %v578, %v864
  %v984 = vadd.f32 %v580, %v866
  %v985 = vadd.f32 %v582, %v868
  %v986 = vadd.f32 %v586, %v872
  %v987 = vadd.f32 %v588, %v874
  %v988 = vadd.f32 %v590, %v876
  %v989 = vadd.f32 %v592, %v878
  %v990 = vadd.f32 %v596, %v882
  %v991 = vadd.f32 %v598, %v884
  %v992 = vadd.f32 %v600, %v886
  %v993 = vadd.f32 %v602, %v888
  %v994 = vadd.f32 %v606, %v892
  %v995 = vadd.f32 %v608, %v894
  %v996 = vadd.f32 %v610, %v896
  %v997 = vadd.f32 %v612, %v898
  %v998 = vadd.f32 %v616, %v902
  %v999 = vadd.f32 %v618, %v904
  %v1000 = vadd.f32 %v620, %v906
  %v1001 = vadd.f32 %v622, %v908
  %v1002 = vadd.f32 %v626, %v912
  %v1003 = vadd.f32 %v628, %v914
  %v1004 = vadd.f32 %v630, %v916
  %v1005 = vadd.f32 %v632, %v918
  %v1006 = vadd.f32 %v636, %v922
  %v1007 = vadd.f32 %v638, %v924
  %v1008 = vadd.f32 %v640, %v926
  %v1009 = vadd.f32 %v642, %v928
  %v1010 = vadd.f32 %v646, %v932
  %v1011 = vadd.f32 %v648, %v934
  %v1012 = vadd.f32 %v650, %v936
  %v1013 = vadd.f32 %v652, %v938
  %v1014 = vadd.f32 %v656, %v942
  %v1015 = vadd.f32 %v658, %v944
  %v1016 = vadd.f32 %v660, %v946
  %v1017 = vadd.f32 %v662, %v948
  %v1018 = vadd.f32 %v666, %v952
  %v1019 = vadd.f32 %v668, %v954
  %v1020 = vadd.f32 %v670, %v956
  %v1021 = vadd.f32 %v672, %v958
  %v1022 = vadd.f32 %v676, %v962
  %v1023 = vadd.f32 %v678, %v964
  %v1024 = vadd.f32 %v680, %v966
  %v1025 = vadd.f32 %v682, %v968
  %v1026 = vld [vmem:[#allocation2 + $0x18] sm:$0xff]
  %v1027 = vld [vmem:[#allocation2 + $0x20] sm:$0xff]
  %v1028 = vld [vmem:[#allocation2 + $0x28] sm:$0xff]
  %v1029 = vld [vmem:[#allocation2 + $0x30] sm:$0xff]
  %v1030 = vld [vmem:[#allocation2 + $0x38] sm:$0xff]
  %v1031 = vld [vmem:[#allocation2 + $0x40] sm:$0xff]
  %v1032 = vld [vmem:[#allocation2 + $0x48] sm:$0xff]
  %v1033 = vld [vmem:[#allocation2 + $0x50] sm:$0xff]
  %v1034 = vld [vmem:[#allocation2 + $0x58] sm:$0xff]
  %v1035 = vld [vmem:[#allocation2 + $0x60] sm:$0xff]
  %v1036 = vld [vmem:[#allocation2 + $0x68] sm:$0xff]
  %v1037 = vld [vmem:[#allocation2 + $0x70] sm:$0xff]
  %v1038 = vld [vmem:[#allocation2 + $0x78] sm:$0xff]
  %v1039 = vld [vmem:[#allocation2 + $0x80] sm:$0xff]
  %v1040 = vld [vmem:[#allocation2 + $0x88] sm:$0xff]
  %v1041 = vld [vmem:[#allocation2 + $0x90] sm:$0xff]
  %v1042 = vld [vmem:[#allocation2 + $0x98] sm:$0xff]
  %v1043 = vld [vmem:[#allocation2 + $0xa0] sm:$0xff]
  %v1044 = vld [vmem:[#allocation2 + $0xa8] sm:$0xff]
  %v1045 = vld [vmem:[#allocation2 + $0xb0] sm:$0xff]
  %v1046 = vld [vmem:[#allocation2 + $0xb8] sm:$0xff]
  %v1047 = vld [vmem:[#allocation2 + $0xc0] sm:$0xff]
  %v1048 = vld [vmem:[#allocation2 + $0xc8] sm:$0xff]
  %v1049 = vld [vmem:[#allocation2 + $0xd0] sm:$0xff]
  %v1050 = vld [vmem:[#allocation2 + $0xd8] sm:$0xff]
  %v1051 = vld [vmem:[#allocation2 + $0xe0] sm:$0xff]
  %v1052 = vld [vmem:[#allocation2 + $0xe8] sm:$0xff]
  %v1053 = vld [vmem:[#allocation2 + $0xf0] sm:$0xff]
  %s1054 = scalar_lea.vmem %s1, 96
  %v1055 = vld [vmem:[%s1054] sm:$0xff]
  %v1056 = vld [vmem:[%s1054 + $0x8] sm:$0xff]
  %v1057 = vld [vmem:[%s1054 + $0x10] sm:$0xff]
  %v1058 = vld [vmem:[%s1054 + $0x18] sm:$0x33]
  %v1059 = vpack.c.bf16 %v1027, %v1026
  %v1060 = vpack.c.bf16 %v1029, %v1028
  %v1061 = vpack.c.bf16 %v1031, %v1030
  %v1062 = vpack.c.bf16 %v1033, %v1032
  %v1063 = vpack.c.bf16 %v1035, %v1034
  %v1064 = vpack.c.bf16 %v1037, %v1036
  %v1065 = vpack.c.bf16 %v1039, %v1038
  %v1066 = vpack.c.bf16 %v1041, %v1040
  %v1067 = vpack.c.bf16 %v1043, %v1042
  %v1068 = vpack.c.bf16 %v1045, %v1044
  %v1069 = vpack.c.bf16 %v1047, %v1046
  %v1070 = vpack.c.bf16 %v1049, %v1048
  %v1071 = vpack.c.bf16 %v1051, %v1050
  %v1072 = vpack.c.bf16 %v1053, %v1052
  %v1077 = vunpack.c.l.b16 %v1055
  %v1078 = vunpack.c.h.b16 %v1055
  %v1079 = vunpack.c.l.b16 %v1056
  %v1080 = vunpack.c.h.b16 %v1056
  %v1081 = vunpack.c.l.b16 %v1057
  %v1082 = vunpack.c.h.b16 %v1057
  %v1083 = vunpack.c.l.b16 %v1058
  %v1084 = vunpack.c.h.b16 %v1058
  %v1085 = vpack.c.b16 %v1079, %v1077
  %v1086 = vpack.c.b16 %v1080, %v1078
  %v1087 = vpack.c.b16 %v1083, %v1081
  %v1088 = vpack.c.b16 %v1084, %v1082
  %v1092 = vsel %vm51, %v1059, 0
  %v1095 = vsel %vm51, %v1060, 0
  %v1098 = vsel %vm51, %v1061, 0
  %v1101 = vsel %vm51, %v1062, 0
  %v1104 = vsel %vm51, %v1063, 0
  %v1107 = vsel %vm51, %v1064, 0
  %v1110 = vsel %vm51, %v1065, 0
  %v1113 = vsel %vm51, %v1066, 0
  %v1116 = vsel %vm51, %v1067, 0
  %v1119 = vsel %vm51, %v1068, 0
  %v1122 = vsel %vm51, %v1069, 0
  %v1125 = vsel %vm51, %v1070, 0
  %v1128 = vsel %vm51, %v1071, 0
  %v1131 = vsel %vm51, %v1072, 0
  %v1134 = vsel %vm265, %v1087, 0
  %v1137 = vsel %vm265, %v1088, 0
  %1139 = vmatprep.subr.bf16.mxu0 0
  %1140 = vmatpush1.bf16.msra.mxu0 0
  %1141 = vmatprep.subr.bf16.mxu0 0
  %1142 = vmatpush1.bf16.msra.mxu0 0
  %1143 = vmatprep.subr.bf16.mxu0 0
  %1144 = vmatpush1.bf16.msra.mxu0 0
  %1145 = vmatprep.subr.bf16.mxu0 0
  %1146 = vmatpush1.bf16.msra.mxu0 0
  %1147 = vmatprep.subr.bf16.mxu0 0
  %1148 = vmatpush1.bf16.msra.mxu0 0
  %1149 = vmatprep.subr.bf16.mxu0 0
  %1150 = vmatpush1.bf16.msra.mxu0 0
  %1151 = vmatprep.subr.bf16.mxu0 %v1137
  %1152 = vmatpush1.bf16.msra.mxu0 %v1134
  %1153 = vmatprep.subr.bf16.mxu0 %v1086
  %1154 = vmatpush1.bf16.msra.mxu0 %v1085
  %1155 = vmatprep.subr.bf16.mxu0 0
  %1156 = vmatpush2.bf16.msra.mxu0 0
  %1157 = vmatprep.subr.bf16.mxu0 0
  %1158 = vmatpush2.bf16.msra.mxu0 0
  %1159 = vmatprep.subr.bf16.mxu0 0
  %1160 = vmatpush2.bf16.msra.mxu0 0
  %1161 = vmatprep.subr.bf16.mxu0 0
  %1162 = vmatpush2.bf16.msra.mxu0 0
  %1163 = vmatprep.subr.bf16.mxu0 0
  %1164 = vmatpush2.bf16.msra.mxu0 0
  %1165 = vmatprep.subr.bf16.mxu0 0
  %1166 = vmatpush2.bf16.msra.mxu0 0
  %1167 = vmatprep.subr.bf16.mxu0 0
  %1168 = vmatpush2.bf16.msra.mxu0 0
  %1169 = vmatprep.subr.bf16.mxu0 0
  %1170 = vmatpush2.bf16.msra.mxu0 0
  %1171 = vmatprep.mubr.bf16.mxu0 0
  %1172 = vmatmul.mubr.bf16.gmra.mxu0 %v1092
  %v1173 = vpop.f32.mrf.mxu0
  %v1174 = vadd.f32 0.0, %v1173
  %v1175 = vpop.f32.mrf.mxu0
  %v1176 = vadd.f32 0.0, %v1175
  %v1177 = vpop.f32.mrf.mxu0
  %v1178 = vadd.f32 0.0, %v1177
  %v1179 = vpop.f32.mrf.mxu0
  %v1180 = vadd.f32 0.0, %v1179
  %1181 = vmatprep.mubr.bf16.mxu0 0
  %1182 = vmatmul.mubr.bf16.gmra.mxu0 %v1095
  %v1183 = vpop.f32.mrf.mxu0
  %v1184 = vadd.f32 0.0, %v1183
  %v1185 = vpop.f32.mrf.mxu0
  %v1186 = vadd.f32 0.0, %v1185
  %v1187 = vpop.f32.mrf.mxu0
  %v1188 = vadd.f32 0.0, %v1187
  %v1189 = vpop.f32.mrf.mxu0
  %v1190 = vadd.f32 0.0, %v1189
  %1191 = vmatprep.mubr.bf16.mxu0 0
  %1192 = vmatmul.mubr.bf16.gmra.mxu0 %v1098
  %v1193 = vpop.f32.mrf.mxu0
  %v1194 = vadd.f32 0.0, %v1193
  %v1195 = vpop.f32.mrf.mxu0
  %v1196 = vadd.f32 0.0, %v1195
  %v1197 = vpop.f32.mrf.mxu0
  %v1198 = vadd.f32 0.0, %v1197
  %v1199 = vpop.f32.mrf.mxu0
  %v1200 = vadd.f32 0.0, %v1199
  %1201 = vmatprep.mubr.bf16.mxu0 0
  %1202 = vmatmul.mubr.bf16.gmra.mxu0 %v1101
  %v1203 = vpop.f32.mrf.mxu0
  %v1204 = vadd.f32 0.0, %v1203
  %v1205 = vpop.f32.mrf.mxu0
  %v1206 = vadd.f32 0.0, %v1205
  %v1207 = vpop.f32.mrf.mxu0
  %v1208 = vadd.f32 0.0, %v1207
  %v1209 = vpop.f32.mrf.mxu0
  %v1210 = vadd.f32 0.0, %v1209
  %1211 = vmatprep.mubr.bf16.mxu0 0
  %1212 = vmatmul.mubr.bf16.gmra.mxu0 %v1104
  %v1213 = vpop.f32.mrf.mxu0
  %v1214 = vadd.f32 0.0, %v1213
  %v1215 = vpop.f32.mrf.mxu0
  %v1216 = vadd.f32 0.0, %v1215
  %v1217 = vpop.f32.mrf.mxu0
  %v1218 = vadd.f32 0.0, %v1217
  %v1219 = vpop.f32.mrf.mxu0
  %v1220 = vadd.f32 0.0, %v1219
  %1221 = vmatprep.mubr.bf16.mxu0 0
  %1222 = vmatmul.mubr.bf16.gmra.mxu0 %v1107
  %v1223 = vpop.f32.mrf.mxu0
  %v1224 = vadd.f32 0.0, %v1223
  %v1225 = vpop.f32.mrf.mxu0
  %v1226 = vadd.f32 0.0, %v1225
  %v1227 = vpop.f32.mrf.mxu0
  %v1228 = vadd.f32 0.0, %v1227
  %v1229 = vpop.f32.mrf.mxu0
  %v1230 = vadd.f32 0.0, %v1229
  %1231 = vmatprep.mubr.bf16.mxu0 0
  %1232 = vmatmul.mubr.bf16.gmra.mxu0 %v1110
  %v1233 = vpop.f32.mrf.mxu0
  %v1234 = vadd.f32 0.0, %v1233
  %v1235 = vpop.f32.mrf.mxu0
  %v1236 = vadd.f32 0.0, %v1235
  %v1237 = vpop.f32.mrf.mxu0
  %v1238 = vadd.f32 0.0, %v1237
  %v1239 = vpop.f32.mrf.mxu0
  %v1240 = vadd.f32 0.0, %v1239
  %1241 = vmatprep.mubr.bf16.mxu0 0
  %1242 = vmatmul.mubr.bf16.gmra.mxu0 %v1113
  %v1243 = vpop.f32.mrf.mxu0
  %v1244 = vadd.f32 0.0, %v1243
  %v1245 = vpop.f32.mrf.mxu0
  %v1246 = vadd.f32 0.0, %v1245
  %v1247 = vpop.f32.mrf.mxu0
  %v1248 = vadd.f32 0.0, %v1247
  %v1249 = vpop.f32.mrf.mxu0
  %v1250 = vadd.f32 0.0, %v1249
  %1251 = vmatprep.mubr.bf16.mxu0 0
  %1252 = vmatmul.mubr.bf16.gmra.mxu0 %v1116
  %v1253 = vpop.f32.mrf.mxu0
  %v1254 = vadd.f32 0.0, %v1253
  %v1255 = vpop.f32.mrf.mxu0
  %v1256 = vadd.f32 0.0, %v1255
  %v1257 = vpop.f32.mrf.mxu0
  %v1258 = vadd.f32 0.0, %v1257
  %v1259 = vpop.f32.mrf.mxu0
  %v1260 = vadd.f32 0.0, %v1259
  %1261 = vmatprep.mubr.bf16.mxu0 0
  %1262 = vmatmul.mubr.bf16.gmra.mxu0 %v1119
  %v1263 = vpop.f32.mrf.mxu0
  %v1264 = vadd.f32 0.0, %v1263
  %v1265 = vpop.f32.mrf.mxu0
  %v1266 = vadd.f32 0.0, %v1265
  %v1267 = vpop.f32.mrf.mxu0
  %v1268 = vadd.f32 0.0, %v1267
  %v1269 = vpop.f32.mrf.mxu0
  %v1270 = vadd.f32 0.0, %v1269
  %1271 = vmatprep.mubr.bf16.mxu0 0
  %1272 = vmatmul.mubr.bf16.gmra.mxu0 %v1122
  %v1273 = vpop.f32.mrf.mxu0
  %v1274 = vadd.f32 0.0, %v1273
  %v1275 = vpop.f32.mrf.mxu0
  %v1276 = vadd.f32 0.0, %v1275
  %v1277 = vpop.f32.mrf.mxu0
  %v1278 = vadd.f32 0.0, %v1277
  %v1279 = vpop.f32.mrf.mxu0
  %v1280 = vadd.f32 0.0, %v1279
  %1281 = vmatprep.mubr.bf16.mxu0 0
  %1282 = vmatmul.mubr.bf16.gmra.mxu0 %v1125
  %v1283 = vpop.f32.mrf.mxu0
  %v1284 = vadd.f32 0.0, %v1283
  %v1285 = vpop.f32.mrf.mxu0
  %v1286 = vadd.f32 0.0, %v1285
  %v1287 = vpop.f32.mrf.mxu0
  %v1288 = vadd.f32 0.0, %v1287
  %v1289 = vpop.f32.mrf.mxu0
  %v1290 = vadd.f32 0.0, %v1289
  %1291 = vmatprep.mubr.bf16.mxu0 0
  %1292 = vmatmul.mubr.bf16.gmra.mxu0 %v1128
  %v1293 = vpop.f32.mrf.mxu0
  %v1294 = vadd.f32 0.0, %v1293
  %v1295 = vpop.f32.mrf.mxu0
  %v1296 = vadd.f32 0.0, %v1295
  %v1297 = vpop.f32.mrf.mxu0
  %v1298 = vadd.f32 0.0, %v1297
  %v1299 = vpop.f32.mrf.mxu0
  %v1300 = vadd.f32 0.0, %v1299
  %1301 = vmatprep.mubr.bf16.mxu0 0
  %1302 = vmatmul.mubr.bf16.gmra.mxu0 %v1131
  %v1303 = vpop.f32.mrf.mxu0
  %v1304 = vadd.f32 0.0, %v1303
  %v1305 = vpop.f32.mrf.mxu0
  %v1306 = vadd.f32 0.0, %v1305
  %v1307 = vpop.f32.mrf.mxu0
  %v1308 = vadd.f32 0.0, %v1307
  %v1309 = vpop.f32.mrf.mxu0
  %v1310 = vadd.f32 0.0, %v1309
  %1311 = vdwg.mxu0
  %v1312 = vadd.f32 %v970, %v1174
  %v1313 = vadd.f32 %v971, %v1176
  %v1314 = vadd.f32 %v972, %v1178
  %v1315 = vadd.f32 %v973, %v1180
  %v1316 = vadd.f32 %v974, %v1184
  %v1317 = vadd.f32 %v975, %v1186
  %v1318 = vadd.f32 %v976, %v1188
  %v1319 = vadd.f32 %v977, %v1190
  %v1320 = vadd.f32 %v978, %v1194
  %v1321 = vadd.f32 %v979, %v1196
  %v1322 = vadd.f32 %v980, %v1198
  %v1323 = vadd.f32 %v981, %v1200
  %v1324 = vadd.f32 %v982, %v1204
  %v1325 = vadd.f32 %v983, %v1206
  %v1326 = vadd.f32 %v984, %v1208
  %v1327 = vadd.f32 %v985, %v1210
  %v1328 = vadd.f32 %v986, %v1214
  %v1329 = vadd.f32 %v987, %v1216
  %v1330 = vadd.f32 %v988, %v1218
  %v1331 = vadd.f32 %v989, %v1220
  %v1332 = vadd.f32 %v990, %v1224
  %v1333 = vadd.f32 %v991, %v1226
  %v1334 = vadd.f32 %v992, %v1228
  %v1335 = vadd.f32 %v993, %v1230
  %v1336 = vadd.f32 %v994, %v1234
  %v1337 = vadd.f32 %v995, %v1236
  %v1338 = vadd.f32 %v996, %v1238
  %v1339 = vadd.f32 %v997, %v1240
  %v1340 = vadd.f32 %v998, %v1244
  %v1341 = vadd.f32 %v999, %v1246
  %v1342 = vadd.f32 %v1000, %v1248
  %v1343 = vadd.f32 %v1001, %v1250
  %v1344 = vadd.f32 %v1002, %v1254
  %v1345 = vadd.f32 %v1003, %v1256
  %v1346 = vadd.f32 %v1004, %v1258
  %v1347 = vadd.f32 %v1005, %v1260
  %v1348 = vadd.f32 %v1006, %v1264
  %v1349 = vadd.f32 %v1007, %v1266
  %v1350 = vadd.f32 %v1008, %v1268
  %v1351 = vadd.f32 %v1009, %v1270
  %v1352 = vadd.f32 %v1010, %v1274
  %v1353 = vadd.f32 %v1011, %v1276
  %v1354 = vadd.f32 %v1012, %v1278
  %v1355 = vadd.f32 %v1013, %v1280
  %v1356 = vadd.f32 %v1014, %v1284
  %v1357 = vadd.f32 %v1015, %v1286
  %v1358 = vadd.f32 %v1016, %v1288
  %v1359 = vadd.f32 %v1017, %v1290
  %v1360 = vadd.f32 %v1018, %v1294
  %v1361 = vadd.f32 %v1019, %v1296
  %v1362 = vadd.f32 %v1020, %v1298
  %v1363 = vadd.f32 %v1021, %v1300
  %v1364 = vadd.f32 %v1022, %v1304
  %v1365 = vadd.f32 %v1023, %v1306
  %v1366 = vadd.f32 %v1024, %v1308
  %v1367 = vadd.f32 %v1025, %v1310
  %v1368 = vld [vmem:[#allocation2 + $0x20] sm:$0xff]
  %v1369 = vld [vmem:[#allocation2 + $0x28] sm:$0xff]
  %v1370 = vld [vmem:[#allocation2 + $0x30] sm:$0xff]
  %v1371 = vld [vmem:[#allocation2 + $0x38] sm:$0xff]
  %v1372 = vld [vmem:[#allocation2 + $0x40] sm:$0xff]
  %v1373 = vld [vmem:[#allocation2 + $0x48] sm:$0xff]
  %v1374 = vld [vmem:[#allocation2 + $0x50] sm:$0xff]
  %v1375 = vld [vmem:[#allocation2 + $0x58] sm:$0xff]
  %v1376 = vld [vmem:[#allocation2 + $0x60] sm:$0xff]
  %v1377 = vld [vmem:[#allocation2 + $0x68] sm:$0xff]
  %v1378 = vld [vmem:[#allocation2 + $0x70] sm:$0xff]
  %v1379 = vld [vmem:[#allocation2 + $0x78] sm:$0xff]
  %v1380 = vld [vmem:[#allocation2 + $0x80] sm:$0xff]
  %v1381 = vld [vmem:[#allocation2 + $0x88] sm:$0xff]
  %v1382 = vld [vmem:[#allocation2 + $0x90] sm:$0xff]
  %v1383 = vld [vmem:[#allocation2 + $0x98] sm:$0xff]
  %v1384 = vld [vmem:[#allocation2 + $0xa0] sm:$0xff]
  %v1385 = vld [vmem:[#allocation2 + $0xa8] sm:$0xff]
  %v1386 = vld [vmem:[#allocation2 + $0xb0] sm:$0xff]
  %v1387 = vld [vmem:[#allocation2 + $0xb8] sm:$0xff]
  %v1388 = vld [vmem:[#allocation2 + $0xc0] sm:$0xff]
  %v1389 = vld [vmem:[#allocation2 + $0xc8] sm:$0xff]
  %v1390 = vld [vmem:[#allocation2 + $0xd0] sm:$0xff]
  %v1391 = vld [vmem:[#allocation2 + $0xd8] sm:$0xff]
  %v1392 = vld [vmem:[#allocation2 + $0xe0] sm:$0xff]
  %v1393 = vld [vmem:[#allocation2 + $0xe8] sm:$0xff]
  %v1394 = vld [vmem:[#allocation2 + $0xf0] sm:$0xff]
  %v1395 = vld [vmem:[#allocation2 + $0xf8] sm:$0xff]
  %s1396 = scalar_lea.vmem %s1, 128
  %v1397 = vld [vmem:[%s1396] sm:$0xff]
  %v1398 = vld [vmem:[%s1396 + $0x8] sm:$0xff]
  %v1399 = vld [vmem:[%s1396 + $0x10] sm:$0xff]
  %v1400 = vld [vmem:[%s1396 + $0x18] sm:$0x33]
  %v1401 = vpack.c.bf16 %v1369, %v1368
  %v1402 = vpack.c.bf16 %v1371, %v1370
  %v1403 = vpack.c.bf16 %v1373, %v1372
  %v1404 = vpack.c.bf16 %v1375, %v1374
  %v1405 = vpack.c.bf16 %v1377, %v1376
  %v1406 = vpack.c.bf16 %v1379, %v1378
  %v1407 = vpack.c.bf16 %v1381, %v1380
  %v1408 = vpack.c.bf16 %v1383, %v1382
  %v1409 = vpack.c.bf16 %v1385, %v1384
  %v1410 = vpack.c.bf16 %v1387, %v1386
  %v1411 = vpack.c.bf16 %v1389, %v1388
  %v1412 = vpack.c.bf16 %v1391, %v1390
  %v1413 = vpack.c.bf16 %v1393, %v1392
  %v1414 = vpack.c.bf16 %v1395, %v1394
  %v1419 = vunpack.c.l.b16 %v1397
  %v1420 = vunpack.c.h.b16 %v1397
  %v1421 = vunpack.c.l.b16 %v1398
  %v1422 = vunpack.c.h.b16 %v1398
  %v1423 = vunpack.c.l.b16 %v1399
  %v1424 = vunpack.c.h.b16 %v1399
  %v1425 = vunpack.c.l.b16 %v1400
  %v1426 = vunpack.c.h.b16 %v1400
  %v1427 = vpack.c.b16 %v1421, %v1419
  %v1428 = vpack.c.b16 %v1422, %v1420
  %v1429 = vpack.c.b16 %v1425, %v1423
  %v1430 = vpack.c.b16 %v1426, %v1424
  %v1434 = vsel %vm51, %v1401, 0
  %v1437 = vsel %vm51, %v1402, 0
  %v1440 = vsel %vm51, %v1403, 0
  %v1443 = vsel %vm51, %v1404, 0
  %v1446 = vsel %vm51, %v1405, 0
  %v1449 = vsel %vm51, %v1406, 0
  %v1452 = vsel %vm51, %v1407, 0
  %v1455 = vsel %vm51, %v1408, 0
  %v1458 = vsel %vm51, %v1409, 0
  %v1461 = vsel %vm51, %v1410, 0
  %v1464 = vsel %vm51, %v1411, 0
  %v1467 = vsel %vm51, %v1412, 0
  %v1470 = vsel %vm51, %v1413, 0
  %v1473 = vsel %vm51, %v1414, 0
  %v1476 = vsel %vm265, %v1429, 0
  %v1479 = vsel %vm265, %v1430, 0
  %1481 = vmatprep.subr.bf16.mxu0 0
  %1482 = vmatpush1.bf16.msra.mxu0 0
  %1483 = vmatprep.subr.bf16.mxu0 0
  %1484 = vmatpush1.bf16.msra.mxu0 0
  %1485 = vmatprep.subr.bf16.mxu0 0
  %1486 = vmatpush1.bf16.msra.mxu0 0
  %1487 = vmatprep.subr.bf16.mxu0 0
  %1488 = vmatpush1.bf16.msra.mxu0 0
  %1489 = vmatprep.subr.bf16.mxu0 0
  %1490 = vmatpush1.bf16.msra.mxu0 0
  %1491 = vmatprep.subr.bf16.mxu0 0
  %1492 = vmatpush1.bf16.msra.mxu0 0
  %1493 = vmatprep.subr.bf16.mxu0 %v1479
  %1494 = vmatpush1.bf16.msra.mxu0 %v1476
  %1495 = vmatprep.subr.bf16.mxu0 %v1428
  %1496 = vmatpush1.bf16.msra.mxu0 %v1427
  %1497 = vmatprep.subr.bf16.mxu0 0
  %1498 = vmatpush2.bf16.msra.mxu0 0
  %1499 = vmatprep.subr.bf16.mxu0 0
  %1500 = vmatpush2.bf16.msra.mxu0 0
  %1501 = vmatprep.subr.bf16.mxu0 0
  %1502 = vmatpush2.bf16.msra.mxu0 0
  %1503 = vmatprep.subr.bf16.mxu0 0
  %1504 = vmatpush2.bf16.msra.mxu0 0
  %1505 = vmatprep.subr.bf16.mxu0 0
  %1506 = vmatpush2.bf16.msra.mxu0 0
  %1507 = vmatprep.subr.bf16.mxu0 0
  %1508 = vmatpush2.bf16.msra.mxu0 0
  %1509 = vmatprep.subr.bf16.mxu0 0
  %1510 = vmatpush2.bf16.msra.mxu0 0
  %1511 = vmatprep.subr.bf16.mxu0 0
  %1512 = vmatpush2.bf16.msra.mxu0 0
  %1513 = vmatprep.mubr.bf16.mxu0 0
  %1514 = vmatmul.mubr.bf16.gmra.mxu0 %v1434
  %v1515 = vpop.f32.mrf.mxu0
  %v1516 = vadd.f32 0.0, %v1515
  %v1517 = vpop.f32.mrf.mxu0
  %v1518 = vadd.f32 0.0, %v1517
  %v1519 = vpop.f32.mrf.mxu0
  %v1520 = vadd.f32 0.0, %v1519
  %v1521 = vpop.f32.mrf.mxu0
  %v1522 = vadd.f32 0.0, %v1521
  %1523 = vmatprep.mubr.bf16.mxu0 0
  %1524 = vmatmul.mubr.bf16.gmra.mxu0 %v1437
  %v1525 = vpop.f32.mrf.mxu0
  %v1526 = vadd.f32 0.0, %v1525
  %v1527 = vpop.f32.mrf.mxu0
  %v1528 = vadd.f32 0.0, %v1527
  %v1529 = vpop.f32.mrf.mxu0
  %v1530 = vadd.f32 0.0, %v1529
  %v1531 = vpop.f32.mrf.mxu0
  %v1532 = vadd.f32 0.0, %v1531
  %1533 = vmatprep.mubr.bf16.mxu0 0
  %1534 = vmatmul.mubr.bf16.gmra.mxu0 %v1440
  %v1535 = vpop.f32.mrf.mxu0
  %v1536 = vadd.f32 0.0, %v1535
  %v1537 = vpop.f32.mrf.mxu0
  %v1538 = vadd.f32 0.0, %v1537
  %v1539 = vpop.f32.mrf.mxu0
  %v1540 = vadd.f32 0.0, %v1539
  %v1541 = vpop.f32.mrf.mxu0
  %v1542 = vadd.f32 0.0, %v1541
  %1543 = vmatprep.mubr.bf16.mxu0 0
  %1544 = vmatmul.mubr.bf16.gmra.mxu0 %v1443
  %v1545 = vpop.f32.mrf.mxu0
  %v1546 = vadd.f32 0.0, %v1545
  %v1547 = vpop.f32.mrf.mxu0
  %v1548 = vadd.f32 0.0, %v1547
  %v1549 = vpop.f32.mrf.mxu0
  %v1550 = vadd.f32 0.0, %v1549
  %v1551 = vpop.f32.mrf.mxu0
  %v1552 = vadd.f32 0.0, %v1551
  %1553 = vmatprep.mubr.bf16.mxu0 0
  %1554 = vmatmul.mubr.bf16.gmra.mxu0 %v1446
  %v1555 = vpop.f32.mrf.mxu0
  %v1556 = vadd.f32 0.0, %v1555
  %v1557 = vpop.f32.mrf.mxu0
  %v1558 = vadd.f32 0.0, %v1557
  %v1559 = vpop.f32.mrf.mxu0
  %v1560 = vadd.f32 0.0, %v1559
  %v1561 = vpop.f32.mrf.mxu0
  %v1562 = vadd.f32 0.0, %v1561
  %1563 = vmatprep.mubr.bf16.mxu0 0
  %1564 = vmatmul.mubr.bf16.gmra.mxu0 %v1449
  %v1565 = vpop.f32.mrf.mxu0
  %v1566 = vadd.f32 0.0, %v1565
  %v1567 = vpop.f32.mrf.mxu0
  %v1568 = vadd.f32 0.0, %v1567
  %v1569 = vpop.f32.mrf.mxu0
  %v1570 = vadd.f32 0.0, %v1569
  %v1571 = vpop.f32.mrf.mxu0
  %v1572 = vadd.f32 0.0, %v1571
  %1573 = vmatprep.mubr.bf16.mxu0 0
  %1574 = vmatmul.mubr.bf16.gmra.mxu0 %v1452
  %v1575 = vpop.f32.mrf.mxu0
  %v1576 = vadd.f32 0.0, %v1575
  %v1577 = vpop.f32.mrf.mxu0
  %v1578 = vadd.f32 0.0, %v1577
  %v1579 = vpop.f32.mrf.mxu0
  %v1580 = vadd.f32 0.0, %v1579
  %v1581 = vpop.f32.mrf.mxu0
  %v1582 = vadd.f32 0.0, %v1581
  %1583 = vmatprep.mubr.bf16.mxu0 0
  %1584 = vmatmul.mubr.bf16.gmra.mxu0 %v1455
  %v1585 = vpop.f32.mrf.mxu0
  %v1586 = vadd.f32 0.0, %v1585
  %v1587 = vpop.f32.mrf.mxu0
  %v1588 = vadd.f32 0.0, %v1587
  %v1589 = vpop.f32.mrf.mxu0
  %v1590 = vadd.f32 0.0, %v1589
  %v1591 = vpop.f32.mrf.mxu0
  %v1592 = vadd.f32 0.0, %v1591
  %1593 = vmatprep.mubr.bf16.mxu0 0
  %1594 = vmatmul.mubr.bf16.gmra.mxu0 %v1458
  %v1595 = vpop.f32.mrf.mxu0
  %v1596 = vadd.f32 0.0, %v1595
  %v1597 = vpop.f32.mrf.mxu0
  %v1598 = vadd.f32 0.0, %v1597
  %v1599 = vpop.f32.mrf.mxu0
  %v1600 = vadd.f32 0.0, %v1599
  %v1601 = vpop.f32.mrf.mxu0
  %v1602 = vadd.f32 0.0, %v1601
  %1603 = vmatprep.mubr.bf16.mxu0 0
  %1604 = vmatmul.mubr.bf16.gmra.mxu0 %v1461
  %v1605 = vpop.f32.mrf.mxu0
  %v1606 = vadd.f32 0.0, %v1605
  %v1607 = vpop.f32.mrf.mxu0
  %v1608 = vadd.f32 0.0, %v1607
  %v1609 = vpop.f32.mrf.mxu0
  %v1610 = vadd.f32 0.0, %v1609
  %v1611 = vpop.f32.mrf.mxu0
  %v1612 = vadd.f32 0.0, %v1611
  %1613 = vmatprep.mubr.bf16.mxu0 0
  %1614 = vmatmul.mubr.bf16.gmra.mxu0 %v1464
  %v1615 = vpop.f32.mrf.mxu0
  %v1616 = vadd.f32 0.0, %v1615
  %v1617 = vpop.f32.mrf.mxu0
  %v1618 = vadd.f32 0.0, %v1617
  %v1619 = vpop.f32.mrf.mxu0
  %v1620 = vadd.f32 0.0, %v1619
  %v1621 = vpop.f32.mrf.mxu0
  %v1622 = vadd.f32 0.0, %v1621
  %1623 = vmatprep.mubr.bf16.mxu0 0
  %1624 = vmatmul.mubr.bf16.gmra.mxu0 %v1467
  %v1625 = vpop.f32.mrf.mxu0
  %v1626 = vadd.f32 0.0, %v1625
  %v1627 = vpop.f32.mrf.mxu0
  %v1628 = vadd.f32 0.0, %v1627
  %v1629 = vpop.f32.mrf.mxu0
  %v1630 = vadd.f32 0.0, %v1629
  %v1631 = vpop.f32.mrf.mxu0
  %v1632 = vadd.f32 0.0, %v1631
  %1633 = vmatprep.mubr.bf16.mxu0 0
  %1634 = vmatmul.mubr.bf16.gmra.mxu0 %v1470
  %v1635 = vpop.f32.mrf.mxu0
  %v1636 = vadd.f32 0.0, %v1635
  %v1637 = vpop.f32.mrf.mxu0
  %v1638 = vadd.f32 0.0, %v1637
  %v1639 = vpop.f32.mrf.mxu0
  %v1640 = vadd.f32 0.0, %v1639
  %v1641 = vpop.f32.mrf.mxu0
  %v1642 = vadd.f32 0.0, %v1641
  %1643 = vmatprep.mubr.bf16.mxu0 0
  %1644 = vmatmul.mubr.bf16.gmra.mxu0 %v1473
  %v1645 = vpop.f32.mrf.mxu0
  %v1646 = vadd.f32 0.0, %v1645
  %v1647 = vpop.f32.mrf.mxu0
  %v1648 = vadd.f32 0.0, %v1647
  %v1649 = vpop.f32.mrf.mxu0
  %v1650 = vadd.f32 0.0, %v1649
  %v1651 = vpop.f32.mrf.mxu0
  %v1652 = vadd.f32 0.0, %v1651
  %1653 = vdwg.mxu0
  %v1654 = vadd.f32 %v1312, %v1516
  %v1655 = vadd.f32 %v1313, %v1518
  %v1656 = vadd.f32 %v1314, %v1520
  %v1657 = vadd.f32 %v1315, %v1522
  %v1658 = vadd.f32 %v1316, %v1526
  %v1659 = vadd.f32 %v1317, %v1528
  %v1660 = vadd.f32 %v1318, %v1530
  %v1661 = vadd.f32 %v1319, %v1532
  %v1662 = vadd.f32 %v1320, %v1536
  %v1663 = vadd.f32 %v1321, %v1538
  %v1664 = vadd.f32 %v1322, %v1540
  %v1665 = vadd.f32 %v1323, %v1542
  %v1666 = vadd.f32 %v1324, %v1546
  %v1667 = vadd.f32 %v1325, %v1548
  %v1668 = vadd.f32 %v1326, %v1550
  %v1669 = vadd.f32 %v1327, %v1552
  %v1670 = vadd.f32 %v1328, %v1556
  %v1671 = vadd.f32 %v1329, %v1558
  %v1672 = vadd.f32 %v1330, %v1560
  %v1673 = vadd.f32 %v1331, %v1562
  %v1674 = vadd.f32 %v1332, %v1566
  %v1675 = vadd.f32 %v1333, %v1568
  %v1676 = vadd.f32 %v1334, %v1570
  %v1677 = vadd.f32 %v1335, %v1572
  %v1678 = vadd.f32 %v1336, %v1576
  %v1679 = vadd.f32 %v1337, %v1578
  %v1680 = vadd.f32 %v1338, %v1580
  %v1681 = vadd.f32 %v1339, %v1582
  %v1682 = vadd.f32 %v1340, %v1586
  %v1683 = vadd.f32 %v1341, %v1588
  %v1684 = vadd.f32 %v1342, %v1590
  %v1685 = vadd.f32 %v1343, %v1592
  %v1686 = vadd.f32 %v1344, %v1596
  %v1687 = vadd.f32 %v1345, %v1598
  %v1688 = vadd.f32 %v1346, %v1600
  %v1689 = vadd.f32 %v1347, %v1602
  %v1690 = vadd.f32 %v1348, %v1606
  %v1691 = vadd.f32 %v1349, %v1608
  %v1692 = vadd.f32 %v1350, %v1610
  %v1693 = vadd.f32 %v1351, %v1612
  %v1694 = vadd.f32 %v1352, %v1616
  %v1695 = vadd.f32 %v1353, %v1618
  %v1696 = vadd.f32 %v1354, %v1620
  %v1697 = vadd.f32 %v1355, %v1622
  %v1698 = vadd.f32 %v1356, %v1626
  %v1699 = vadd.f32 %v1357, %v1628
  %v1700 = vadd.f32 %v1358, %v1630
  %v1701 = vadd.f32 %v1359, %v1632
  %v1702 = vadd.f32 %v1360, %v1636
  %v1703 = vadd.f32 %v1361, %v1638
  %v1704 = vadd.f32 %v1362, %v1640
  %v1705 = vadd.f32 %v1363, %v1642
  %v1706 = vadd.f32 %v1364, %v1646
  %v1707 = vadd.f32 %v1365, %v1648
  %v1708 = vadd.f32 %v1366, %v1650
  %v1709 = vadd.f32 %v1367, %v1652
  %v1710 = vld [vmem:[%s2] sm:$0x3]
  %v1712 = vlaneseq
  %v1713 = vshrl.u32 %v1712, 7
  %v1714 = vsub.s32 0, %v1713
  %v1715 = vrot.slane %v1710, %v1714
  %v1716 = vlaneseq
  %v1717 = vshrl.u32 %v1716, 7
  %v1718 = vsub.s32 1, %v1717
  %v1719 = vrot.slane %v1710, %v1718
  %v1722 = vadd.f32 %v1654, %v1715
  %v1723 = vadd.f32 %v1655, %v1719
  %v1724 = vadd.f32 %v1656, %v1715
  %v1725 = vadd.f32 %v1657, %v1719
  %v1726 = vadd.f32 %v1658, %v1715
  %v1727 = vadd.f32 %v1659, %v1719
  %v1728 = vadd.f32 %v1660, %v1715
  %v1729 = vadd.f32 %v1661, %v1719
  %v1730 = vadd.f32 %v1662, %v1715
  %v1731 = vadd.f32 %v1663, %v1719
  %v1732 = vadd.f32 %v1664, %v1715
  %v1733 = vadd.f32 %v1665, %v1719
  %v1734 = vadd.f32 %v1666, %v1715
  %v1735 = vadd.f32 %v1667, %v1719
  %v1736 = vadd.f32 %v1668, %v1715
  %v1737 = vadd.f32 %v1669, %v1719
  %v1738 = vadd.f32 %v1670, %v1715
  %v1739 = vadd.f32 %v1671, %v1719
  %v1740 = vadd.f32 %v1672, %v1715
  %v1741 = vadd.f32 %v1673, %v1719
  %v1742 = vadd.f32 %v1674, %v1715
  %v1743 = vadd.f32 %v1675, %v1719
  %v1744 = vadd.f32 %v1676, %v1715
  %v1745 = vadd.f32 %v1677, %v1719
  %v1746 = vadd.f32 %v1678, %v1715
  %v1747 = vadd.f32 %v1679, %v1719
  %v1748 = vadd.f32 %v1680, %v1715
  %v1749 = vadd.f32 %v1681, %v1719
  %v1750 = vadd.f32 %v1682, %v1715
  %v1751 = vadd.f32 %v1683, %v1719
  %v1752 = vadd.f32 %v1684, %v1715
  %v1753 = vadd.f32 %v1685, %v1719
  %v1754 = vadd.f32 %v1686, %v1715
  %v1755 = vadd.f32 %v1687, %v1719
  %v1756 = vadd.f32 %v1688, %v1715
  %v1757 = vadd.f32 %v1689, %v1719
  %v1758 = vadd.f32 %v1690, %v1715
  %v1759 = vadd.f32 %v1691, %v1719
  %v1760 = vadd.f32 %v1692, %v1715
  %v1761 = vadd.f32 %v1693, %v1719
  %v1762 = vadd.f32 %v1694, %v1715
  %v1763 = vadd.f32 %v1695, %v1719
  %v1764 = vadd.f32 %v1696, %v1715
  %v1765 = vadd.f32 %v1697, %v1719
  %v1766 = vadd.f32 %v1698, %v1715
  %v1767 = vadd.f32 %v1699, %v1719
  %v1768 = vadd.f32 %v1700, %v1715
  %v1769 = vadd.f32 %v1701, %v1719
  %v1770 = vadd.f32 %v1702, %v1715
  %v1771 = vadd.f32 %v1703, %v1719
  %v1772 = vadd.f32 %v1704, %v1715
  %v1773 = vadd.f32 %v1705, %v1719
  %v1774 = vadd.f32 %v1706, %v1715
  %v1775 = vadd.f32 %v1707, %v1719
  %v1776 = vadd.f32 %v1708, %v1715
  %v1777 = vadd.f32 %v1709, %v1719
  %v1778 = vmax.f32 %v1722, 0.0
  %v1779 = vmax.f32 %v1723, 0.0
  %v1780 = vmax.f32 %v1724, 0.0
  %v1781 = vmax.f32 %v1725, 0.0
  %v1782 = vmax.f32 %v1726, 0.0
  %v1783 = vmax.f32 %v1727, 0.0
  %v1784 = vmax.f32 %v1728, 0.0
  %v1785 = vmax.f32 %v1729, 0.0
  %v1786 = vmax.f32 %v1730, 0.0
  %v1787 = vmax.f32 %v1731, 0.0
  %v1788 = vmax.f32 %v1732, 0.0
  %v1789 = vmax.f32 %v1733, 0.0
  %v1790 = vmax.f32 %v1734, 0.0
  %v1791 = vmax.f32 %v1735, 0.0
  %v1792 = vmax.f32 %v1736, 0.0
  %v1793 = vmax.f32 %v1737, 0.0
  %v1794 = vmax.f32 %v1738, 0.0
  %v1795 = vmax.f32 %v1739, 0.0
  %v1796 = vmax.f32 %v1740, 0.0
  %v1797 = vmax.f32 %v1741, 0.0
  %v1798 = vmax.f32 %v1742, 0.0
  %v1799 = vmax.f32 %v1743, 0.0
  %v1800 = vmax.f32 %v1744, 0.0
  %v1801 = vmax.f32 %v1745, 0.0
  %v1802 = vmax.f32 %v1746, 0.0
  %v1803 = vmax.f32 %v1747, 0.0
  %v1804 = vmax.f32 %v1748, 0.0
  %v1805 = vmax.f32 %v1749, 0.0
  %v1806 = vmax.f32 %v1750, 0.0
  %v1807 = vmax.f32 %v1751, 0.0
  %v1808 = vmax.f32 %v1752, 0.0
  %v1809 = vmax.f32 %v1753, 0.0
  %v1810 = vmax.f32 %v1754, 0.0
  %v1811 = vmax.f32 %v1755, 0.0
  %v1812 = vmax.f32 %v1756, 0.0
  %v1813 = vmax.f32 %v1757, 0.0
  %v1814 = vmax.f32 %v1758, 0.0
  %v1815 = vmax.f32 %v1759, 0.0
  %v1816 = vmax.f32 %v1760, 0.0
  %v1817 = vmax.f32 %v1761, 0.0
  %v1818 = vmax.f32 %v1762, 0.0
  %v1819 = vmax.f32 %v1763, 0.0
  %v1820 = vmax.f32 %v1764, 0.0
  %v1821 = vmax.f32 %v1765, 0.0
  %v1822 = vmax.f32 %v1766, 0.0
  %v1823 = vmax.f32 %v1767, 0.0
  %v1824 = vmax.f32 %v1768, 0.0
  %v1825 = vmax.f32 %v1769, 0.0
  %v1826 = vmax.f32 %v1770, 0.0
  %v1827 = vmax.f32 %v1771, 0.0
  %v1828 = vmax.f32 %v1772, 0.0
  %v1829 = vmax.f32 %v1773, 0.0
  %v1830 = vmax.f32 %v1774, 0.0
  %v1831 = vmax.f32 %v1775, 0.0
  %v1832 = vmax.f32 %v1776, 0.0
  %v1833 = vmax.f32 %v1777, 0.0
  %v1834 = vld [vmem:[%s3] sm:$0xf]
  %v1835 = vld [vmem:[%s3 + $0x4] sm:$0xf]
  %v1836 = vld [vmem:[%s3 + $0x8] sm:$0xf]
  %v1837 = vld [vmem:[%s3 + $0xc] sm:$0xf]
  %v1838 = vld [vmem:[%s3 + $0x10] sm:$0xf]
  %v1839 = vld [vmem:[%s3 + $0x14] sm:$0xf]
  %v1840 = vld [vmem:[%s3 + $0x18] sm:$0xf]
  %v1841 = vld [vmem:[%s3 + $0x1c] sm:$0xf]
  %v1842 = vld [vmem:[%s3 + $0x20] sm:$0xf]
  %v1843 = vld [vmem:[%s3 + $0x24] sm:$0xf]
  %v1844 = vld [vmem:[%s3 + $0x28] sm:$0xf]
  %v1845 = vld [vmem:[%s3 + $0x2c] sm:$0xf]
  %v1846 = vld [vmem:[%s3 + $0x30] sm:$0xf]
  %v1847 = vld [vmem:[%s3 + $0x34] sm:$0xf]
  %v1848 = vld [vmem:[%s3 + $0x38] sm:$0xf]
  %v1849 = vld [vmem:[%s3 + $0x3c] sm:$0xf]
  %v1850 = vld [vmem:[%s3 + $0x40] sm:$0xf]
  %v1851 = vld [vmem:[%s3 + $0x44] sm:$0xf]
  %v1852 = vld [vmem:[%s3 + $0x48] sm:$0xf]
  %v1853 = vld [vmem:[%s3 + $0x4c] sm:$0xf]
  %v1854 = vld [vmem:[%s3 + $0x50] sm:$0xf]
  %v1855 = vpack.c.bf16 %v1780, %v1778
  %v1856 = vpack.c.bf16 %v1781, %v1779
  %v1857 = vpack.c.bf16 %v1784, %v1782
  %v1858 = vpack.c.bf16 %v1785, %v1783
  %v1859 = vpack.c.bf16 %v1788, %v1786
  %v1860 = vpack.c.bf16 %v1789, %v1787
  %v1861 = vpack.c.bf16 %v1792, %v1790
  %v1862 = vpack.c.bf16 %v1793, %v1791
  %v1863 = vpack.c.bf16 %v1796, %v1794
  %v1864 = vpack.c.bf16 %v1797, %v1795
  %v1865 = vpack.c.bf16 %v1800, %v1798
  %v1866 = vpack.c.bf16 %v1801, %v1799
  %v1867 = vpack.c.bf16 %v1804, %v1802
  %v1868 = vpack.c.bf16 %v1805, %v1803
  %v1869 = vpack.c.bf16 %v1808, %v1806
  %v1870 = vpack.c.bf16 %v1809, %v1807
  %v1871 = vpack.c.bf16 %v1812, %v1810
  %v1872 = vpack.c.bf16 %v1813, %v1811
  %v1873 = vpack.c.bf16 %v1816, %v1814
  %v1874 = vpack.c.bf16 %v1817, %v1815
  %v1875 = vpack.c.bf16 %v1820, %v1818
  %v1876 = vpack.c.bf16 %v1821, %v1819
  %v1877 = vpack.c.bf16 %v1824, %v1822
  %v1878 = vpack.c.bf16 %v1825, %v1823
  %v1879 = vpack.c.bf16 %v1828, %v1826
  %v1880 = vpack.c.bf16 %v1829, %v1827
  %v1881 = vpack.c.bf16 %v1832, %v1830
  %v1882 = vpack.c.bf16 %v1833, %v1831
  %v1904 = vunpack.c.l.b16 %v1834
  %v1905 = vunpack.c.l.b16 %v1835
  %v1906 = vunpack.c.l.b16 %v1836
  %v1907 = vunpack.c.l.b16 %v1837
  %v1908 = vunpack.c.l.b16 %v1838
  %v1909 = vunpack.c.l.b16 %v1839
  %v1910 = vunpack.c.l.b16 %v1840
  %v1911 = vunpack.c.l.b16 %v1841
  %v1912 = vunpack.c.l.b16 %v1842
  %v1913 = vunpack.c.l.b16 %v1843
  %v1914 = vunpack.c.l.b16 %v1844
  %v1915 = vunpack.c.l.b16 %v1845
  %v1916 = vunpack.c.l.b16 %v1846
  %v1917 = vunpack.c.l.b16 %v1847
  %v1918 = vunpack.c.l.b16 %v1848
  %v1919 = vunpack.c.l.b16 %v1849
  %v1920 = vunpack.c.l.b16 %v1850
  %v1921 = vunpack.c.l.b16 %v1851
  %v1922 = vunpack.c.l.b16 %v1852
  %v1923 = vunpack.c.l.b16 %v1853
  %v1924 = vunpack.c.l.b16 %v1854
  %v1925 = vpack.c.b16 %v1905, %v1904
  %v1926 = vpack.c.b16 %v1907, %v1906
  %v1927 = vpack.c.b16 %v1909, %v1908
  %v1928 = vpack.c.b16 %v1911, %v1910
  %v1929 = vpack.c.b16 %v1913, %v1912
  %v1930 = vpack.c.b16 %v1915, %v1914
  %v1931 = vpack.c.b16 %v1917, %v1916
  %v1932 = vpack.c.b16 %v1919, %v1918
  %v1933 = vpack.c.b16 %v1921, %v1920
  %v1934 = vpack.c.b16 %v1923, %v1922
  %v1935 = vpack.c.b16 %v1924, %v1924
  %vm1946 = vcmask 326656
  %v1948 = vsel %vm1946, %v1856, 0
  %v1951 = vsel %vm1946, %v1858, 0
  %v1954 = vsel %vm1946, %v1860, 0
  %v1957 = vsel %vm1946, %v1862, 0
  %v1960 = vsel %vm1946, %v1864, 0
  %v1963 = vsel %vm1946, %v1866, 0
  %v1966 = vsel %vm1946, %v1868, 0
  %v1969 = vsel %vm1946, %v1870, 0
  %v1972 = vsel %vm1946, %v1872, 0
  %v1975 = vsel %vm1946, %v1874, 0
  %v1978 = vsel %vm1946, %v1876, 0
  %v1981 = vsel %vm1946, %v1878, 0
  %v1984 = vsel %vm1946, %v1880, 0
  %v1987 = vsel %vm1946, %v1882, 0
  %vm1989 = vcmask 1043456
  %v1991 = vsel %vm1989, %v1935, 0
  %1993 = vmatprep.subr.bf16.mxu0 0
  %1994 = vmatpush1.bf16.msra.mxu0 %v1932
  %1995 = vmatprep.subr.bf16.mxu0 0
  %1996 = vmatpush1.bf16.msra.mxu0 %v1931
  %1997 = vmatprep.subr.bf16.mxu0 0
  %1998 = vmatpush1.bf16.msra.mxu0 %v1930
  %1999 = vmatprep.subr.bf16.mxu0 0
  %2000 = vmatpush1.bf16.msra.mxu0 %v1929
  %2001 = vmatprep.subr.bf16.mxu0 0
  %2002 = vmatpush1.bf16.msra.mxu0 %v1928
  %2003 = vmatprep.subr.bf16.mxu0 0
  %2004 = vmatpush1.bf16.msra.mxu0 %v1927
  %2005 = vmatprep.subr.bf16.mxu0 0
  %2006 = vmatpush1.bf16.msra.mxu0 %v1926
  %2007 = vmatprep.subr.bf16.mxu0 0
  %2008 = vmatpush1.bf16.msra.mxu0 %v1925
  %2009 = vmatprep.subr.bf16.mxu0 0
  %2010 = vmatpush2.bf16.msra.mxu0 0
  %2011 = vmatprep.subr.bf16.mxu0 0
  %2012 = vmatpush2.bf16.msra.mxu0 0
  %2013 = vmatprep.subr.bf16.mxu0 0
  %2014 = vmatpush2.bf16.msra.mxu0 0
  %2015 = vmatprep.subr.bf16.mxu0 0
  %2016 = vmatpush2.bf16.msra.mxu0 0
  %2017 = vmatprep.subr.bf16.mxu0 0
  %2018 = vmatpush2.bf16.msra.mxu0 0
  %2019 = vmatprep.subr.bf16.mxu0 0
  %2020 = vmatpush2.bf16.msra.mxu0 %v1991
  %2021 = vmatprep.subr.bf16.mxu0 0
  %2022 = vmatpush2.bf16.msra.mxu0 %v1934
  %2023 = vmatprep.subr.bf16.mxu0 0
  %2024 = vmatpush2.bf16.msra.mxu0 %v1933
  %2025 = vmatprep.mubr.bf16.mxu0 %v1948
  %2026 = vmatmul.mubr.bf16.gmra.mxu0 %v1855
  %v2027 = vpop.f32.mrf.mxu0
  %v2028 = vadd.f32 0.0, %v2027
  %v2029 = vpop.f32.mrf.mxu0
  %v2030 = vpop.f32.mrf.mxu0
  %v2031 = vadd.f32 0.0, %v2030
  %v2032 = vpop.f32.mrf.mxu0
  %2033 = vmatprep.mubr.bf16.mxu0 %v1951
  %2034 = vmatmul.mubr.bf16.gmra.mxu0 %v1857
  %v2035 = vpop.f32.mrf.mxu0
  %v2036 = vadd.f32 0.0, %v2035
  %v2037 = vpop.f32.mrf.mxu0
  %v2038 = vpop.f32.mrf.mxu0
  %v2039 = vadd.f32 0.0, %v2038
  %v2040 = vpop.f32.mrf.mxu0
  %2041 = vmatprep.mubr.bf16.mxu0 %v1954
  %2042 = vmatmul.mubr.bf16.gmra.mxu0 %v1859
  %v2043 = vpop.f32.mrf.mxu0
  %v2044 = vadd.f32 0.0, %v2043
  %v2045 = vpop.f32.mrf.mxu0
  %v2046 = vpop.f32.mrf.mxu0
  %v2047 = vadd.f32 0.0, %v2046
  %v2048 = vpop.f32.mrf.mxu0
  %2049 = vmatprep.mubr.bf16.mxu0 %v1957
  %2050 = vmatmul.mubr.bf16.gmra.mxu0 %v1861
  %v2051 = vpop.f32.mrf.mxu0
  %v2052 = vadd.f32 0.0, %v2051
  %v2053 = vpop.f32.mrf.mxu0
  %v2054 = vpop.f32.mrf.mxu0
  %v2055 = vadd.f32 0.0, %v2054
  %v2056 = vpop.f32.mrf.mxu0
  %2057 = vmatprep.mubr.bf16.mxu0 %v1960
  %2058 = vmatmul.mubr.bf16.gmra.mxu0 %v1863
  %v2059 = vpop.f32.mrf.mxu0
  %v2060 = vadd.f32 0.0, %v2059
  %v2061 = vpop.f32.mrf.mxu0
  %v2062 = vpop.f32.mrf.mxu0
  %v2063 = vadd.f32 0.0, %v2062
  %v2064 = vpop.f32.mrf.mxu0
  %2065 = vmatprep.mubr.bf16.mxu0 %v1963
  %2066 = vmatmul.mubr.bf16.gmra.mxu0 %v1865
  %v2067 = vpop.f32.mrf.mxu0
  %v2068 = vadd.f32 0.0, %v2067
  %v2069 = vpop.f32.mrf.mxu0
  %v2070 = vpop.f32.mrf.mxu0
  %v2071 = vadd.f32 0.0, %v2070
  %v2072 = vpop.f32.mrf.mxu0
  %2073 = vmatprep.mubr.bf16.mxu0 %v1966
  %2074 = vmatmul.mubr.bf16.gmra.mxu0 %v1867
  %v2075 = vpop.f32.mrf.mxu0
  %v2076 = vadd.f32 0.0, %v2075
  %v2077 = vpop.f32.mrf.mxu0
  %v2078 = vpop.f32.mrf.mxu0
  %v2079 = vadd.f32 0.0, %v2078
  %v2080 = vpop.f32.mrf.mxu0
  %2081 = vmatprep.mubr.bf16.mxu0 %v1969
  %2082 = vmatmul.mubr.bf16.gmra.mxu0 %v1869
  %v2083 = vpop.f32.mrf.mxu0
  %v2084 = vadd.f32 0.0, %v2083
  %v2085 = vpop.f32.mrf.mxu0
  %v2086 = vpop.f32.mrf.mxu0
  %v2087 = vadd.f32 0.0, %v2086
  %v2088 = vpop.f32.mrf.mxu0
  %2089 = vmatprep.mubr.bf16.mxu0 %v1972
  %2090 = vmatmul.mubr.bf16.gmra.mxu0 %v1871
  %v2091 = vpop.f32.mrf.mxu0
  %v2092 = vadd.f32 0.0, %v2091
  %v2093 = vpop.f32.mrf.mxu0
  %v2094 = vpop.f32.mrf.mxu0
  %v2095 = vadd.f32 0.0, %v2094
  %v2096 = vpop.f32.mrf.mxu0
  %2097 = vmatprep.mubr.bf16.mxu0 %v1975
  %2098 = vmatmul.mubr.bf16.gmra.mxu0 %v1873
  %v2099 = vpop.f32.mrf.mxu0
  %v2100 = vadd.f32 0.0, %v2099
  %v2101 = vpop.f32.mrf.mxu0
  %v2102 = vpop.f32.mrf.mxu0
  %v2103 = vadd.f32 0.0, %v2102
  %v2104 = vpop.f32.mrf.mxu0
  %2105 = vmatprep.mubr.bf16.mxu0 %v1978
  %2106 = vmatmul.mubr.bf16.gmra.mxu0 %v1875
  %v2107 = vpop.f32.mrf.mxu0
  %v2108 = vadd.f32 0.0, %v2107
  %v2109 = vpop.f32.mrf.mxu0
  %v2110 = vpop.f32.mrf.mxu0
  %v2111 = vadd.f32 0.0, %v2110
  %v2112 = vpop.f32.mrf.mxu0
  %2113 = vmatprep.mubr.bf16.mxu0 %v1981
  %2114 = vmatmul.mubr.bf16.gmra.mxu0 %v1877
  %v2115 = vpop.f32.mrf.mxu0
  %v2116 = vadd.f32 0.0, %v2115
  %v2117 = vpop.f32.mrf.mxu0
  %v2118 = vpop.f32.mrf.mxu0
  %v2119 = vadd.f32 0.0, %v2118
  %v2120 = vpop.f32.mrf.mxu0
  %2121 = vmatprep.mubr.bf16.mxu0 %v1984
  %2122 = vmatmul.mubr.bf16.gmra.mxu0 %v1879
  %v2123 = vpop.f32.mrf.mxu0
  %v2124 = vadd.f32 0.0, %v2123
  %v2125 = vpop.f32.mrf.mxu0
  %v2126 = vpop.f32.mrf.mxu0
  %v2127 = vadd.f32 0.0, %v2126
  %v2128 = vpop.f32.mrf.mxu0
  %2129 = vmatprep.mubr.bf16.mxu0 %v1987
  %2130 = vmatmul.mubr.bf16.gmra.mxu0 %v1881
  %v2131 = vpop.f32.mrf.mxu0
  %v2132 = vadd.f32 0.0, %v2131
  %v2133 = vpop.f32.mrf.mxu0
  %v2134 = vpop.f32.mrf.mxu0
  %v2135 = vadd.f32 0.0, %v2134
  %v2136 = vpop.f32.mrf.mxu0
  %2137 = vdwg.mxu0
  %v2138 = vld [vmem:[%s4] sm:$0xf]
  %v2139 = vld [vmem:[%s4 + $0x4] sm:$0xf]
  %v2140 = vld [vmem:[%s4 + $0x8] sm:$0xf]
  %v2141 = vld [vmem:[%s4 + $0xc] sm:$0xf]
  %v2142 = vld [vmem:[%s4 + $0x10] sm:$0xf]
  %v2143 = vld [vmem:[%s4 + $0x14] sm:$0xf]
  %v2144 = vld [vmem:[%s4 + $0x18] sm:$0xf]
  %v2145 = vld [vmem:[%s4 + $0x1c] sm:$0xf]
  %v2146 = vld [vmem:[%s4 + $0x20] sm:$0xf]
  %v2147 = vld [vmem:[%s4 + $0x24] sm:$0xf]
  %v2148 = vld [vmem:[%s4 + $0x28] sm:$0xf]
  %v2149 = vld [vmem:[%s4 + $0x2c] sm:$0xf]
  %v2150 = vld [vmem:[%s4 + $0x30] sm:$0xf]
  %v2151 = vld [vmem:[%s4 + $0x34] sm:$0xf]
  %v2152 = vld [vmem:[%s4 + $0x38] sm:$0xf]
  %v2153 = vld [vmem:[%s4 + $0x3c] sm:$0xf]
  %v2154 = vld [vmem:[%s4 + $0x40] sm:$0xf]
  %v2155 = vld [vmem:[%s4 + $0x44] sm:$0xf]
  %v2156 = vld [vmem:[%s4 + $0x48] sm:$0xf]
  %v2157 = vld [vmem:[%s4 + $0x4c] sm:$0xf]
  %v2158 = vld [vmem:[%s4 + $0x50] sm:$0xf]
  %v2180 = vunpack.c.l.b16 %v2138
  %v2181 = vunpack.c.l.b16 %v2139
  %v2182 = vunpack.c.l.b16 %v2140
  %v2183 = vunpack.c.l.b16 %v2141
  %v2184 = vunpack.c.l.b16 %v2142
  %v2185 = vunpack.c.l.b16 %v2143
  %v2186 = vunpack.c.l.b16 %v2144
  %v2187 = vunpack.c.l.b16 %v2145
  %v2188 = vunpack.c.l.b16 %v2146
  %v2189 = vunpack.c.l.b16 %v2147
  %v2190 = vunpack.c.l.b16 %v2148
  %v2191 = vunpack.c.l.b16 %v2149
  %v2192 = vunpack.c.l.b16 %v2150
  %v2193 = vunpack.c.l.b16 %v2151
  %v2194 = vunpack.c.l.b16 %v2152
  %v2195 = vunpack.c.l.b16 %v2153
  %v2196 = vunpack.c.l.b16 %v2154
  %v2197 = vunpack.c.l.b16 %v2155
  %v2198 = vunpack.c.l.b16 %v2156
  %v2199 = vunpack.c.l.b16 %v2157
  %v2200 = vunpack.c.l.b16 %v2158
  %v2201 = vpack.c.b16 %v2181, %v2180
  %v2202 = vpack.c.b16 %v2183, %v2182
  %v2203 = vpack.c.b16 %v2185, %v2184
  %v2204 = vpack.c.b16 %v2187, %v2186
  %v2205 = vpack.c.b16 %v2189, %v2188
  %v2206 = vpack.c.b16 %v2191, %v2190
  %v2207 = vpack.c.b16 %v2193, %v2192
  %v2208 = vpack.c.b16 %v2195, %v2194
  %v2209 = vpack.c.b16 %v2197, %v2196
  %v2210 = vpack.c.b16 %v2199, %v2198
  %v2211 = vpack.c.b16 %v2200, %v2200
  %v2223 = vsel %vm1989, %v2211, 0
  %2225 = vmatprep.subr.bf16.mxu0 0
  %2226 = vmatpush1.bf16.msra.mxu0 %v2208
  %2227 = vmatprep.subr.bf16.mxu0 0
  %2228 = vmatpush1.bf16.msra.mxu0 %v2207
  %2229 = vmatprep.subr.bf16.mxu0 0
  %2230 = vmatpush1.bf16.msra.mxu0 %v2206
  %2231 = vmatprep.subr.bf16.mxu0 0
  %2232 = vmatpush1.bf16.msra.mxu0 %v2205
  %2233 = vmatprep.subr.bf16.mxu0 0
  %2234 = vmatpush1.bf16.msra.mxu0 %v2204
  %2235 = vmatprep.subr.bf16.mxu0 0
  %2236 = vmatpush1.bf16.msra.mxu0 %v2203
  %2237 = vmatprep.subr.bf16.mxu0 0
  %2238 = vmatpush1.bf16.msra.mxu0 %v2202
  %2239 = vmatprep.subr.bf16.mxu0 0
  %2240 = vmatpush1.bf16.msra.mxu0 %v2201
  %2241 = vmatprep.subr.bf16.mxu0 0
  %2242 = vmatpush2.bf16.msra.mxu0 0
  %2243 = vmatprep.subr.bf16.mxu0 0
  %2244 = vmatpush2.bf16.msra.mxu0 0
  %2245 = vmatprep.subr.bf16.mxu0 0
  %2246 = vmatpush2.bf16.msra.mxu0 0
  %2247 = vmatprep.subr.bf16.mxu0 0
  %2248 = vmatpush2.bf16.msra.mxu0 0
  %2249 = vmatprep.subr.bf16.mxu0 0
  %2250 = vmatpush2.bf16.msra.mxu0 0
  %2251 = vmatprep.subr.bf16.mxu0 0
  %2252 = vmatpush2.bf16.msra.mxu0 %v2223
  %2253 = vmatprep.subr.bf16.mxu0 0
  %2254 = vmatpush2.bf16.msra.mxu0 %v2210
  %2255 = vmatprep.subr.bf16.mxu0 0
  %2256 = vmatpush2.bf16.msra.mxu0 %v2209
  %2257 = vmatprep.mubr.bf16.mxu0 %v1948
  %2258 = vmatmul.mubr.bf16.gmra.mxu0 %v1855
  %v2259 = vpop.f32.mrf.mxu0
  %v2260 = vadd.f32 0.0, %v2259
  %v2261 = vpop.f32.mrf.mxu0
  %v2262 = vpop.f32.mrf.mxu0
  %v2263 = vadd.f32 0.0, %v2262
  %v2264 = vpop.f32.mrf.mxu0
  %2265 = vmatprep.mubr.bf16.mxu0 %v1951
  %2266 = vmatmul.mubr.bf16.gmra.mxu0 %v1857
  %v2267 = vpop.f32.mrf.mxu0
  %v2268 = vadd.f32 0.0, %v2267
  %v2269 = vpop.f32.mrf.mxu0
  %v2270 = vpop.f32.mrf.mxu0
  %v2271 = vadd.f32 0.0, %v2270
  %v2272 = vpop.f32.mrf.mxu0
  %2273 = vmatprep.mubr.bf16.mxu0 %v1954
  %2274 = vmatmul.mubr.bf16.gmra.mxu0 %v1859
  %v2275 = vpop.f32.mrf.mxu0
  %v2276 = vadd.f32 0.0, %v2275
  %v2277 = vpop.f32.mrf.mxu0
  %v2278 = vpop.f32.mrf.mxu0
  %v2279 = vadd.f32 0.0, %v2278
  %v2280 = vpop.f32.mrf.mxu0
  %2281 = vmatprep.mubr.bf16.mxu0 %v1957
  %2282 = vmatmul.mubr.bf16.gmra.mxu0 %v1861
  %v2283 = vpop.f32.mrf.mxu0
  %v2284 = vadd.f32 0.0, %v2283
  %v2285 = vpop.f32.mrf.mxu0
  %v2286 = vpop.f32.mrf.mxu0
  %v2287 = vadd.f32 0.0, %v2286
  %v2288 = vpop.f32.mrf.mxu0
  %2289 = vmatprep.mubr.bf16.mxu0 %v1960
  %2290 = vmatmul.mubr.bf16.gmra.mxu0 %v1863
  %v2291 = vpop.f32.mrf.mxu0
  %v2292 = vadd.f32 0.0, %v2291
  %v2293 = vpop.f32.mrf.mxu0
  %v2294 = vpop.f32.mrf.mxu0
  %v2295 = vadd.f32 0.0, %v2294
  %v2296 = vpop.f32.mrf.mxu0
  %2297 = vmatprep.mubr.bf16.mxu0 %v1963
  %2298 = vmatmul.mubr.bf16.gmra.mxu0 %v1865
  %v2299 = vpop.f32.mrf.mxu0
  %v2300 = vadd.f32 0.0, %v2299
  %v2301 = vpop.f32.mrf.mxu0
  %v2302 = vpop.f32.mrf.mxu0
  %v2303 = vadd.f32 0.0, %v2302
  %v2304 = vpop.f32.mrf.mxu0
  %2305 = vmatprep.mubr.bf16.mxu0 %v1966
  %2306 = vmatmul.mubr.bf16.gmra.mxu0 %v1867
  %v2307 = vpop.f32.mrf.mxu0
  %v2308 = vadd.f32 0.0, %v2307
  %v2309 = vpop.f32.mrf.mxu0
  %v2310 = vpop.f32.mrf.mxu0
  %v2311 = vadd.f32 0.0, %v2310
  %v2312 = vpop.f32.mrf.mxu0
  %2313 = vmatprep.mubr.bf16.mxu0 %v1969
  %2314 = vmatmul.mubr.bf16.gmra.mxu0 %v1869
  %v2315 = vpop.f32.mrf.mxu0
  %v2316 = vadd.f32 0.0, %v2315
  %v2317 = vpop.f32.mrf.mxu0
  %v2318 = vpop.f32.mrf.mxu0
  %v2319 = vadd.f32 0.0, %v2318
  %v2320 = vpop.f32.mrf.mxu0
  %2321 = vmatprep.mubr.bf16.mxu0 %v1972
  %2322 = vmatmul.mubr.bf16.gmra.mxu0 %v1871
  %v2323 = vpop.f32.mrf.mxu0
  %v2324 = vadd.f32 0.0, %v2323
  %v2325 = vpop.f32.mrf.mxu0
  %v2326 = vpop.f32.mrf.mxu0
  %v2327 = vadd.f32 0.0, %v2326
  %v2328 = vpop.f32.mrf.mxu0
  %2329 = vmatprep.mubr.bf16.mxu0 %v1975
  %2330 = vmatmul.mubr.bf16.gmra.mxu0 %v1873
  %v2331 = vpop.f32.mrf.mxu0
  %v2332 = vadd.f32 0.0, %v2331
  %v2333 = vpop.f32.mrf.mxu0
  %v2334 = vpop.f32.mrf.mxu0
  %v2335 = vadd.f32 0.0, %v2334
  %v2336 = vpop.f32.mrf.mxu0
  %2337 = vmatprep.mubr.bf16.mxu0 %v1978
  %2338 = vmatmul.mubr.bf16.gmra.mxu0 %v1875
  %v2339 = vpop.f32.mrf.mxu0
  %v2340 = vadd.f32 0.0, %v2339
  %v2341 = vpop.f32.mrf.mxu0
  %v2342 = vpop.f32.mrf.mxu0
  %v2343 = vadd.f32 0.0, %v2342
  %v2344 = vpop.f32.mrf.mxu0
  %2345 = vmatprep.mubr.bf16.mxu0 %v1981
  %2346 = vmatmul.mubr.bf16.gmra.mxu0 %v1877
  %v2347 = vpop.f32.mrf.mxu0
  %v2348 = vadd.f32 0.0, %v2347
  %v2349 = vpop.f32.mrf.mxu0
  %v2350 = vpop.f32.mrf.mxu0
  %v2351 = vadd.f32 0.0, %v2350
  %v2352 = vpop.f32.mrf.mxu0
  %2353 = vmatprep.mubr.bf16.mxu0 %v1984
  %2354 = vmatmul.mubr.bf16.gmra.mxu0 %v1879
  %v2355 = vpop.f32.mrf.mxu0
  %v2356 = vadd.f32 0.0, %v2355
  %v2357 = vpop.f32.mrf.mxu0
  %v2358 = vpop.f32.mrf.mxu0
  %v2359 = vadd.f32 0.0, %v2358
  %v2360 = vpop.f32.mrf.mxu0
  %2361 = vmatprep.mubr.bf16.mxu0 %v1987
  %2362 = vmatmul.mubr.bf16.gmra.mxu0 %v1881
  %v2363 = vpop.f32.mrf.mxu0
  %v2364 = vadd.f32 0.0, %v2363
  %v2365 = vpop.f32.mrf.mxu0
  %v2366 = vpop.f32.mrf.mxu0
  %v2367 = vadd.f32 0.0, %v2366
  %v2368 = vpop.f32.mrf.mxu0
  %2369 = vdwg.mxu0
  %v2370 = vmax.f32 %v2028, %v2260
  %v2371 = vmax.f32 %v2031, %v2263
  %v2372 = vmax.f32 %v2036, %v2268
  %v2373 = vmax.f32 %v2039, %v2271
  %v2374 = vmax.f32 %v2044, %v2276
  %v2375 = vmax.f32 %v2047, %v2279
  %v2376 = vmax.f32 %v2052, %v2284
  %v2377 = vmax.f32 %v2055, %v2287
  %v2378 = vmax.f32 %v2060, %v2292
  %v2379 = vmax.f32 %v2063, %v2295
  %v2380 = vmax.f32 %v2068, %v2300
  %v2381 = vmax.f32 %v2071, %v2303
  %v2382 = vmax.f32 %v2076, %v2308
  %v2383 = vmax.f32 %v2079, %v2311
  %v2384 = vmax.f32 %v2084, %v2316
  %v2385 = vmax.f32 %v2087, %v2319
  %v2386 = vmax.f32 %v2092, %v2324
  %v2387 = vmax.f32 %v2095, %v2327
  %v2388 = vmax.f32 %v2100, %v2332
  %v2389 = vmax.f32 %v2103, %v2335
  %v2390 = vmax.f32 %v2108, %v2340
  %v2391 = vmax.f32 %v2111, %v2343
  %v2392 = vmax.f32 %v2116, %v2348
  %v2393 = vmax.f32 %v2119, %v2351
  %v2394 = vmax.f32 %v2124, %v2356
  %v2395 = vmax.f32 %v2127, %v2359
  %v2396 = vmax.f32 %v2132, %v2364
  %v2397 = vmax.f32 %v2135, %v2367
  %v2398 = vmax.f32 %v2370, %v2371
  %vm2399 = vcmask 687104
  %2400 = vst.msk [vmem:[#allocation3] sm:$0xff] %vm2399, %v2398
  %v2401 = vmax.f32 %v2372, %v2373
  %2402 = vst.msk [vmem:[#allocation3 + $0x8] sm:$0xff] %vm2399, %v2401
  %v2403 = vmax.f32 %v2374, %v2375
  %2404 = vst.msk [vmem:[#allocation3 + $0x10] sm:$0xff] %vm2399, %v2403
  %v2405 = vmax.f32 %v2376, %v2377
  %2406 = vst.msk [vmem:[#allocation3 + $0x18] sm:$0xff] %vm2399, %v2405
  %v2407 = vmax.f32 %v2378, %v2379
  %2408 = vst.msk [vmem:[#allocation3 + $0x20] sm:$0xff] %vm2399, %v2407
  %v2409 = vmax.f32 %v2380, %v2381
  %2410 = vst.msk [vmem:[#allocation3 + $0x28] sm:$0xff] %vm2399, %v2409
  %v2411 = vmax.f32 %v2382, %v2383
  %2412 = vst.msk [vmem:[#allocation3 + $0x30] sm:$0xff] %vm2399, %v2411
  %v2413 = vmax.f32 %v2384, %v2385
  %2414 = vst.msk [vmem:[#allocation3 + $0x38] sm:$0xff] %vm2399, %v2413
  %v2415 = vmax.f32 %v2386, %v2387
  %2416 = vst.msk [vmem:[#allocation3 + $0x40] sm:$0xff] %vm2399, %v2415
  %v2417 = vmax.f32 %v2388, %v2389
  %2418 = vst.msk [vmem:[#allocation3 + $0x48] sm:$0xff] %vm2399, %v2417
  %v2419 = vmax.f32 %v2390, %v2391
  %2420 = vst.msk [vmem:[#allocation3 + $0x50] sm:$0xff] %vm2399, %v2419
  %v2421 = vmax.f32 %v2392, %v2393
  %2422 = vst.msk [vmem:[#allocation3 + $0x58] sm:$0xff] %vm2399, %v2421
  %v2423 = vmax.f32 %v2394, %v2395
  %2424 = vst.msk [vmem:[#allocation3 + $0x60] sm:$0xff] %vm2399, %v2423
  %v2425 = vmax.f32 %v2396, %v2397
  %2426 = vst.msk [vmem:[#allocation3 + $0x68] sm:$0xff] %vm2399, %v2425
  %v2427 = vld [vmem:[#allocation3] sm:$0xff]
  %v2428 = vld [vmem:[#allocation3 + $0x8] sm:$0xff]
  %v2429 = vld [vmem:[#allocation3 + $0x10] sm:$0xff]
  %v2430 = vld [vmem:[#allocation3 + $0x18] sm:$0xff]
  %v2431 = vld [vmem:[#allocation3 + $0x20] sm:$0xff]
  %v2432 = vld [vmem:[#allocation3 + $0x28] sm:$0xff]
  %v2433 = vld [vmem:[#allocation3 + $0x30] sm:$0xff]
  %v2434 = vld [vmem:[#allocation3 + $0x38] sm:$0xff]
  %v2435 = vld [vmem:[#allocation3 + $0x40] sm:$0xff]
  %v2436 = vld [vmem:[#allocation3 + $0x48] sm:$0xff]
  %v2437 = vld [vmem:[%s5] sm:$0xff]
  %v2438 = vld [vmem:[%s5 + $0x8] sm:$0xff]
  %v2439 = vld [vmem:[%s5 + $0x10] sm:$0xff]
  %v2440 = vld [vmem:[%s5 + $0x18] sm:$0xff]
  %v2441 = vld [vmem:[%s5 + $0x20] sm:$0xff]
  %v2442 = vld [vmem:[%s5 + $0x28] sm:$0xff]
  %v2443 = vld [vmem:[%s5 + $0x30] sm:$0xff]
  %v2444 = vld [vmem:[%s5 + $0x38] sm:$0xff]
  %v2445 = vld [vmem:[%s5 + $0x40] sm:$0xff]
  %v2446 = vld [vmem:[%s5 + $0x48] sm:$0xff]
  %v2447 = vld [vmem:[%s5 + $0x50] sm:$0x33]
  %v2448 = vpack.c.bf16 %v2428, %v2427
  %v2449 = vpack.c.bf16 %v2430, %v2429
  %v2450 = vpack.c.bf16 %v2432, %v2431
  %v2451 = vpack.c.bf16 %v2434, %v2433
  %v2452 = vpack.c.bf16 %v2436, %v2435
  %v2453 = vld [vmem:[#allocation3 + $0x50] sm:$0xff]
  %s2454 = scalar_lea.vmem %s5, 88
  %v2455 = vld [vmem:[%s2454] sm:$0xff]
  %v2456 = vld [vmem:[%s2454 + $0x8] sm:$0xff]
  %v2457 = vld [vmem:[%s2454 + $0x10] sm:$0xff]
  %v2458 = vld [vmem:[%s2454 + $0x18] sm:$0xff]
  %v2459 = vld [vmem:[%s2454 + $0x20] sm:$0xff]
  %v2460 = vld [vmem:[%s2454 + $0x28] sm:$0xff]
  %v2461 = vld [vmem:[%s2454 + $0x30] sm:$0xff]
  %v2462 = vld [vmem:[%s2454 + $0x38] sm:$0xff]
  %v2463 = vld [vmem:[%s2454 + $0x40] sm:$0xff]
  %v2464 = vld [vmem:[%s2454 + $0x48] sm:$0xff]
  %v2465 = vld [vmem:[%s2454 + $0x50] sm:$0x33]
  %v2466 = vpack.c.bf16 %v2429, %v2428
  %v2467 = vpack.c.bf16 %v2431, %v2430
  %v2468 = vpack.c.bf16 %v2433, %v2432
  %v2469 = vpack.c.bf16 %v2435, %v2434
  %v2470 = vpack.c.bf16 %v2453, %v2436
  %v2482 = vunpack.c.l.b16 %v2455
  %v2483 = vunpack.c.h.b16 %v2455
  %v2484 = vunpack.c.l.b16 %v2456
  %v2485 = vunpack.c.h.b16 %v2456
  %v2486 = vunpack.c.l.b16 %v2457
  %v2487 = vunpack.c.h.b16 %v2457
  %v2488 = vunpack.c.l.b16 %v2458
  %v2489 = vunpack.c.h.b16 %v2458
  %v2490 = vunpack.c.l.b16 %v2459
  %v2491 = vunpack.c.h.b16 %v2459
  %v2492 = vunpack.c.l.b16 %v2460
  %v2493 = vunpack.c.h.b16 %v2460
  %v2494 = vunpack.c.l.b16 %v2461
  %v2495 = vunpack.c.h.b16 %v2461
  %v2496 = vunpack.c.l.b16 %v2462
  %v2497 = vunpack.c.h.b16 %v2462
  %v2498 = vunpack.c.l.b16 %v2463
  %v2499 = vunpack.c.h.b16 %v2463
  %v2500 = vunpack.c.l.b16 %v2464
  %v2501 = vunpack.c.h.b16 %v2464
  %v2502 = vunpack.c.l.b16 %v2465
  %v2503 = vunpack.c.h.b16 %v2465
  %v2504 = vpack.c.b16 %v2484, %v2482
  %v2505 = vpack.c.b16 %v2485, %v2483
  %v2506 = vpack.c.b16 %v2488, %v2486
  %v2507 = vpack.c.b16 %v2489, %v2487
  %v2508 = vpack.c.b16 %v2492, %v2490
  %v2509 = vpack.c.b16 %v2493, %v2491
  %v2510 = vpack.c.b16 %v2496, %v2494
  %v2511 = vpack.c.b16 %v2497, %v2495
  %v2512 = vpack.c.b16 %v2500, %v2498
  %v2513 = vpack.c.b16 %v2501, %v2499
  %v2514 = vpack.c.b16 %v2502, %v2502
  %v2515 = vpack.c.b16 %v2503, %v2503
  %v2527 = vsel %vm2399, %v2466, 0
  %v2530 = vsel %vm2399, %v2467, 0
  %v2533 = vsel %vm2399, %v2468, 0
  %v2536 = vsel %vm2399, %v2469, 0
  %v2539 = vsel %vm2399, %v2470, 0
  %vm2541 = vcmask 1041408
  %v2543 = vsel %vm2541, %v2514, 0
  %v2546 = vsel %vm2541, %v2515, 0
  %2548 = vmatprep.subr.bf16.mxu0 0
  %2549 = vmatpush1.bf16.msra.mxu0 0
  %2550 = vmatprep.subr.bf16.mxu0 0
  %2551 = vmatpush1.bf16.msra.mxu0 0
  %2552 = vmatprep.subr.bf16.mxu0 %v2546
  %2553 = vmatpush1.bf16.msra.mxu0 %v2543
  %2554 = vmatprep.subr.bf16.mxu0 %v2513
  %2555 = vmatpush1.bf16.msra.mxu0 %v2512
  %2556 = vmatprep.subr.bf16.mxu0 %v2511
  %2557 = vmatpush1.bf16.msra.mxu0 %v2510
  %2558 = vmatprep.subr.bf16.mxu0 %v2509
  %2559 = vmatpush1.bf16.msra.mxu0 %v2508
  %2560 = vmatprep.subr.bf16.mxu0 %v2507
  %2561 = vmatpush1.bf16.msra.mxu0 %v2506
  %2562 = vmatprep.subr.bf16.mxu0 %v2505
  %2563 = vmatpush1.bf16.msra.mxu0 %v2504
  %2564 = vmatprep.subr.bf16.mxu0 0
  %2565 = vmatpush2.bf16.msra.mxu0 0
  %2566 = vmatprep.subr.bf16.mxu0 0
  %2567 = vmatpush2.bf16.msra.mxu0 0
  %2568 = vmatprep.subr.bf16.mxu0 0
  %2569 = vmatpush2.bf16.msra.mxu0 0
  %2570 = vmatprep.subr.bf16.mxu0 0
  %2571 = vmatpush2.bf16.msra.mxu0 0
  %2572 = vmatprep.subr.bf16.mxu0 0
  %2573 = vmatpush2.bf16.msra.mxu0 0
  %2574 = vmatprep.subr.bf16.mxu0 0
  %2575 = vmatpush2.bf16.msra.mxu0 0
  %2576 = vmatprep.subr.bf16.mxu0 0
  %2577 = vmatpush2.bf16.msra.mxu0 0
  %2578 = vmatprep.subr.bf16.mxu0 0
  %2579 = vmatpush2.bf16.msra.mxu0 0
  %2580 = vmatprep.mubr.bf16.mxu0 0
  %2581 = vmatmul.mubr.bf16.gmra.mxu0 %v2527
  %v2582 = vpop.f32.mrf.mxu0
  %v2583 = vadd.f32 0.0, %v2582
  %v2584 = vpop.f32.mrf.mxu0
  %v2585 = vadd.f32 0.0, %v2584
  %v2586 = vpop.f32.mrf.mxu0
  %v2587 = vadd.f32 0.0, %v2586
  %v2588 = vpop.f32.mrf.mxu0
  %v2589 = vadd.f32 0.0, %v2588
  %2590 = vmatprep.mubr.bf16.mxu0 0
  %2591 = vmatmul.mubr.bf16.gmra.mxu0 %v2530
  %v2592 = vpop.f32.mrf.mxu0
  %v2593 = vadd.f32 0.0, %v2592
  %v2594 = vpop.f32.mrf.mxu0
  %v2595 = vadd.f32 0.0, %v2594
  %v2596 = vpop.f32.mrf.mxu0
  %v2597 = vadd.f32 0.0, %v2596
  %v2598 = vpop.f32.mrf.mxu0
  %v2599 = vadd.f32 0.0, %v2598
  %2600 = vmatprep.mubr.bf16.mxu0 0
  %2601 = vmatmul.mubr.bf16.gmra.mxu0 %v2533
  %v2602 = vpop.f32.mrf.mxu0
  %v2603 = vadd.f32 0.0, %v2602
  %v2604 = vpop.f32.mrf.mxu0
  %v2605 = vadd.f32 0.0, %v2604
  %v2606 = vpop.f32.mrf.mxu0
  %v2607 = vadd.f32 0.0, %v2606
  %v2608 = vpop.f32.mrf.mxu0
  %v2609 = vadd.f32 0.0, %v2608
  %2610 = vmatprep.mubr.bf16.mxu0 0
  %2611 = vmatmul.mubr.bf16.gmra.mxu0 %v2536
  %v2612 = vpop.f32.mrf.mxu0
  %v2613 = vadd.f32 0.0, %v2612
  %v2614 = vpop.f32.mrf.mxu0
  %v2615 = vadd.f32 0.0, %v2614
  %v2616 = vpop.f32.mrf.mxu0
  %v2617 = vadd.f32 0.0, %v2616
  %v2618 = vpop.f32.mrf.mxu0
  %v2619 = vadd.f32 0.0, %v2618
  %2620 = vmatprep.mubr.bf16.mxu0 0
  %2621 = vmatmul.mubr.bf16.gmra.mxu0 %v2539
  %v2622 = vpop.f32.mrf.mxu0
  %v2623 = vadd.f32 0.0, %v2622
  %v2624 = vpop.f32.mrf.mxu0
  %v2625 = vadd.f32 0.0, %v2624
  %v2626 = vpop.f32.mrf.mxu0
  %v2627 = vadd.f32 0.0, %v2626
  %v2628 = vpop.f32.mrf.mxu0
  %v2629 = vadd.f32 0.0, %v2628
  %2630 = vdwg.mxu0
  %v2642 = vunpack.c.l.b16 %v2437
  %v2643 = vunpack.c.h.b16 %v2437
  %v2644 = vunpack.c.l.b16 %v2438
  %v2645 = vunpack.c.h.b16 %v2438
  %v2646 = vunpack.c.l.b16 %v2439
  %v2647 = vunpack.c.h.b16 %v2439
  %v2648 = vunpack.c.l.b16 %v2440
  %v2649 = vunpack.c.h.b16 %v2440
  %v2650 = vunpack.c.l.b16 %v2441
  %v2651 = vunpack.c.h.b16 %v2441
  %v2652 = vunpack.c.l.b16 %v2442
  %v2653 = vunpack.c.h.b16 %v2442
  %v2654 = vunpack.c.l.b16 %v2443
  %v2655 = vunpack.c.h.b16 %v2443
  %v2656 = vunpack.c.l.b16 %v2444
  %v2657 = vunpack.c.h.b16 %v2444
  %v2658 = vunpack.c.l.b16 %v2445
  %v2659 = vunpack.c.h.b16 %v2445
  %v2660 = vunpack.c.l.b16 %v2446
  %v2661 = vunpack.c.h.b16 %v2446
  %v2662 = vunpack.c.l.b16 %v2447
  %v2663 = vunpack.c.h.b16 %v2447
  %v2664 = vpack.c.b16 %v2644, %v2642
  %v2665 = vpack.c.b16 %v2645, %v2643
  %v2666 = vpack.c.b16 %v2648, %v2646
  %v2667 = vpack.c.b16 %v2649, %v2647
  %v2668 = vpack.c.b16 %v2652, %v2650
  %v2669 = vpack.c.b16 %v2653, %v2651
  %v2670 = vpack.c.b16 %v2656, %v2654
  %v2671 = vpack.c.b16 %v2657, %v2655
  %v2672 = vpack.c.b16 %v2660, %v2658
  %v2673 = vpack.c.b16 %v2661, %v2659
  %v2674 = vpack.c.b16 %v2662, %v2662
  %v2675 = vpack.c.b16 %v2663, %v2663
  %v2687 = vsel %vm2399, %v2448, 0
  %v2690 = vsel %vm2399, %v2449, 0
  %v2693 = vsel %vm2399, %v2450, 0
  %v2696 = vsel %vm2399, %v2451, 0
  %v2699 = vsel %vm2399, %v2452, 0
  %v2702 = vsel %vm2541, %v2674, 0
  %v2705 = vsel %vm2541, %v2675, 0
  %2707 = vmatprep.subr.bf16.mxu0 0
  %2708 = vmatpush1.bf16.msra.mxu0 0
  %2709 = vmatprep.subr.bf16.mxu0 0
  %2710 = vmatpush1.bf16.msra.mxu0 0
  %2711 = vmatprep.subr.bf16.mxu0 %v2705
  %2712 = vmatpush1.bf16.msra.mxu0 %v2702
  %2713 = vmatprep.subr.bf16.mxu0 %v2673
  %2714 = vmatpush1.bf16.msra.mxu0 %v2672
  %2715 = vmatprep.subr.bf16.mxu0 %v2671
  %2716 = vmatpush1.bf16.msra.mxu0 %v2670
  %2717 = vmatprep.subr.bf16.mxu0 %v2669
  %2718 = vmatpush1.bf16.msra.mxu0 %v2668
  %2719 = vmatprep.subr.bf16.mxu0 %v2667
  %2720 = vmatpush1.bf16.msra.mxu0 %v2666
  %2721 = vmatprep.subr.bf16.mxu0 %v2665
  %2722 = vmatpush1.bf16.msra.mxu0 %v2664
  %2723 = vmatprep.subr.bf16.mxu0 0
  %2724 = vmatpush2.bf16.msra.mxu0 0
  %2725 = vmatprep.subr.bf16.mxu0 0
  %2726 = vmatpush2.bf16.msra.mxu0 0
  %2727 = vmatprep.subr.bf16.mxu0 0
  %2728 = vmatpush2.bf16.msra.mxu0 0
  %2729 = vmatprep.subr.bf16.mxu0 0
  %2730 = vmatpush2.bf16.msra.mxu0 0
  %2731 = vmatprep.subr.bf16.mxu0 0
  %2732 = vmatpush2.bf16.msra.mxu0 0
  %2733 = vmatprep.subr.bf16.mxu0 0
  %2734 = vmatpush2.bf16.msra.mxu0 0
  %2735 = vmatprep.subr.bf16.mxu0 0
  %2736 = vmatpush2.bf16.msra.mxu0 0
  %2737 = vmatprep.subr.bf16.mxu0 0
  %2738 = vmatpush2.bf16.msra.mxu0 0
  %2739 = vmatprep.mubr.bf16.mxu0 0
  %2740 = vmatmul.mubr.bf16.gmra.mxu0 %v2687
  %v2741 = vpop.f32.mrf.mxu0
  %v2742 = vadd.f32 %v2583, %v2741
  %v2743 = vpop.f32.mrf.mxu0
  %v2744 = vadd.f32 %v2585, %v2743
  %v2745 = vpop.f32.mrf.mxu0
  %v2746 = vadd.f32 %v2587, %v2745
  %v2747 = vpop.f32.mrf.mxu0
  %v2748 = vadd.f32 %v2589, %v2747
  %2749 = vmatprep.mubr.bf16.mxu0 0
  %2750 = vmatmul.mubr.bf16.gmra.mxu0 %v2690
  %v2751 = vpop.f32.mrf.mxu0
  %v2752 = vadd.f32 %v2593, %v2751
  %v2753 = vpop.f32.mrf.mxu0
  %v2754 = vadd.f32 %v2595, %v2753
  %v2755 = vpop.f32.mrf.mxu0
  %v2756 = vadd.f32 %v2597, %v2755
  %v2757 = vpop.f32.mrf.mxu0
  %v2758 = vadd.f32 %v2599, %v2757
  %2759 = vmatprep.mubr.bf16.mxu0 0
  %2760 = vmatmul.mubr.bf16.gmra.mxu0 %v2693
  %v2761 = vpop.f32.mrf.mxu0
  %v2762 = vadd.f32 %v2603, %v2761
  %v2763 = vpop.f32.mrf.mxu0
  %v2764 = vadd.f32 %v2605, %v2763
  %v2765 = vpop.f32.mrf.mxu0
  %v2766 = vadd.f32 %v2607, %v2765
  %v2767 = vpop.f32.mrf.mxu0
  %v2768 = vadd.f32 %v2609, %v2767
  %2769 = vmatprep.mubr.bf16.mxu0 0
  %2770 = vmatmul.mubr.bf16.gmra.mxu0 %v2696
  %v2771 = vpop.f32.mrf.mxu0
  %v2772 = vadd.f32 %v2613, %v2771
  %v2773 = vpop.f32.mrf.mxu0
  %v2774 = vadd.f32 %v2615, %v2773
  %v2775 = vpop.f32.mrf.mxu0
  %v2776 = vadd.f32 %v2617, %v2775
  %v2777 = vpop.f32.mrf.mxu0
  %v2778 = vadd.f32 %v2619, %v2777
  %2779 = vmatprep.mubr.bf16.mxu0 0
  %2780 = vmatmul.mubr.bf16.gmra.mxu0 %v2699
  %v2781 = vpop.f32.mrf.mxu0
  %v2782 = vadd.f32 %v2623, %v2781
  %v2783 = vpop.f32.mrf.mxu0
  %v2784 = vadd.f32 %v2625, %v2783
  %v2785 = vpop.f32.mrf.mxu0
  %v2786 = vadd.f32 %v2627, %v2785
  %v2787 = vpop.f32.mrf.mxu0
  %v2788 = vadd.f32 %v2629, %v2787
  %2789 = vdwg.mxu0
  %v2790 = vld [vmem:[#allocation3 + $0x10] sm:$0xff]
  %v2791 = vld [vmem:[#allocation3 + $0x18] sm:$0xff]
  %v2792 = vld [vmem:[#allocation3 + $0x20] sm:$0xff]
  %v2793 = vld [vmem:[#allocation3 + $0x28] sm:$0xff]
  %v2794 = vld [vmem:[#allocation3 + $0x30] sm:$0xff]
  %v2795 = vld [vmem:[#allocation3 + $0x38] sm:$0xff]
  %v2796 = vld [vmem:[#allocation3 + $0x40] sm:$0xff]
  %v2797 = vld [vmem:[#allocation3 + $0x48] sm:$0xff]
  %v2798 = vld [vmem:[#allocation3 + $0x50] sm:$0xff]
  %v2799 = vld [vmem:[#allocation3 + $0x58] sm:$0xff]
  %s2800 = scalar_lea.vmem %s5, 176
  %v2801 = vld [vmem:[%s2800] sm:$0xff]
  %v2802 = vld [vmem:[%s2800 + $0x8] sm:$0xff]
  %v2803 = vld [vmem:[%s2800 + $0x10] sm:$0xff]
  %v2804 = vld [vmem:[%s2800 + $0x18] sm:$0xff]
  %v2805 = vld [vmem:[%s2800 + $0x20] sm:$0xff]
  %v2806 = vld [vmem:[%s2800 + $0x28] sm:$0xff]
  %v2807 = vld [vmem:[%s2800 + $0x30] sm:$0xff]
  %v2808 = vld [vmem:[%s2800 + $0x38] sm:$0xff]
  %v2809 = vld [vmem:[%s2800 + $0x40] sm:$0xff]
  %v2810 = vld [vmem:[%s2800 + $0x48] sm:$0xff]
  %v2811 = vld [vmem:[%s2800 + $0x50] sm:$0x33]
  %v2812 = vpack.c.bf16 %v2791, %v2790
  %v2813 = vpack.c.bf16 %v2793, %v2792
  %v2814 = vpack.c.bf16 %v2795, %v2794
  %v2815 = vpack.c.bf16 %v2797, %v2796
  %v2816 = vpack.c.bf16 %v2799, %v2798
  %v2828 = vunpack.c.l.b16 %v2801
  %v2829 = vunpack.c.h.b16 %v2801
  %v2830 = vunpack.c.l.b16 %v2802
  %v2831 = vunpack.c.h.b16 %v2802
  %v2832 = vunpack.c.l.b16 %v2803
  %v2833 = vunpack.c.h.b16 %v2803
  %v2834 = vunpack.c.l.b16 %v2804
  %v2835 = vunpack.c.h.b16 %v2804
  %v2836 = vunpack.c.l.b16 %v2805
  %v2837 = vunpack.c.h.b16 %v2805
  %v2838 = vunpack.c.l.b16 %v2806
  %v2839 = vunpack.c.h.b16 %v2806
  %v2840 = vunpack.c.l.b16 %v2807
  %v2841 = vunpack.c.h.b16 %v2807
  %v2842 = vunpack.c.l.b16 %v2808
  %v2843 = vunpack.c.h.b16 %v2808
  %v2844 = vunpack.c.l.b16 %v2809
  %v2845 = vunpack.c.h.b16 %v2809
  %v2846 = vunpack.c.l.b16 %v2810
  %v2847 = vunpack.c.h.b16 %v2810
  %v2848 = vunpack.c.l.b16 %v2811
  %v2849 = vunpack.c.h.b16 %v2811
  %v2850 = vpack.c.b16 %v2830, %v2828
  %v2851 = vpack.c.b16 %v2831, %v2829
  %v2852 = vpack.c.b16 %v2834, %v2832
  %v2853 = vpack.c.b16 %v2835, %v2833
  %v2854 = vpack.c.b16 %v2838, %v2836
  %v2855 = vpack.c.b16 %v2839, %v2837
  %v2856 = vpack.c.b16 %v2842, %v2840
  %v2857 = vpack.c.b16 %v2843, %v2841
  %v2858 = vpack.c.b16 %v2846, %v2844
  %v2859 = vpack.c.b16 %v2847, %v2845
  %v2860 = vpack.c.b16 %v2848, %v2848
  %v2861 = vpack.c.b16 %v2849, %v2849
  %v2873 = vsel %vm2399, %v2812, 0
  %v2876 = vsel %vm2399, %v2813, 0
  %v2879 = vsel %vm2399, %v2814, 0
  %v2882 = vsel %vm2399, %v2815, 0
  %v2885 = vsel %vm2399, %v2816, 0
  %v2888 = vsel %vm2541, %v2860, 0
  %v2891 = vsel %vm2541, %v2861, 0
  %2893 = vmatprep.subr.bf16.mxu0 0
  %2894 = vmatpush1.bf16.msra.mxu0 0
  %2895 = vmatprep.subr.bf16.mxu0 0
  %2896 = vmatpush1.bf16.msra.mxu0 0
  %2897 = vmatprep.subr.bf16.mxu0 %v2891
  %2898 = vmatpush1.bf16.msra.mxu0 %v2888
  %2899 = vmatprep.subr.bf16.mxu0 %v2859
  %2900 = vmatpush1.bf16.msra.mxu0 %v2858
  %2901 = vmatprep.subr.bf16.mxu0 %v2857
  %2902 = vmatpush1.bf16.msra.mxu0 %v2856
  %2903 = vmatprep.subr.bf16.mxu0 %v2855
  %2904 = vmatpush1.bf16.msra.mxu0 %v2854
  %2905 = vmatprep.subr.bf16.mxu0 %v2853
  %2906 = vmatpush1.bf16.msra.mxu0 %v2852
  %2907 = vmatprep.subr.bf16.mxu0 %v2851
  %2908 = vmatpush1.bf16.msra.mxu0 %v2850
  %2909 = vmatprep.subr.bf16.mxu0 0
  %2910 = vmatpush2.bf16.msra.mxu0 0
  %2911 = vmatprep.subr.bf16.mxu0 0
  %2912 = vmatpush2.bf16.msra.mxu0 0
  %2913 = vmatprep.subr.bf16.mxu0 0
  %2914 = vmatpush2.bf16.msra.mxu0 0
  %2915 = vmatprep.subr.bf16.mxu0 0
  %2916 = vmatpush2.bf16.msra.mxu0 0
  %2917 = vmatprep.subr.bf16.mxu0 0
  %2918 = vmatpush2.bf16.msra.mxu0 0
  %2919 = vmatprep.subr.bf16.mxu0 0
  %2920 = vmatpush2.bf16.msra.mxu0 0
  %2921 = vmatprep.subr.bf16.mxu0 0
  %2922 = vmatpush2.bf16.msra.mxu0 0
  %2923 = vmatprep.subr.bf16.mxu0 0
  %2924 = vmatpush2.bf16.msra.mxu0 0
  %2925 = vmatprep.mubr.bf16.mxu0 0
  %2926 = vmatmul.mubr.bf16.gmra.mxu0 %v2873
  %v2927 = vpop.f32.mrf.mxu0
  %v2928 = vadd.f32 0.0, %v2927
  %v2929 = vpop.f32.mrf.mxu0
  %v2930 = vadd.f32 0.0, %v2929
  %v2931 = vpop.f32.mrf.mxu0
  %v2932 = vadd.f32 0.0, %v2931
  %v2933 = vpop.f32.mrf.mxu0
  %v2934 = vadd.f32 0.0, %v2933
  %2935 = vmatprep.mubr.bf16.mxu0 0
  %2936 = vmatmul.mubr.bf16.gmra.mxu0 %v2876
  %v2937 = vpop.f32.mrf.mxu0
  %v2938 = vadd.f32 0.0, %v2937
  %v2939 = vpop.f32.mrf.mxu0
  %v2940 = vadd.f32 0.0, %v2939
  %v2941 = vpop.f32.mrf.mxu0
  %v2942 = vadd.f32 0.0, %v2941
  %v2943 = vpop.f32.mrf.mxu0
  %v2944 = vadd.f32 0.0, %v2943
  %2945 = vmatprep.mubr.bf16.mxu0 0
  %2946 = vmatmul.mubr.bf16.gmra.mxu0 %v2879
  %v2947 = vpop.f32.mrf.mxu0
  %v2948 = vadd.f32 0.0, %v2947
  %v2949 = vpop.f32.mrf.mxu0
  %v2950 = vadd.f32 0.0, %v2949
  %v2951 = vpop.f32.mrf.mxu0
  %v2952 = vadd.f32 0.0, %v2951
  %v2953 = vpop.f32.mrf.mxu0
  %v2954 = vadd.f32 0.0, %v2953
  %2955 = vmatprep.mubr.bf16.mxu0 0
  %2956 = vmatmul.mubr.bf16.gmra.mxu0 %v2882
  %v2957 = vpop.f32.mrf.mxu0
  %v2958 = vadd.f32 0.0, %v2957
  %v2959 = vpop.f32.mrf.mxu0
  %v2960 = vadd.f32 0.0, %v2959
  %v2961 = vpop.f32.mrf.mxu0
  %v2962 = vadd.f32 0.0, %v2961
  %v2963 = vpop.f32.mrf.mxu0
  %v2964 = vadd.f32 0.0, %v2963
  %2965 = vmatprep.mubr.bf16.mxu0 0
  %2966 = vmatmul.mubr.bf16.gmra.mxu0 %v2885
  %v2967 = vpop.f32.mrf.mxu0
  %v2968 = vadd.f32 0.0, %v2967
  %v2969 = vpop.f32.mrf.mxu0
  %v2970 = vadd.f32 0.0, %v2969
  %v2971 = vpop.f32.mrf.mxu0
  %v2972 = vadd.f32 0.0, %v2971
  %v2973 = vpop.f32.mrf.mxu0
  %v2974 = vadd.f32 0.0, %v2973
  %2975 = vdwg.mxu0
  %v2976 = vadd.f32 %v2742, %v2928
  %v2977 = vadd.f32 %v2744, %v2930
  %v2978 = vadd.f32 %v2746, %v2932
  %v2979 = vadd.f32 %v2748, %v2934
  %v2980 = vadd.f32 %v2752, %v2938
  %v2981 = vadd.f32 %v2754, %v2940
  %v2982 = vadd.f32 %v2756, %v2942
  %v2983 = vadd.f32 %v2758, %v2944
  %v2984 = vadd.f32 %v2762, %v2948
  %v2985 = vadd.f32 %v2764, %v2950
  %v2986 = vadd.f32 %v2766, %v2952
  %v2987 = vadd.f32 %v2768, %v2954
  %v2988 = vadd.f32 %v2772, %v2958
  %v2989 = vadd.f32 %v2774, %v2960
  %v2990 = vadd.f32 %v2776, %v2962
  %v2991 = vadd.f32 %v2778, %v2964
  %v2992 = vadd.f32 %v2782, %v2968
  %v2993 = vadd.f32 %v2784, %v2970
  %v2994 = vadd.f32 %v2786, %v2972
  %v2995 = vadd.f32 %v2788, %v2974
  %v2996 = vld [vmem:[#allocation3 + $0x18] sm:$0xff]
  %v2997 = vld [vmem:[#allocation3 + $0x20] sm:$0xff]
  %v2998 = vld [vmem:[#allocation3 + $0x28] sm:$0xff]
  %v2999 = vld [vmem:[#allocation3 + $0x30] sm:$0xff]
  %v3000 = vld [vmem:[#allocation3 + $0x38] sm:$0xff]
  %v3001 = vld [vmem:[#allocation3 + $0x40] sm:$0xff]
  %v3002 = vld [vmem:[#allocation3 + $0x48] sm:$0xff]
  %v3003 = vld [vmem:[#allocation3 + $0x50] sm:$0xff]
  %v3004 = vld [vmem:[#allocation3 + $0x58] sm:$0xff]
  %v3005 = vld [vmem:[#allocation3 + $0x60] sm:$0xff]
  %s3006 = scalar_lea.vmem %s5, 264
  %v3007 = vld [vmem:[%s3006] sm:$0xff]
  %v3008 = vld [vmem:[%s3006 + $0x8] sm:$0xff]
  %v3009 = vld [vmem:[%s3006 + $0x10] sm:$0xff]
  %v3010 = vld [vmem:[%s3006 + $0x18] sm:$0xff]
  %v3011 = vld [vmem:[%s3006 + $0x20] sm:$0xff]
  %v3012 = vld [vmem:[%s3006 + $0x28] sm:$0xff]
  %v3013 = vld [vmem:[%s3006 + $0x30] sm:$0xff]
  %v3014 = vld [vmem:[%s3006 + $0x38] sm:$0xff]
  %v3015 = vld [vmem:[%s3006 + $0x40] sm:$0xff]
  %v3016 = vld [vmem:[%s3006 + $0x48] sm:$0xff]
  %v3017 = vld [vmem:[%s3006 + $0x50] sm:$0x33]
  %v3018 = vpack.c.bf16 %v2997, %v2996
  %v3019 = vpack.c.bf16 %v2999, %v2998
  %v3020 = vpack.c.bf16 %v3001, %v3000
  %v3021 = vpack.c.bf16 %v3003, %v3002
  %v3022 = vpack.c.bf16 %v3005, %v3004
  %v3034 = vunpack.c.l.b16 %v3007
  %v3035 = vunpack.c.h.b16 %v3007
  %v3036 = vunpack.c.l.b16 %v3008
  %v3037 = vunpack.c.h.b16 %v3008
  %v3038 = vunpack.c.l.b16 %v3009
  %v3039 = vunpack.c.h.b16 %v3009
  %v3040 = vunpack.c.l.b16 %v3010
  %v3041 = vunpack.c.h.b16 %v3010
  %v3042 = vunpack.c.l.b16 %v3011
  %v3043 = vunpack.c.h.b16 %v3011
  %v3044 = vunpack.c.l.b16 %v3012
  %v3045 = vunpack.c.h.b16 %v3012
  %v3046 = vunpack.c.l.b16 %v3013
  %v3047 = vunpack.c.h.b16 %v3013
  %v3048 = vunpack.c.l.b16 %v3014
  %v3049 = vunpack.c.h.b16 %v3014
  %v3050 = vunpack.c.l.b16 %v3015
  %v3051 = vunpack.c.h.b16 %v3015
  %v3052 = vunpack.c.l.b16 %v3016
  %v3053 = vunpack.c.h.b16 %v3016
  %v3054 = vunpack.c.l.b16 %v3017
  %v3055 = vunpack.c.h.b16 %v3017
  %v3056 = vpack.c.b16 %v3036, %v3034
  %v3057 = vpack.c.b16 %v3037, %v3035
  %v3058 = vpack.c.b16 %v3040, %v3038
  %v3059 = vpack.c.b16 %v3041, %v3039
  %v3060 = vpack.c.b16 %v3044, %v3042
  %v3061 = vpack.c.b16 %v3045, %v3043
  %v3062 = vpack.c.b16 %v3048, %v3046
  %v3063 = vpack.c.b16 %v3049, %v3047
  %v3064 = vpack.c.b16 %v3052, %v3050
  %v3065 = vpack.c.b16 %v3053, %v3051
  %v3066 = vpack.c.b16 %v3054, %v3054
  %v3067 = vpack.c.b16 %v3055, %v3055
  %v3079 = vsel %vm2399, %v3018, 0
  %v3082 = vsel %vm2399, %v3019, 0
  %v3085 = vsel %vm2399, %v3020, 0
  %v3088 = vsel %vm2399, %v3021, 0
  %v3091 = vsel %vm2399, %v3022, 0
  %v3094 = vsel %vm2541, %v3066, 0
  %v3097 = vsel %vm2541, %v3067, 0
  %3099 = vmatprep.subr.bf16.mxu0 0
  %3100 = vmatpush1.bf16.msra.mxu0 0
  %3101 = vmatprep.subr.bf16.mxu0 0
  %3102 = vmatpush1.bf16.msra.mxu0 0
  %3103 = vmatprep.subr.bf16.mxu0 %v3097
  %3104 = vmatpush1.bf16.msra.mxu0 %v3094
  %3105 = vmatprep.subr.bf16.mxu0 %v3065
  %3106 = vmatpush1.bf16.msra.mxu0 %v3064
  %3107 = vmatprep.subr.bf16.mxu0 %v3063
  %3108 = vmatpush1.bf16.msra.mxu0 %v3062
  %3109 = vmatprep.subr.bf16.mxu0 %v3061
  %3110 = vmatpush1.bf16.msra.mxu0 %v3060
  %3111 = vmatprep.subr.bf16.mxu0 %v3059
  %3112 = vmatpush1.bf16.msra.mxu0 %v3058
  %3113 = vmatprep.subr.bf16.mxu0 %v3057
  %3114 = vmatpush1.bf16.msra.mxu0 %v3056
  %3115 = vmatprep.subr.bf16.mxu0 0
  %3116 = vmatpush2.bf16.msra.mxu0 0
  %3117 = vmatprep.subr.bf16.mxu0 0
  %3118 = vmatpush2.bf16.msra.mxu0 0
  %3119 = vmatprep.subr.bf16.mxu0 0
  %3120 = vmatpush2.bf16.msra.mxu0 0
  %3121 = vmatprep.subr.bf16.mxu0 0
  %3122 = vmatpush2.bf16.msra.mxu0 0
  %3123 = vmatprep.subr.bf16.mxu0 0
  %3124 = vmatpush2.bf16.msra.mxu0 0
  %3125 = vmatprep.subr.bf16.mxu0 0
  %3126 = vmatpush2.bf16.msra.mxu0 0
  %3127 = vmatprep.subr.bf16.mxu0 0
  %3128 = vmatpush2.bf16.msra.mxu0 0
  %3129 = vmatprep.subr.bf16.mxu0 0
  %3130 = vmatpush2.bf16.msra.mxu0 0
  %3131 = vmatprep.mubr.bf16.mxu0 0
  %3132 = vmatmul.mubr.bf16.gmra.mxu0 %v3079
  %v3133 = vpop.f32.mrf.mxu0
  %v3134 = vadd.f32 0.0, %v3133
  %v3135 = vpop.f32.mrf.mxu0
  %v3136 = vadd.f32 0.0, %v3135
  %v3137 = vpop.f32.mrf.mxu0
  %v3138 = vadd.f32 0.0, %v3137
  %v3139 = vpop.f32.mrf.mxu0
  %v3140 = vadd.f32 0.0, %v3139
  %3141 = vmatprep.mubr.bf16.mxu0 0
  %3142 = vmatmul.mubr.bf16.gmra.mxu0 %v3082
  %v3143 = vpop.f32.mrf.mxu0
  %v3144 = vadd.f32 0.0, %v3143
  %v3145 = vpop.f32.mrf.mxu0
  %v3146 = vadd.f32 0.0, %v3145
  %v3147 = vpop.f32.mrf.mxu0
  %v3148 = vadd.f32 0.0, %v3147
  %v3149 = vpop.f32.mrf.mxu0
  %v3150 = vadd.f32 0.0, %v3149
  %3151 = vmatprep.mubr.bf16.mxu0 0
  %3152 = vmatmul.mubr.bf16.gmra.mxu0 %v3085
  %v3153 = vpop.f32.mrf.mxu0
  %v3154 = vadd.f32 0.0, %v3153
  %v3155 = vpop.f32.mrf.mxu0
  %v3156 = vadd.f32 0.0, %v3155
  %v3157 = vpop.f32.mrf.mxu0
  %v3158 = vadd.f32 0.0, %v3157
  %v3159 = vpop.f32.mrf.mxu0
  %v3160 = vadd.f32 0.0, %v3159
  %3161 = vmatprep.mubr.bf16.mxu0 0
  %3162 = vmatmul.mubr.bf16.gmra.mxu0 %v3088
  %v3163 = vpop.f32.mrf.mxu0
  %v3164 = vadd.f32 0.0, %v3163
  %v3165 = vpop.f32.mrf.mxu0
  %v3166 = vadd.f32 0.0, %v3165
  %v3167 = vpop.f32.mrf.mxu0
  %v3168 = vadd.f32 0.0, %v3167
  %v3169 = vpop.f32.mrf.mxu0
  %v3170 = vadd.f32 0.0, %v3169
  %3171 = vmatprep.mubr.bf16.mxu0 0
  %3172 = vmatmul.mubr.bf16.gmra.mxu0 %v3091
  %v3173 = vpop.f32.mrf.mxu0
  %v3174 = vadd.f32 0.0, %v3173
  %v3175 = vpop.f32.mrf.mxu0
  %v3176 = vadd.f32 0.0, %v3175
  %v3177 = vpop.f32.mrf.mxu0
  %v3178 = vadd.f32 0.0, %v3177
  %v3179 = vpop.f32.mrf.mxu0
  %v3180 = vadd.f32 0.0, %v3179
  %3181 = vdwg.mxu0
  %v3182 = vadd.f32 %v2976, %v3134
  %v3183 = vadd.f32 %v2977, %v3136
  %v3184 = vadd.f32 %v2978, %v3138
  %v3185 = vadd.f32 %v2979, %v3140
  %v3186 = vadd.f32 %v2980, %v3144
  %v3187 = vadd.f32 %v2981, %v3146
  %v3188 = vadd.f32 %v2982, %v3148
  %v3189 = vadd.f32 %v2983, %v3150
  %v3190 = vadd.f32 %v2984, %v3154
  %v3191 = vadd.f32 %v2985, %v3156
  %v3192 = vadd.f32 %v2986, %v3158
  %v3193 = vadd.f32 %v2987, %v3160
  %v3194 = vadd.f32 %v2988, %v3164
  %v3195 = vadd.f32 %v2989, %v3166
  %v3196 = vadd.f32 %v2990, %v3168
  %v3197 = vadd.f32 %v2991, %v3170
  %v3198 = vadd.f32 %v2992, %v3174
  %v3199 = vadd.f32 %v2993, %v3176
  %v3200 = vadd.f32 %v2994, %v3178
  %v3201 = vadd.f32 %v2995, %v3180
  %v3202 = vld [vmem:[#allocation3 + $0x20] sm:$0xff]
  %v3203 = vld [vmem:[#allocation3 + $0x28] sm:$0xff]
  %v3204 = vld [vmem:[#allocation3 + $0x30] sm:$0xff]
  %v3205 = vld [vmem:[#allocation3 + $0x38] sm:$0xff]
  %v3206 = vld [vmem:[#allocation3 + $0x40] sm:$0xff]
  %v3207 = vld [vmem:[#allocation3 + $0x48] sm:$0xff]
  %v3208 = vld [vmem:[#allocation3 + $0x50] sm:$0xff]
  %v3209 = vld [vmem:[#allocation3 + $0x58] sm:$0xff]
  %v3210 = vld [vmem:[#allocation3 + $0x60] sm:$0xff]
  %v3211 = vld [vmem:[#allocation3 + $0x68] sm:$0xff]
  %s3212 = scalar_lea.vmem %s5, 352
  %v3213 = vld [vmem:[%s3212] sm:$0xff]
  %v3214 = vld [vmem:[%s3212 + $0x8] sm:$0xff]
  %v3215 = vld [vmem:[%s3212 + $0x10] sm:$0xff]
  %v3216 = vld [vmem:[%s3212 + $0x18] sm:$0xff]
  %v3217 = vld [vmem:[%s3212 + $0x20] sm:$0xff]
  %v3218 = vld [vmem:[%s3212 + $0x28] sm:$0xff]
  %v3219 = vld [vmem:[%s3212 + $0x30] sm:$0xff]
  %v3220 = vld [vmem:[%s3212 + $0x38] sm:$0xff]
  %v3221 = vld [vmem:[%s3212 + $0x40] sm:$0xff]
  %v3222 = vld [vmem:[%s3212 + $0x48] sm:$0xff]
  %v3223 = vld [vmem:[%s3212 + $0x50] sm:$0x33]
  %v3224 = vpack.c.bf16 %v3203, %v3202
  %v3225 = vpack.c.bf16 %v3205, %v3204
  %v3226 = vpack.c.bf16 %v3207, %v3206
  %v3227 = vpack.c.bf16 %v3209, %v3208
  %v3228 = vpack.c.bf16 %v3211, %v3210
  %v3240 = vunpack.c.l.b16 %v3213
  %v3241 = vunpack.c.h.b16 %v3213
  %v3242 = vunpack.c.l.b16 %v3214
  %v3243 = vunpack.c.h.b16 %v3214
  %v3244 = vunpack.c.l.b16 %v3215
  %v3245 = vunpack.c.h.b16 %v3215
  %v3246 = vunpack.c.l.b16 %v3216
  %v3247 = vunpack.c.h.b16 %v3216
  %v3248 = vunpack.c.l.b16 %v3217
  %v3249 = vunpack.c.h.b16 %v3217
  %v3250 = vunpack.c.l.b16 %v3218
  %v3251 = vunpack.c.h.b16 %v3218
  %v3252 = vunpack.c.l.b16 %v3219
  %v3253 = vunpack.c.h.b16 %v3219
  %v3254 = vunpack.c.l.b16 %v3220
  %v3255 = vunpack.c.h.b16 %v3220
  %v3256 = vunpack.c.l.b16 %v3221
  %v3257 = vunpack.c.h.b16 %v3221
  %v3258 = vunpack.c.l.b16 %v3222
  %v3259 = vunpack.c.h.b16 %v3222
  %v3260 = vunpack.c.l.b16 %v3223
  %v3261 = vunpack.c.h.b16 %v3223
  %v3262 = vpack.c.b16 %v3242, %v3240
  %v3263 = vpack.c.b16 %v3243, %v3241
  %v3264 = vpack.c.b16 %v3246, %v3244
  %v3265 = vpack.c.b16 %v3247, %v3245
  %v3266 = vpack.c.b16 %v3250, %v3248
  %v3267 = vpack.c.b16 %v3251, %v3249
  %v3268 = vpack.c.b16 %v3254, %v3252
  %v3269 = vpack.c.b16 %v3255, %v3253
  %v3270 = vpack.c.b16 %v3258, %v3256
  %v3271 = vpack.c.b16 %v3259, %v3257
  %v3272 = vpack.c.b16 %v3260, %v3260
  %v3273 = vpack.c.b16 %v3261, %v3261
  %v3285 = vsel %vm2399, %v3224, 0
  %v3288 = vsel %vm2399, %v3225, 0
  %v3291 = vsel %vm2399, %v3226, 0
  %v3294 = vsel %vm2399, %v3227, 0
  %v3297 = vsel %vm2399, %v3228, 0
  %v3300 = vsel %vm2541, %v3272, 0
  %v3303 = vsel %vm2541, %v3273, 0
  %3305 = vmatprep.subr.bf16.mxu0 0
  %3306 = vmatpush1.bf16.msra.mxu0 0
  %3307 = vmatprep.subr.bf16.mxu0 0
  %3308 = vmatpush1.bf16.msra.mxu0 0
  %3309 = vmatprep.subr.bf16.mxu0 %v3303
  %3310 = vmatpush1.bf16.msra.mxu0 %v3300
  %3311 = vmatprep.subr.bf16.mxu0 %v3271
  %3312 = vmatpush1.bf16.msra.mxu0 %v3270
  %3313 = vmatprep.subr.bf16.mxu0 %v3269
  %3314 = vmatpush1.bf16.msra.mxu0 %v3268
  %3315 = vmatprep.subr.bf16.mxu0 %v3267
  %3316 = vmatpush1.bf16.msra.mxu0 %v3266
  %3317 = vmatprep.subr.bf16.mxu0 %v3265
  %3318 = vmatpush1.bf16.msra.mxu0 %v3264
  %3319 = vmatprep.subr.bf16.mxu0 %v3263
  %3320 = vmatpush1.bf16.msra.mxu0 %v3262
  %3321 = vmatprep.subr.bf16.mxu0 0
  %3322 = vmatpush2.bf16.msra.mxu0 0
  %3323 = vmatprep.subr.bf16.mxu0 0
  %3324 = vmatpush2.bf16.msra.mxu0 0
  %3325 = vmatprep.subr.bf16.mxu0 0
  %3326 = vmatpush2.bf16.msra.mxu0 0
  %3327 = vmatprep.subr.bf16.mxu0 0
  %3328 = vmatpush2.bf16.msra.mxu0 0
  %3329 = vmatprep.subr.bf16.mxu0 0
  %3330 = vmatpush2.bf16.msra.mxu0 0
  %3331 = vmatprep.subr.bf16.mxu0 0
  %3332 = vmatpush2.bf16.msra.mxu0 0
  %3333 = vmatprep.subr.bf16.mxu0 0
  %3334 = vmatpush2.bf16.msra.mxu0 0
  %3335 = vmatprep.subr.bf16.mxu0 0
  %3336 = vmatpush2.bf16.msra.mxu0 0
  %3337 = vmatprep.mubr.bf16.mxu0 0
  %3338 = vmatmul.mubr.bf16.gmra.mxu0 %v3285
  %v3339 = vpop.f32.mrf.mxu0
  %v3340 = vadd.f32 0.0, %v3339
  %v3341 = vpop.f32.mrf.mxu0
  %v3342 = vadd.f32 0.0, %v3341
  %v3343 = vpop.f32.mrf.mxu0
  %v3344 = vadd.f32 0.0, %v3343
  %v3345 = vpop.f32.mrf.mxu0
  %v3346 = vadd.f32 0.0, %v3345
  %3347 = vmatprep.mubr.bf16.mxu0 0
  %3348 = vmatmul.mubr.bf16.gmra.mxu0 %v3288
  %v3349 = vpop.f32.mrf.mxu0
  %v3350 = vadd.f32 0.0, %v3349
  %v3351 = vpop.f32.mrf.mxu0
  %v3352 = vadd.f32 0.0, %v3351
  %v3353 = vpop.f32.mrf.mxu0
  %v3354 = vadd.f32 0.0, %v3353
  %v3355 = vpop.f32.mrf.mxu0
  %v3356 = vadd.f32 0.0, %v3355
  %3357 = vmatprep.mubr.bf16.mxu0 0
  %3358 = vmatmul.mubr.bf16.gmra.mxu0 %v3291
  %v3359 = vpop.f32.mrf.mxu0
  %v3360 = vadd.f32 0.0, %v3359
  %v3361 = vpop.f32.mrf.mxu0
  %v3362 = vadd.f32 0.0, %v3361
  %v3363 = vpop.f32.mrf.mxu0
  %v3364 = vadd.f32 0.0, %v3363
  %v3365 = vpop.f32.mrf.mxu0
  %v3366 = vadd.f32 0.0, %v3365
  %3367 = vmatprep.mubr.bf16.mxu0 0
  %3368 = vmatmul.mubr.bf16.gmra.mxu0 %v3294
  %v3369 = vpop.f32.mrf.mxu0
  %v3370 = vadd.f32 0.0, %v3369
  %v3371 = vpop.f32.mrf.mxu0
  %v3372 = vadd.f32 0.0, %v3371
  %v3373 = vpop.f32.mrf.mxu0
  %v3374 = vadd.f32 0.0, %v3373
  %v3375 = vpop.f32.mrf.mxu0
  %v3376 = vadd.f32 0.0, %v3375
  %3377 = vmatprep.mubr.bf16.mxu0 0
  %3378 = vmatmul.mubr.bf16.gmra.mxu0 %v3297
  %v3379 = vpop.f32.mrf.mxu0
  %v3380 = vadd.f32 0.0, %v3379
  %v3381 = vpop.f32.mrf.mxu0
  %v3382 = vadd.f32 0.0, %v3381
  %v3383 = vpop.f32.mrf.mxu0
  %v3384 = vadd.f32 0.0, %v3383
  %v3385 = vpop.f32.mrf.mxu0
  %v3386 = vadd.f32 0.0, %v3385
  %3387 = vdwg.mxu0
  %v3388 = vadd.f32 %v3182, %v3340
  %v3389 = vadd.f32 %v3183, %v3342
  %v3390 = vadd.f32 %v3184, %v3344
  %v3391 = vadd.f32 %v3185, %v3346
  %v3392 = vadd.f32 %v3186, %v3350
  %v3393 = vadd.f32 %v3187, %v3352
  %v3394 = vadd.f32 %v3188, %v3354
  %v3395 = vadd.f32 %v3189, %v3356
  %v3396 = vadd.f32 %v3190, %v3360
  %v3397 = vadd.f32 %v3191, %v3362
  %v3398 = vadd.f32 %v3192, %v3364
  %v3399 = vadd.f32 %v3193, %v3366
  %v3400 = vadd.f32 %v3194, %v3370
  %v3401 = vadd.f32 %v3195, %v3372
  %v3402 = vadd.f32 %v3196, %v3374
  %v3403 = vadd.f32 %v3197, %v3376
  %v3404 = vadd.f32 %v3198, %v3380
  %v3405 = vadd.f32 %v3199, %v3382
  %v3406 = vadd.f32 %v3200, %v3384
  %v3407 = vadd.f32 %v3201, %v3386
  %v3408 = vld [vmem:[%s6] sm:$0x3]
  %v3410 = vlaneseq
  %v3411 = vshrl.u32 %v3410, 7
  %v3412 = vsub.s32 0, %v3411
  %v3413 = vrot.slane %v3408, %v3412
  %v3414 = vlaneseq
  %v3415 = vshrl.u32 %v3414, 7
  %v3416 = vsub.s32 1, %v3415
  %v3417 = vrot.slane %v3408, %v3416
  %v3420 = vadd.f32 %v3388, %v3413
  %v3421 = vadd.f32 %v3389, %v3417
  %v3422 = vadd.f32 %v3390, %v3413
  %v3423 = vadd.f32 %v3391, %v3417
  %v3424 = vadd.f32 %v3392, %v3413
  %v3425 = vadd.f32 %v3393, %v3417
  %v3426 = vadd.f32 %v3394, %v3413
  %v3427 = vadd.f32 %v3395, %v3417
  %v3428 = vadd.f32 %v3396, %v3413
  %v3429 = vadd.f32 %v3397, %v3417
  %v3430 = vadd.f32 %v3398, %v3413
  %v3431 = vadd.f32 %v3399, %v3417
  %v3432 = vadd.f32 %v3400, %v3413
  %v3433 = vadd.f32 %v3401, %v3417
  %v3434 = vadd.f32 %v3402, %v3413
  %v3435 = vadd.f32 %v3403, %v3417
  %v3436 = vadd.f32 %v3404, %v3413
  %v3437 = vadd.f32 %v3405, %v3417
  %v3438 = vadd.f32 %v3406, %v3413
  %v3439 = vadd.f32 %v3407, %v3417
  %v3440 = vmax.f32 %v3420, 0.0
  %v3441 = vmax.f32 %v3421, 0.0
  %v3442 = vmax.f32 %v3422, 0.0
  %v3443 = vmax.f32 %v3423, 0.0
  %v3444 = vmax.f32 %v3424, 0.0
  %v3445 = vmax.f32 %v3425, 0.0
  %v3446 = vmax.f32 %v3426, 0.0
  %v3447 = vmax.f32 %v3427, 0.0
  %v3448 = vmax.f32 %v3428, 0.0
  %v3449 = vmax.f32 %v3429, 0.0
  %v3450 = vmax.f32 %v3430, 0.0
  %v3451 = vmax.f32 %v3431, 0.0
  %v3452 = vmax.f32 %v3432, 0.0
  %v3453 = vmax.f32 %v3433, 0.0
  %v3454 = vmax.f32 %v3434, 0.0
  %v3455 = vmax.f32 %v3435, 0.0
  %v3456 = vmax.f32 %v3436, 0.0
  %v3457 = vmax.f32 %v3437, 0.0
  %v3458 = vmax.f32 %v3438, 0.0
  %v3459 = vmax.f32 %v3439, 0.0
  %v3460 = vld [vmem:[%s7] sm:$0xf]
  %v3461 = vld [vmem:[%s7 + $0x4] sm:$0xf]
  %v3462 = vld [vmem:[%s7 + $0x8] sm:$0xf]
  %v3463 = vld [vmem:[%s7 + $0xc] sm:$0xf]
  %v3464 = vld [vmem:[%s7 + $0x10] sm:$0xf]
  %v3465 = vld [vmem:[%s7 + $0x14] sm:$0xf]
  %v3466 = vld [vmem:[%s7 + $0x18] sm:$0xf]
  %v3467 = vld [vmem:[%s7 + $0x1c] sm:$0xf]
  %v3468 = vld [vmem:[%s7 + $0x20] sm:$0xf]
  %v3469 = vld [vmem:[%s7 + $0x24] sm:$0xf]
  %v3470 = vld [vmem:[%s7 + $0x28] sm:$0xf]
  %v3471 = vld [vmem:[%s7 + $0x2c] sm:$0xf]
  %v3472 = vld [vmem:[%s7 + $0x30] sm:$0xf]
  %v3473 = vld [vmem:[%s7 + $0x34] sm:$0xf]
  %v3474 = vld [vmem:[%s7 + $0x38] sm:$0xf]
  %v3475 = vld [vmem:[%s7 + $0x3c] sm:$0xf]
  %v3476 = vld [vmem:[%s7 + $0x40] sm:$0xf]
  %v3477 = vld [vmem:[%s7 + $0x44] sm:$0xf]
  %v3478 = vld [vmem:[%s7 + $0x48] sm:$0xf]
  %v3479 = vld [vmem:[%s7 + $0x4c] sm:$0xf]
  %v3480 = vpack.c.bf16 %v3442, %v3440
  %v3481 = vpack.c.bf16 %v3443, %v3441
  %v3482 = vpack.c.bf16 %v3446, %v3444
  %v3483 = vpack.c.bf16 %v3447, %v3445
  %v3484 = vpack.c.bf16 %v3450, %v3448
  %v3485 = vpack.c.bf16 %v3451, %v3449
  %v3486 = vpack.c.bf16 %v3454, %v3452
  %v3487 = vpack.c.bf16 %v3455, %v3453
  %v3488 = vpack.c.bf16 %v3458, %v3456
  %v3489 = vpack.c.bf16 %v3459, %v3457
  %v3510 = vunpack.c.l.b16 %v3460
  %v3511 = vunpack.c.l.b16 %v3461
  %v3512 = vunpack.c.l.b16 %v3462
  %v3513 = vunpack.c.l.b16 %v3463
  %v3514 = vunpack.c.l.b16 %v3464
  %v3515 = vunpack.c.l.b16 %v3465
  %v3516 = vunpack.c.l.b16 %v3466
  %v3517 = vunpack.c.l.b16 %v3467
  %v3518 = vunpack.c.l.b16 %v3468
  %v3519 = vunpack.c.l.b16 %v3469
  %v3520 = vunpack.c.l.b16 %v3470
  %v3521 = vunpack.c.l.b16 %v3471
  %v3522 = vunpack.c.l.b16 %v3472
  %v3523 = vunpack.c.l.b16 %v3473
  %v3524 = vunpack.c.l.b16 %v3474
  %v3525 = vunpack.c.l.b16 %v3475
  %v3526 = vunpack.c.l.b16 %v3476
  %v3527 = vunpack.c.l.b16 %v3477
  %v3528 = vunpack.c.l.b16 %v3478
  %v3529 = vunpack.c.l.b16 %v3479
  %v3530 = vpack.c.b16 %v3511, %v3510
  %v3531 = vpack.c.b16 %v3513, %v3512
  %v3532 = vpack.c.b16 %v3515, %v3514
  %v3533 = vpack.c.b16 %v3517, %v3516
  %v3534 = vpack.c.b16 %v3519, %v3518
  %v3535 = vpack.c.b16 %v3521, %v3520
  %v3536 = vpack.c.b16 %v3523, %v3522
  %v3537 = vpack.c.b16 %v3525, %v3524
  %v3538 = vpack.c.b16 %v3527, %v3526
  %v3539 = vpack.c.b16 %v3529, %v3528
  %vm3550 = vcmask 261120
  %v3552 = vsel %vm3550, %v3481, 0
  %v3555 = vsel %vm3550, %v3483, 0
  %v3558 = vsel %vm3550, %v3485, 0
  %v3561 = vsel %vm3550, %v3487, 0
  %v3564 = vsel %vm3550, %v3489, 0
  %3566 = vmatprep.subr.bf16.mxu0 0
  %3567 = vmatpush1.bf16.msra.mxu0 %v3537
  %3568 = vmatprep.subr.bf16.mxu0 0
  %3569 = vmatpush1.bf16.msra.mxu0 %v3536
  %3570 = vmatprep.subr.bf16.mxu0 0
  %3571 = vmatpush1.bf16.msra.mxu0 %v3535
  %3572 = vmatprep.subr.bf16.mxu0 0
  %3573 = vmatpush1.bf16.msra.mxu0 %v3534
  %3574 = vmatprep.subr.bf16.mxu0 0
  %3575 = vmatpush1.bf16.msra.mxu0 %v3533
  %3576 = vmatprep.subr.bf16.mxu0 0
  %3577 = vmatpush1.bf16.msra.mxu0 %v3532
  %3578 = vmatprep.subr.bf16.mxu0 0
  %3579 = vmatpush1.bf16.msra.mxu0 %v3531
  %3580 = vmatprep.subr.bf16.mxu0 0
  %3581 = vmatpush1.bf16.msra.mxu0 %v3530
  %3582 = vmatprep.subr.bf16.mxu0 0
  %3583 = vmatpush2.bf16.msra.mxu0 0
  %3584 = vmatprep.subr.bf16.mxu0 0
  %3585 = vmatpush2.bf16.msra.mxu0 0
  %3586 = vmatprep.subr.bf16.mxu0 0
  %3587 = vmatpush2.bf16.msra.mxu0 0
  %3588 = vmatprep.subr.bf16.mxu0 0
  %3589 = vmatpush2.bf16.msra.mxu0 0
  %3590 = vmatprep.subr.bf16.mxu0 0
  %3591 = vmatpush2.bf16.msra.mxu0 0
  %3592 = vmatprep.subr.bf16.mxu0 0
  %3593 = vmatpush2.bf16.msra.mxu0 0
  %3594 = vmatprep.subr.bf16.mxu0 0
  %3595 = vmatpush2.bf16.msra.mxu0 %v3539
  %3596 = vmatprep.subr.bf16.mxu0 0
  %3597 = vmatpush2.bf16.msra.mxu0 %v3538
  %3598 = vmatprep.mubr.bf16.mxu0 %v3552
  %3599 = vmatmul.mubr.bf16.gmra.mxu0 %v3480
  %v3600 = vpop.f32.mrf.mxu0
  %v3601 = vadd.f32 0.0, %v3600
  %v3602 = vpop.f32.mrf.mxu0
  %v3603 = vpop.f32.mrf.mxu0
  %v3604 = vadd.f32 0.0, %v3603
  %v3605 = vpop.f32.mrf.mxu0
  %3606 = vmatprep.mubr.bf16.mxu0 %v3555
  %3607 = vmatmul.mubr.bf16.gmra.mxu0 %v3482
  %v3608 = vpop.f32.mrf.mxu0
  %v3609 = vadd.f32 0.0, %v3608
  %v3610 = vpop.f32.mrf.mxu0
  %v3611 = vpop.f32.mrf.mxu0
  %v3612 = vadd.f32 0.0, %v3611
  %v3613 = vpop.f32.mrf.mxu0
  %3614 = vmatprep.mubr.bf16.mxu0 %v3558
  %3615 = vmatmul.mubr.bf16.gmra.mxu0 %v3484
  %v3616 = vpop.f32.mrf.mxu0
  %v3617 = vadd.f32 0.0, %v3616
  %v3618 = vpop.f32.mrf.mxu0
  %v3619 = vpop.f32.mrf.mxu0
  %v3620 = vadd.f32 0.0, %v3619
  %v3621 = vpop.f32.mrf.mxu0
  %3622 = vmatprep.mubr.bf16.mxu0 %v3561
  %3623 = vmatmul.mubr.bf16.gmra.mxu0 %v3486
  %v3624 = vpop.f32.mrf.mxu0
  %v3625 = vadd.f32 0.0, %v3624
  %v3626 = vpop.f32.mrf.mxu0
  %v3627 = vpop.f32.mrf.mxu0
  %v3628 = vadd.f32 0.0, %v3627
  %v3629 = vpop.f32.mrf.mxu0
  %3630 = vmatprep.mubr.bf16.mxu0 %v3564
  %3631 = vmatmul.mubr.bf16.gmra.mxu0 %v3488
  %v3632 = vpop.f32.mrf.mxu0
  %v3633 = vadd.f32 0.0, %v3632
  %v3634 = vpop.f32.mrf.mxu0
  %v3635 = vpop.f32.mrf.mxu0
  %v3636 = vadd.f32 0.0, %v3635
  %v3637 = vpop.f32.mrf.mxu0
  %3638 = vdwg.mxu0
  %v3639 = vld [vmem:[%s8] sm:$0xf]
  %v3640 = vld [vmem:[%s8 + $0x4] sm:$0xf]
  %v3641 = vld [vmem:[%s8 + $0x8] sm:$0xf]
  %v3642 = vld [vmem:[%s8 + $0xc] sm:$0xf]
  %v3643 = vld [vmem:[%s8 + $0x10] sm:$0xf]
  %v3644 = vld [vmem:[%s8 + $0x14] sm:$0xf]
  %v3645 = vld [vmem:[%s8 + $0x18] sm:$0xf]
  %v3646 = vld [vmem:[%s8 + $0x1c] sm:$0xf]
  %v3647 = vld [vmem:[%s8 + $0x20] sm:$0xf]
  %v3648 = vld [vmem:[%s8 + $0x24] sm:$0xf]
  %v3649 = vld [vmem:[%s8 + $0x28] sm:$0xf]
  %v3650 = vld [vmem:[%s8 + $0x2c] sm:$0xf]
  %v3651 = vld [vmem:[%s8 + $0x30] sm:$0xf]
  %v3652 = vld [vmem:[%s8 + $0x34] sm:$0xf]
  %v3653 = vld [vmem:[%s8 + $0x38] sm:$0xf]
  %v3654 = vld [vmem:[%s8 + $0x3c] sm:$0xf]
  %v3655 = vld [vmem:[%s8 + $0x40] sm:$0xf]
  %v3656 = vld [vmem:[%s8 + $0x44] sm:$0xf]
  %v3657 = vld [vmem:[%s8 + $0x48] sm:$0xf]
  %v3658 = vld [vmem:[%s8 + $0x4c] sm:$0xf]
  %v3679 = vunpack.c.l.b16 %v3639
  %v3680 = vunpack.c.l.b16 %v3640
  %v3681 = vunpack.c.l.b16 %v3641
  %v3682 = vunpack.c.l.b16 %v3642
  %v3683 = vunpack.c.l.b16 %v3643
  %v3684 = vunpack.c.l.b16 %v3644
  %v3685 = vunpack.c.l.b16 %v3645
  %v3686 = vunpack.c.l.b16 %v3646
  %v3687 = vunpack.c.l.b16 %v3647
  %v3688 = vunpack.c.l.b16 %v3648
  %v3689 = vunpack.c.l.b16 %v3649
  %v3690 = vunpack.c.l.b16 %v3650
  %v3691 = vunpack.c.l.b16 %v3651
  %v3692 = vunpack.c.l.b16 %v3652
  %v3693 = vunpack.c.l.b16 %v3653
  %v3694 = vunpack.c.l.b16 %v3654
  %v3695 = vunpack.c.l.b16 %v3655
  %v3696 = vunpack.c.l.b16 %v3656
  %v3697 = vunpack.c.l.b16 %v3657
  %v3698 = vunpack.c.l.b16 %v3658
  %v3699 = vpack.c.b16 %v3680, %v3679
  %v3700 = vpack.c.b16 %v3682, %v3681
  %v3701 = vpack.c.b16 %v3684, %v3683
  %v3702 = vpack.c.b16 %v3686, %v3685
  %v3703 = vpack.c.b16 %v3688, %v3687
  %v3704 = vpack.c.b16 %v3690, %v3689
  %v3705 = vpack.c.b16 %v3692, %v3691
  %v3706 = vpack.c.b16 %v3694, %v3693
  %v3707 = vpack.c.b16 %v3696, %v3695
  %v3708 = vpack.c.b16 %v3698, %v3697
  %3719 = vmatprep.subr.bf16.mxu0 0
  %3720 = vmatpush1.bf16.msra.mxu0 %v3706
  %3721 = vmatprep.subr.bf16.mxu0 0
  %3722 = vmatpush1.bf16.msra.mxu0 %v3705
  %3723 = vmatprep.subr.bf16.mxu0 0
  %3724 = vmatpush1.bf16.msra.mxu0 %v3704
  %3725 = vmatprep.subr.bf16.mxu0 0
  %3726 = vmatpush1.bf16.msra.mxu0 %v3703
  %3727 = vmatprep.subr.bf16.mxu0 0
  %3728 = vmatpush1.bf16.msra.mxu0 %v3702
  %3729 = vmatprep.subr.bf16.mxu0 0
  %3730 = vmatpush1.bf16.msra.mxu0 %v3701
  %3731 = vmatprep.subr.bf16.mxu0 0
  %3732 = vmatpush1.bf16.msra.mxu0 %v3700
  %3733 = vmatprep.subr.bf16.mxu0 0
  %3734 = vmatpush1.bf16.msra.mxu0 %v3699
  %3735 = vmatprep.subr.bf16.mxu0 0
  %3736 = vmatpush2.bf16.msra.mxu0 0
  %3737 = vmatprep.subr.bf16.mxu0 0
  %3738 = vmatpush2.bf16.msra.mxu0 0
  %3739 = vmatprep.subr.bf16.mxu0 0
  %3740 = vmatpush2.bf16.msra.mxu0 0
  %3741 = vmatprep.subr.bf16.mxu0 0
  %3742 = vmatpush2.bf16.msra.mxu0 0
  %3743 = vmatprep.subr.bf16.mxu0 0
  %3744 = vmatpush2.bf16.msra.mxu0 0
  %3745 = vmatprep.subr.bf16.mxu0 0
  %3746 = vmatpush2.bf16.msra.mxu0 0
  %3747 = vmatprep.subr.bf16.mxu0 0
  %3748 = vmatpush2.bf16.msra.mxu0 %v3708
  %3749 = vmatprep.subr.bf16.mxu0 0
  %3750 = vmatpush2.bf16.msra.mxu0 %v3707
  %3751 = vmatprep.mubr.bf16.mxu0 %v3552
  %3752 = vmatmul.mubr.bf16.gmra.mxu0 %v3480
  %v3753 = vpop.f32.mrf.mxu0
  %v3754 = vadd.f32 0.0, %v3753
  %v3755 = vpop.f32.mrf.mxu0
  %v3756 = vpop.f32.mrf.mxu0
  %v3757 = vadd.f32 0.0, %v3756
  %v3758 = vpop.f32.mrf.mxu0
  %3759 = vmatprep.mubr.bf16.mxu0 %v3555
  %3760 = vmatmul.mubr.bf16.gmra.mxu0 %v3482
  %v3761 = vpop.f32.mrf.mxu0
  %v3762 = vadd.f32 0.0, %v3761
  %v3763 = vpop.f32.mrf.mxu0
  %v3764 = vpop.f32.mrf.mxu0
  %v3765 = vadd.f32 0.0, %v3764
  %v3766 = vpop.f32.mrf.mxu0
  %3767 = vmatprep.mubr.bf16.mxu0 %v3558
  %3768 = vmatmul.mubr.bf16.gmra.mxu0 %v3484
  %v3769 = vpop.f32.mrf.mxu0
  %v3770 = vadd.f32 0.0, %v3769
  %v3771 = vpop.f32.mrf.mxu0
  %v3772 = vpop.f32.mrf.mxu0
  %v3773 = vadd.f32 0.0, %v3772
  %v3774 = vpop.f32.mrf.mxu0
  %3775 = vmatprep.mubr.bf16.mxu0 %v3561
  %3776 = vmatmul.mubr.bf16.gmra.mxu0 %v3486
  %v3777 = vpop.f32.mrf.mxu0
  %v3778 = vadd.f32 0.0, %v3777
  %v3779 = vpop.f32.mrf.mxu0
  %v3780 = vpop.f32.mrf.mxu0
  %v3781 = vadd.f32 0.0, %v3780
  %v3782 = vpop.f32.mrf.mxu0
  %3783 = vmatprep.mubr.bf16.mxu0 %v3564
  %3784 = vmatmul.mubr.bf16.gmra.mxu0 %v3488
  %v3785 = vpop.f32.mrf.mxu0
  %v3786 = vadd.f32 0.0, %v3785
  %v3787 = vpop.f32.mrf.mxu0
  %v3788 = vpop.f32.mrf.mxu0
  %v3789 = vadd.f32 0.0, %v3788
  %v3790 = vpop.f32.mrf.mxu0
  %3791 = vdwg.mxu0
  %v3792 = vmax.f32 %v3601, %v3754
  %v3793 = vmax.f32 %v3604, %v3757
  %v3794 = vmax.f32 %v3609, %v3762
  %v3795 = vmax.f32 %v3612, %v3765
  %v3796 = vmax.f32 %v3617, %v3770
  %v3797 = vmax.f32 %v3620, %v3773
  %v3798 = vmax.f32 %v3625, %v3778
  %v3799 = vmax.f32 %v3628, %v3781
  %v3800 = vmax.f32 %v3633, %v3786
  %v3801 = vmax.f32 %v3636, %v3789
  %v3802 = vmax.f32 %v3792, %v3793
  %v3803 = vld [vmem:[%s9] sm:$0xf]
  %v3804 = vld [vmem:[%s9 + $0x4] sm:$0xf]
  %v3805 = vld [vmem:[%s9 + $0x8] sm:$0xf]
  %v3806 = vld [vmem:[%s9 + $0xc] sm:$0xf]
  %v3807 = vld [vmem:[%s9 + $0x10] sm:$0xf]
  %v3808 = vld [vmem:[%s9 + $0x14] sm:$0xf]
  %v3809 = vld [vmem:[%s9 + $0x18] sm:$0xf]
  %v3810 = vld [vmem:[%s9 + $0x1c] sm:$0xf]
  %v3811 = vld [vmem:[%s9 + $0x20] sm:$0xf]
  %v3812 = vld [vmem:[%s9 + $0x24] sm:$0xf]
  %v3813 = vpack.c.bf16 %v3802, %v3802
  %v3814 = vmax.f32 %v3794, %v3795
  %s3815 = scalar_lea.vmem %s9, 40
  %v3816 = vld [vmem:[%s3815] sm:$0xf]
  %v3817 = vld [vmem:[%s3815 + $0x4] sm:$0xf]
  %v3818 = vld [vmem:[%s3815 + $0x8] sm:$0xf]
  %v3819 = vld [vmem:[%s3815 + $0xc] sm:$0xf]
  %v3820 = vld [vmem:[%s3815 + $0x10] sm:$0xf]
  %v3821 = vld [vmem:[%s3815 + $0x14] sm:$0xf]
  %v3822 = vld [vmem:[%s3815 + $0x18] sm:$0xf]
  %v3823 = vld [vmem:[%s3815 + $0x1c] sm:$0xf]
  %v3824 = vld [vmem:[%s3815 + $0x20] sm:$0xf]
  %v3825 = vld [vmem:[%s3815 + $0x24] sm:$0xf]
  %v3826 = vpack.c.bf16 %v3814, %v3814
  %v3837 = vunpack.c.l.b16 %v3816
  %v3838 = vunpack.c.l.b16 %v3817
  %v3839 = vunpack.c.l.b16 %v3818
  %v3840 = vunpack.c.l.b16 %v3819
  %v3841 = vunpack.c.l.b16 %v3820
  %v3842 = vunpack.c.l.b16 %v3821
  %v3843 = vunpack.c.l.b16 %v3822
  %v3844 = vunpack.c.l.b16 %v3823
  %v3845 = vunpack.c.l.b16 %v3824
  %v3846 = vunpack.c.l.b16 %v3825
  %v3847 = vpack.c.b16 %v3838, %v3837
  %v3848 = vpack.c.b16 %v3840, %v3839
  %v3849 = vpack.c.b16 %v3842, %v3841
  %v3850 = vpack.c.b16 %v3844, %v3843
  %v3851 = vpack.c.b16 %v3846, %v3845
  %vm3857 = vcmask 654336
  %v3859 = vsel %vm3857, %v3826, 0
  %3861 = vmatprep.subr.bf16.mxu0 0
  %3862 = vmatpush1.bf16.msra.mxu0 0
  %3863 = vmatprep.subr.bf16.mxu0 0
  %3864 = vmatpush1.bf16.msra.mxu0 0
  %3865 = vmatprep.subr.bf16.mxu0 0
  %3866 = vmatpush1.bf16.msra.mxu0 0
  %3867 = vmatprep.subr.bf16.mxu0 0
  %3868 = vmatpush1.bf16.msra.mxu0 %v3851
  %3869 = vmatprep.subr.bf16.mxu0 0
  %3870 = vmatpush1.bf16.msra.mxu0 %v3850
  %3871 = vmatprep.subr.bf16.mxu0 0
  %3872 = vmatpush1.bf16.msra.mxu0 %v3849
  %3873 = vmatprep.subr.bf16.mxu0 0
  %3874 = vmatpush1.bf16.msra.mxu0 %v3848
  %3875 = vmatprep.subr.bf16.mxu0 0
  %3876 = vmatpush1.bf16.msra.mxu0 %v3847
  %3877 = vmatprep.subr.bf16.mxu0 0
  %3878 = vmatpush2.bf16.msra.mxu0 0
  %3879 = vmatprep.subr.bf16.mxu0 0
  %3880 = vmatpush2.bf16.msra.mxu0 0
  %3881 = vmatprep.subr.bf16.mxu0 0
  %3882 = vmatpush2.bf16.msra.mxu0 0
  %3883 = vmatprep.subr.bf16.mxu0 0
  %3884 = vmatpush2.bf16.msra.mxu0 0
  %3885 = vmatprep.subr.bf16.mxu0 0
  %3886 = vmatpush2.bf16.msra.mxu0 0
  %3887 = vmatprep.subr.bf16.mxu0 0
  %3888 = vmatpush2.bf16.msra.mxu0 0
  %3889 = vmatprep.subr.bf16.mxu0 0
  %3890 = vmatpush2.bf16.msra.mxu0 0
  %3891 = vmatprep.subr.bf16.mxu0 0
  %3892 = vmatpush2.bf16.msra.mxu0 0
  %3893 = vmatprep.mubr.bf16.mxu0 0
  %3894 = vmatmul.mubr.bf16.gmra.mxu0 %v3859
  %v3895 = vpop.f32.mrf.mxu0
  %v3896 = vadd.f32 0.0, %v3895
  %v3897 = vpop.f32.mrf.mxu0
  %v3898 = vpop.f32.mrf.mxu0
  %v3899 = vpop.f32.mrf.mxu0
  %3900 = vdwg.mxu0
  %v3911 = vunpack.c.l.b16 %v3803
  %v3912 = vunpack.c.l.b16 %v3804
  %v3913 = vunpack.c.l.b16 %v3805
  %v3914 = vunpack.c.l.b16 %v3806
  %v3915 = vunpack.c.l.b16 %v3807
  %v3916 = vunpack.c.l.b16 %v3808
  %v3917 = vunpack.c.l.b16 %v3809
  %v3918 = vunpack.c.l.b16 %v3810
  %v3919 = vunpack.c.l.b16 %v3811
  %v3920 = vunpack.c.l.b16 %v3812
  %v3921 = vpack.c.b16 %v3912, %v3911
  %v3922 = vpack.c.b16 %v3914, %v3913
  %v3923 = vpack.c.b16 %v3916, %v3915
  %v3924 = vpack.c.b16 %v3918, %v3917
  %v3925 = vpack.c.b16 %v3920, %v3919
  %v3932 = vsel %vm3857, %v3813, 0
  %3934 = vmatprep.subr.bf16.mxu0 0
  %3935 = vmatpush1.bf16.msra.mxu0 0
  %3936 = vmatprep.subr.bf16.mxu0 0
  %3937 = vmatpush1.bf16.msra.mxu0 0
  %3938 = vmatprep.subr.bf16.mxu0 0
  %3939 = vmatpush1.bf16.msra.mxu0 0
  %3940 = vmatprep.subr.bf16.mxu0 0
  %3941 = vmatpush1.bf16.msra.mxu0 %v3925
  %3942 = vmatprep.subr.bf16.mxu0 0
  %3943 = vmatpush1.bf16.msra.mxu0 %v3924
  %3944 = vmatprep.subr.bf16.mxu0 0
  %3945 = vmatpush1.bf16.msra.mxu0 %v3923
  %3946 = vmatprep.subr.bf16.mxu0 0
  %3947 = vmatpush1.bf16.msra.mxu0 %v3922
  %3948 = vmatprep.subr.bf16.mxu0 0
  %3949 = vmatpush1.bf16.msra.mxu0 %v3921
  %3950 = vmatprep.subr.bf16.mxu0 0
  %3951 = vmatpush2.bf16.msra.mxu0 0
  %3952 = vmatprep.subr.bf16.mxu0 0
  %3953 = vmatpush2.bf16.msra.mxu0 0
  %3954 = vmatprep.subr.bf16.mxu0 0
  %3955 = vmatpush2.bf16.msra.mxu0 0
  %3956 = vmatprep.subr.bf16.mxu0 0
  %3957 = vmatpush2.bf16.msra.mxu0 0
  %3958 = vmatprep.subr.bf16.mxu0 0
  %3959 = vmatpush2.bf16.msra.mxu0 0
  %3960 = vmatprep.subr.bf16.mxu0 0
  %3961 = vmatpush2.bf16.msra.mxu0 0
  %3962 = vmatprep.subr.bf16.mxu0 0
  %3963 = vmatpush2.bf16.msra.mxu0 0
  %3964 = vmatprep.subr.bf16.mxu0 0
  %3965 = vmatpush2.bf16.msra.mxu0 0
  %3966 = vmatprep.mubr.bf16.mxu0 0
  %3967 = vmatmul.mubr.bf16.gmra.mxu0 %v3932
  %v3968 = vpop.f32.mrf.mxu0
  %v3969 = vadd.f32 %v3896, %v3968
  %v3970 = vpop.f32.mrf.mxu0
  %v3971 = vpop.f32.mrf.mxu0
  %v3972 = vpop.f32.mrf.mxu0
  %3973 = vdwg.mxu0
  %v3974 = vmax.f32 %v3796, %v3797
  %s3975 = scalar_lea.vmem %s9, 80
  %v3976 = vld [vmem:[%s3975] sm:$0xf]
  %v3977 = vld [vmem:[%s3975 + $0x4] sm:$0xf]
  %v3978 = vld [vmem:[%s3975 + $0x8] sm:$0xf]
  %v3979 = vld [vmem:[%s3975 + $0xc] sm:$0xf]
  %v3980 = vld [vmem:[%s3975 + $0x10] sm:$0xf]
  %v3981 = vld [vmem:[%s3975 + $0x14] sm:$0xf]
  %v3982 = vld [vmem:[%s3975 + $0x18] sm:$0xf]
  %v3983 = vld [vmem:[%s3975 + $0x1c] sm:$0xf]
  %v3984 = vld [vmem:[%s3975 + $0x20] sm:$0xf]
  %v3985 = vld [vmem:[%s3975 + $0x24] sm:$0xf]
  %v3986 = vpack.c.bf16 %v3974, %v3974
  %v3997 = vunpack.c.l.b16 %v3976
  %v3998 = vunpack.c.l.b16 %v3977
  %v3999 = vunpack.c.l.b16 %v3978
  %v4000 = vunpack.c.l.b16 %v3979
  %v4001 = vunpack.c.l.b16 %v3980
  %v4002 = vunpack.c.l.b16 %v3981
  %v4003 = vunpack.c.l.b16 %v3982
  %v4004 = vunpack.c.l.b16 %v3983
  %v4005 = vunpack.c.l.b16 %v3984
  %v4006 = vunpack.c.l.b16 %v3985
  %v4007 = vpack.c.b16 %v3998, %v3997
  %v4008 = vpack.c.b16 %v4000, %v3999
  %v4009 = vpack.c.b16 %v4002, %v4001
  %v4010 = vpack.c.b16 %v4004, %v4003
  %v4011 = vpack.c.b16 %v4006, %v4005
  %v4018 = vsel %vm3857, %v3986, 0
  %4020 = vmatprep.subr.bf16.mxu0 0
  %4021 = vmatpush1.bf16.msra.mxu0 0
  %4022 = vmatprep.subr.bf16.mxu0 0
  %4023 = vmatpush1.bf16.msra.mxu0 0
  %4024 = vmatprep.subr.bf16.mxu0 0
  %4025 = vmatpush1.bf16.msra.mxu0 0
  %4026 = vmatprep.subr.bf16.mxu0 0
  %4027 = vmatpush1.bf16.msra.mxu0 %v4011
  %4028 = vmatprep.subr.bf16.mxu0 0
  %4029 = vmatpush1.bf16.msra.mxu0 %v4010
  %4030 = vmatprep.subr.bf16.mxu0 0
  %4031 = vmatpush1.bf16.msra.mxu0 %v4009
  %4032 = vmatprep.subr.bf16.mxu0 0
  %4033 = vmatpush1.bf16.msra.mxu0 %v4008
  %4034 = vmatprep.subr.bf16.mxu0 0
  %4035 = vmatpush1.bf16.msra.mxu0 %v4007
  %4036 = vmatprep.subr.bf16.mxu0 0
  %4037 = vmatpush2.bf16.msra.mxu0 0
  %4038 = vmatprep.subr.bf16.mxu0 0
  %4039 = vmatpush2.bf16.msra.mxu0 0
  %4040 = vmatprep.subr.bf16.mxu0 0
  %4041 = vmatpush2.bf16.msra.mxu0 0
  %4042 = vmatprep.subr.bf16.mxu0 0
  %4043 = vmatpush2.bf16.msra.mxu0 0
  %4044 = vmatprep.subr.bf16.mxu0 0
  %4045 = vmatpush2.bf16.msra.mxu0 0
  %4046 = vmatprep.subr.bf16.mxu0 0
  %4047 = vmatpush2.bf16.msra.mxu0 0
  %4048 = vmatprep.subr.bf16.mxu0 0
  %4049 = vmatpush2.bf16.msra.mxu0 0
  %4050 = vmatprep.subr.bf16.mxu0 0
  %4051 = vmatpush2.bf16.msra.mxu0 0
  %4052 = vmatprep.mubr.bf16.mxu0 0
  %4053 = vmatmul.mubr.bf16.gmra.mxu0 %v4018
  %v4054 = vpop.f32.mrf.mxu0
  %v4055 = vadd.f32 0.0, %v4054
  %v4056 = vpop.f32.mrf.mxu0
  %v4057 = vpop.f32.mrf.mxu0
  %v4058 = vpop.f32.mrf.mxu0
  %4059 = vdwg.mxu0
  %v4060 = vadd.f32 %v3969, %v4055
  %v4061 = vmax.f32 %v3798, %v3799
  %s4062 = scalar_lea.vmem %s9, 120
  %v4063 = vld [vmem:[%s4062] sm:$0xf]
  %v4064 = vld [vmem:[%s4062 + $0x4] sm:$0xf]
  %v4065 = vld [vmem:[%s4062 + $0x8] sm:$0xf]
  %v4066 = vld [vmem:[%s4062 + $0xc] sm:$0xf]
  %v4067 = vld [vmem:[%s4062 + $0x10] sm:$0xf]
  %v4068 = vld [vmem:[%s4062 + $0x14] sm:$0xf]
  %v4069 = vld [vmem:[%s4062 + $0x18] sm:$0xf]
  %v4070 = vld [vmem:[%s4062 + $0x1c] sm:$0xf]
  %v4071 = vld [vmem:[%s4062 + $0x20] sm:$0xf]
  %v4072 = vld [vmem:[%s4062 + $0x24] sm:$0xf]
  %v4073 = vpack.c.bf16 %v4061, %v4061
  %v4084 = vunpack.c.l.b16 %v4063
  %v4085 = vunpack.c.l.b16 %v4064
  %v4086 = vunpack.c.l.b16 %v4065
  %v4087 = vunpack.c.l.b16 %v4066
  %v4088 = vunpack.c.l.b16 %v4067
  %v4089 = vunpack.c.l.b16 %v4068
  %v4090 = vunpack.c.l.b16 %v4069
  %v4091 = vunpack.c.l.b16 %v4070
  %v4092 = vunpack.c.l.b16 %v4071
  %v4093 = vunpack.c.l.b16 %v4072
  %v4094 = vpack.c.b16 %v4085, %v4084
  %v4095 = vpack.c.b16 %v4087, %v4086
  %v4096 = vpack.c.b16 %v4089, %v4088
  %v4097 = vpack.c.b16 %v4091, %v4090
  %v4098 = vpack.c.b16 %v4093, %v4092
  %v4105 = vsel %vm3857, %v4073, 0
  %4107 = vmatprep.subr.bf16.mxu0 0
  %4108 = vmatpush1.bf16.msra.mxu0 0
  %4109 = vmatprep.subr.bf16.mxu0 0
  %4110 = vmatpush1.bf16.msra.mxu0 0
  %4111 = vmatprep.subr.bf16.mxu0 0
  %4112 = vmatpush1.bf16.msra.mxu0 0
  %4113 = vmatprep.subr.bf16.mxu0 0
  %4114 = vmatpush1.bf16.msra.mxu0 %v4098
  %4115 = vmatprep.subr.bf16.mxu0 0
  %4116 = vmatpush1.bf16.msra.mxu0 %v4097
  %4117 = vmatprep.subr.bf16.mxu0 0
  %4118 = vmatpush1.bf16.msra.mxu0 %v4096
  %4119 = vmatprep.subr.bf16.mxu0 0
  %4120 = vmatpush1.bf16.msra.mxu0 %v4095
  %4121 = vmatprep.subr.bf16.mxu0 0
  %4122 = vmatpush1.bf16.msra.mxu0 %v4094
  %4123 = vmatprep.subr.bf16.mxu0 0
  %4124 = vmatpush2.bf16.msra.mxu0 0
  %4125 = vmatprep.subr.bf16.mxu0 0
  %4126 = vmatpush2.bf16.msra.mxu0 0
  %4127 = vmatprep.subr.bf16.mxu0 0
  %4128 = vmatpush2.bf16.msra.mxu0 0
  %4129 = vmatprep.subr.bf16.mxu0 0
  %4130 = vmatpush2.bf16.msra.mxu0 0
  %4131 = vmatprep.subr.bf16.mxu0 0
  %4132 = vmatpush2.bf16.msra.mxu0 0
  %4133 = vmatprep.subr.bf16.mxu0 0
  %4134 = vmatpush2.bf16.msra.mxu0 0
  %4135 = vmatprep.subr.bf16.mxu0 0
  %4136 = vmatpush2.bf16.msra.mxu0 0
  %4137 = vmatprep.subr.bf16.mxu0 0
  %4138 = vmatpush2.bf16.msra.mxu0 0
  %4139 = vmatprep.mubr.bf16.mxu0 0
  %4140 = vmatmul.mubr.bf16.gmra.mxu0 %v4105
  %v4141 = vpop.f32.mrf.mxu0
  %v4142 = vadd.f32 0.0, %v4141
  %v4143 = vpop.f32.mrf.mxu0
  %v4144 = vpop.f32.mrf.mxu0
  %v4145 = vpop.f32.mrf.mxu0
  %4146 = vdwg.mxu0
  %v4147 = vadd.f32 %v4060, %v4142
  %v4148 = vmax.f32 %v3800, %v3801
  %s4149 = scalar_lea.vmem %s9, 160
  %v4150 = vld [vmem:[%s4149] sm:$0xf]
  %v4151 = vld [vmem:[%s4149 + $0x4] sm:$0xf]
  %v4152 = vld [vmem:[%s4149 + $0x8] sm:$0xf]
  %v4153 = vld [vmem:[%s4149 + $0xc] sm:$0xf]
  %v4154 = vld [vmem:[%s4149 + $0x10] sm:$0xf]
  %v4155 = vld [vmem:[%s4149 + $0x14] sm:$0xf]
  %v4156 = vld [vmem:[%s4149 + $0x18] sm:$0xf]
  %v4157 = vld [vmem:[%s4149 + $0x1c] sm:$0xf]
  %v4158 = vld [vmem:[%s4149 + $0x20] sm:$0xf]
  %v4159 = vld [vmem:[%s4149 + $0x24] sm:$0xf]
  %v4160 = vpack.c.bf16 %v4148, %v4148
  %v4171 = vunpack.c.l.b16 %v4150
  %v4172 = vunpack.c.l.b16 %v4151
  %v4173 = vunpack.c.l.b16 %v4152
  %v4174 = vunpack.c.l.b16 %v4153
  %v4175 = vunpack.c.l.b16 %v4154
  %v4176 = vunpack.c.l.b16 %v4155
  %v4177 = vunpack.c.l.b16 %v4156
  %v4178 = vunpack.c.l.b16 %v4157
  %v4179 = vunpack.c.l.b16 %v4158
  %v4180 = vunpack.c.l.b16 %v4159
  %v4181 = vpack.c.b16 %v4172, %v4171
  %v4182 = vpack.c.b16 %v4174, %v4173
  %v4183 = vpack.c.b16 %v4176, %v4175
  %v4184 = vpack.c.b16 %v4178, %v4177
  %v4185 = vpack.c.b16 %v4180, %v4179
  %v4192 = vsel %vm3857, %v4160, 0
  %4194 = vmatprep.subr.bf16.mxu0 0
  %4195 = vmatpush1.bf16.msra.mxu0 0
  %4196 = vmatprep.subr.bf16.mxu0 0
  %4197 = vmatpush1.bf16.msra.mxu0 0
  %4198 = vmatprep.subr.bf16.mxu0 0
  %4199 = vmatpush1.bf16.msra.mxu0 0
  %4200 = vmatprep.subr.bf16.mxu0 0
  %4201 = vmatpush1.bf16.msra.mxu0 %v4185
  %4202 = vmatprep.subr.bf16.mxu0 0
  %4203 = vmatpush1.bf16.msra.mxu0 %v4184
  %4204 = vmatprep.subr.bf16.mxu0 0
  %4205 = vmatpush1.bf16.msra.mxu0 %v4183
  %4206 = vmatprep.subr.bf16.mxu0 0
  %4207 = vmatpush1.bf16.msra.mxu0 %v4182
  %4208 = vmatprep.subr.bf16.mxu0 0
  %4209 = vmatpush1.bf16.msra.mxu0 %v4181
  %4210 = vmatprep.subr.bf16.mxu0 0
  %4211 = vmatpush2.bf16.msra.mxu0 0
  %4212 = vmatprep.subr.bf16.mxu0 0
  %4213 = vmatpush2.bf16.msra.mxu0 0
  %4214 = vmatprep.subr.bf16.mxu0 0
  %4215 = vmatpush2.bf16.msra.mxu0 0
  %4216 = vmatprep.subr.bf16.mxu0 0
  %4217 = vmatpush2.bf16.msra.mxu0 0
  %4218 = vmatprep.subr.bf16.mxu0 0
  %4219 = vmatpush2.bf16.msra.mxu0 0
  %4220 = vmatprep.subr.bf16.mxu0 0
  %4221 = vmatpush2.bf16.msra.mxu0 0
  %4222 = vmatprep.subr.bf16.mxu0 0
  %4223 = vmatpush2.bf16.msra.mxu0 0
  %4224 = vmatprep.subr.bf16.mxu0 0
  %4225 = vmatpush2.bf16.msra.mxu0 0
  %4226 = vmatprep.mubr.bf16.mxu0 0
  %4227 = vmatmul.mubr.bf16.gmra.mxu0 %v4192
  %v4228 = vpop.f32.mrf.mxu0
  %v4229 = vadd.f32 0.0, %v4228
  %v4230 = vpop.f32.mrf.mxu0
  %v4231 = vpop.f32.mrf.mxu0
  %v4232 = vpop.f32.mrf.mxu0
  %4233 = vdwg.mxu0
  %v4234 = vadd.f32 %v4147, %v4229
  %v4235 = vld [vmem:[%s10] sm:$0x1]
  %v4237 = vlaneseq
  %v4238 = vshrl.u32 %v4237, 7
  %v4239 = vsub.s32 0, %v4238
  %v4240 = vrot.slane %v4235, %v4239
  %v4242 = vadd.f32 %v4234, %v4240
  %v4243 = vmax.f32 %v4242, 0.0
  %v4244 = vld [vmem:[%s11] sm:$0xf]
  %v4245 = vld [vmem:[%s11 + $0x4] sm:$0xf]
  %v4246 = vld [vmem:[%s11 + $0x8] sm:$0xf]
  %v4247 = vld [vmem:[%s11 + $0xc] sm:$0xf]
  %v4248 = vld [vmem:[%s11 + $0x10] sm:$0xf]
  %v4249 = vld [vmem:[%s11 + $0x14] sm:$0xf]
  %v4250 = vld [vmem:[%s11 + $0x18] sm:$0xf]
  %v4251 = vld [vmem:[%s11 + $0x1c] sm:$0xf]
  %v4252 = vld [vmem:[%s11 + $0x20] sm:$0xf]
  %v4253 = vld [vmem:[%s11 + $0x24] sm:$0xf]
  %v4254 = vld [vmem:[%s11 + $0x28] sm:$0xf]
  %v4255 = vld [vmem:[%s11 + $0x2c] sm:$0xf]
  %v4256 = vld [vmem:[%s11 + $0x30] sm:$0xf]
  %v4257 = vld [vmem:[%s11 + $0x34] sm:$0xf]
  %v4258 = vld [vmem:[%s11 + $0x38] sm:$0xf]
  %v4259 = vpack.c.bf16 %v4243, %v4243
  %v4260 = vld [vmem:[%s12] sm:$0x1]
  %v4262 = vlaneseq
  %v4263 = vshrl.u32 %v4262, 7
  %v4264 = vsub.s32 0, %v4263
  %v4265 = vrot.slane %v4260, %v4264
  %v4282 = vunpack.c.l.b16 %v4244
  %v4283 = vunpack.c.l.b16 %v4245
  %v4284 = vunpack.c.l.b16 %v4246
  %v4285 = vunpack.c.l.b16 %v4247
  %v4286 = vunpack.c.l.b16 %v4248
  %v4287 = vunpack.c.l.b16 %v4249
  %v4288 = vunpack.c.l.b16 %v4250
  %v4289 = vunpack.c.l.b16 %v4251
  %v4290 = vunpack.c.l.b16 %v4252
  %v4291 = vunpack.c.l.b16 %v4253
  %v4292 = vunpack.c.l.b16 %v4254
  %v4293 = vunpack.c.l.b16 %v4255
  %v4294 = vunpack.c.l.b16 %v4256
  %v4295 = vunpack.c.l.b16 %v4257
  %v4296 = vunpack.c.l.b16 %v4258
  %v4297 = vpack.c.b16 %v4283, %v4282
  %v4298 = vpack.c.b16 %v4285, %v4284
  %v4299 = vpack.c.b16 %v4287, %v4286
  %v4300 = vpack.c.b16 %v4289, %v4288
  %v4301 = vpack.c.b16 %v4291, %v4290
  %v4302 = vpack.c.b16 %v4293, %v4292
  %v4303 = vpack.c.b16 %v4295, %v4294
  %v4304 = vpack.c.b16 %v4296, %v4296
  %vm4312 = vcmask 982016
  %v4314 = vsel %vm4312, %v4259, 0
  %v4317 = vsel %vm1989, %v4304, 0
  %4319 = vmatprep.subr.bf16.mxu0 0
  %4320 = vmatpush1.bf16.msra.mxu0 %v4317
  %4321 = vmatprep.subr.bf16.mxu0 0
  %4322 = vmatpush1.bf16.msra.mxu0 %v4303
  %4323 = vmatprep.subr.bf16.mxu0 0
  %4324 = vmatpush1.bf16.msra.mxu0 %v4302
  %4325 = vmatprep.subr.bf16.mxu0 0
  %4326 = vmatpush1.bf16.msra.mxu0 %v4301
  %4327 = vmatprep.subr.bf16.mxu0 0
  %4328 = vmatpush1.bf16.msra.mxu0 %v4300
  %4329 = vmatprep.subr.bf16.mxu0 0
  %4330 = vmatpush1.bf16.msra.mxu0 %v4299
  %4331 = vmatprep.subr.bf16.mxu0 0
  %4332 = vmatpush1.bf16.msra.mxu0 %v4298
  %4333 = vmatprep.subr.bf16.mxu0 0
  %4334 = vmatpush1.bf16.msra.mxu0 %v4297
  %4335 = vmatprep.subr.bf16.mxu0 0
  %4336 = vmatpush2.bf16.msra.mxu0 0
  %4337 = vmatprep.subr.bf16.mxu0 0
  %4338 = vmatpush2.bf16.msra.mxu0 0
  %4339 = vmatprep.subr.bf16.mxu0 0
  %4340 = vmatpush2.bf16.msra.mxu0 0
  %4341 = vmatprep.subr.bf16.mxu0 0
  %4342 = vmatpush2.bf16.msra.mxu0 0
  %4343 = vmatprep.subr.bf16.mxu0 0
  %4344 = vmatpush2.bf16.msra.mxu0 0
  %4345 = vmatprep.subr.bf16.mxu0 0
  %4346 = vmatpush2.bf16.msra.mxu0 0
  %4347 = vmatprep.subr.bf16.mxu0 0
  %4348 = vmatpush2.bf16.msra.mxu0 0
  %4349 = vmatprep.subr.bf16.mxu0 0
  %4350 = vmatpush2.bf16.msra.mxu0 0
  %4351 = vmatprep.mubr.bf16.mxu0 0
  %4352 = vmatmul.mubr.bf16.gmra.mxu0 %v4314
  %v4353 = vpop.f32.mrf.mxu0
  %v4354 = vadd.f32 %v4265, %v4353
  %v4355 = vpop.f32.mrf.mxu0
  %v4356 = vpop.f32.mrf.mxu0
  %v4357 = vpop.f32.mrf.mxu0
  %4358 = vdwg.mxu0
  %v4359 = vmax.f32 %v4354, 0.0
  %v4360 = vld [vmem:[%s13] sm:$0xf]
  %v4361 = vld [vmem:[%s13 + $0x4] sm:$0xf]
  %v4362 = vld [vmem:[%s13 + $0x8] sm:$0xf]
  %v4363 = vld [vmem:[%s13 + $0xc] sm:$0xf]
  %v4364 = vld [vmem:[%s13 + $0x10] sm:$0xf]
  %v4365 = vld [vmem:[%s13 + $0x14] sm:$0xf]
  %v4366 = vld [vmem:[%s13 + $0x18] sm:$0xf]
  %v4367 = vld [vmem:[%s13 + $0x1c] sm:$0xf]
  %v4368 = vld [vmem:[%s13 + $0x20] sm:$0xf]
  %v4369 = vld [vmem:[%s13 + $0x24] sm:$0xf]
  %v4370 = vld [vmem:[%s13 + $0x28] sm:$0x3]
  %v4371 = vpack.c.bf16 %v4359, %v4359
  %v4372 = vld [vmem:[%s14] sm:$0x1]
  %v4374 = vlaneseq
  %v4375 = vshrl.u32 %v4374, 7
  %v4376 = vsub.s32 0, %v4375
  %v4377 = vrot.slane %v4372, %v4376
  %v4390 = vunpack.c.l.b16 %v4360
  %v4391 = vunpack.c.l.b16 %v4361
  %v4392 = vunpack.c.l.b16 %v4362
  %v4393 = vunpack.c.l.b16 %v4363
  %v4394 = vunpack.c.l.b16 %v4364
  %v4395 = vunpack.c.l.b16 %v4365
  %v4396 = vunpack.c.l.b16 %v4366
  %v4397 = vunpack.c.l.b16 %v4367
  %v4398 = vunpack.c.l.b16 %v4368
  %v4399 = vunpack.c.l.b16 %v4369
  %v4400 = vunpack.c.l.b16 %v4370
  %v4401 = vpack.c.b16 %v4391, %v4390
  %v4402 = vpack.c.b16 %v4393, %v4392
  %v4403 = vpack.c.b16 %v4395, %v4394
  %v4404 = vpack.c.b16 %v4397, %v4396
  %v4405 = vpack.c.b16 %v4399, %v4398
  %v4406 = vpack.c.b16 %v4400, %v4400
  %v4413 = vsel %vm2399, %v4371, 0
  %v4416 = vsel %vm2541, %v4406, 0
  %4418 = vmatprep.subr.bf16.mxu0 0
  %4419 = vmatpush1.bf16.msra.mxu0 0
  %4420 = vmatprep.subr.bf16.mxu0 0
  %4421 = vmatpush1.bf16.msra.mxu0 0
  %4422 = vmatprep.subr.bf16.mxu0 0
  %4423 = vmatpush1.bf16.msra.mxu0 %v4416
  %4424 = vmatprep.subr.bf16.mxu0 0
  %4425 = vmatpush1.bf16.msra.mxu0 %v4405
  %4426 = vmatprep.subr.bf16.mxu0 0
  %4427 = vmatpush1.bf16.msra.mxu0 %v4404
  %4428 = vmatprep.subr.bf16.mxu0 0
  %4429 = vmatpush1.bf16.msra.mxu0 %v4403
  %4430 = vmatprep.subr.bf16.mxu0 0
  %4431 = vmatpush1.bf16.msra.mxu0 %v4402
  %4432 = vmatprep.subr.bf16.mxu0 0
  %4433 = vmatpush1.bf16.msra.mxu0 %v4401
  %4434 = vmatprep.subr.bf16.mxu0 0
  %4435 = vmatpush2.bf16.msra.mxu0 0
  %4436 = vmatprep.subr.bf16.mxu0 0
  %4437 = vmatpush2.bf16.msra.mxu0 0
  %4438 = vmatprep.subr.bf16.mxu0 0
  %4439 = vmatpush2.bf16.msra.mxu0 0
  %4440 = vmatprep.subr.bf16.mxu0 0
  %4441 = vmatpush2.bf16.msra.mxu0 0
  %4442 = vmatprep.subr.bf16.mxu0 0
  %4443 = vmatpush2.bf16.msra.mxu0 0
  %4444 = vmatprep.subr.bf16.mxu0 0
  %4445 = vmatpush2.bf16.msra.mxu0 0
  %4446 = vmatprep.subr.bf16.mxu0 0
  %4447 = vmatpush2.bf16.msra.mxu0 0
  %4448 = vmatprep.subr.bf16.mxu0 0
  %4449 = vmatpush2.bf16.msra.mxu0 0
  %4450 = vmatprep.mubr.bf16.mxu0 0
  %4451 = vmatmul.mubr.bf16.gmra.mxu0 %v4413
  %v4452 = vpop.f32.mrf.mxu0
  %v4453 = vadd.f32 %v4377, %v4452
  %v4454 = vpop.f32.mrf.mxu0
  %v4455 = vpop.f32.mrf.mxu0
  %v4456 = vpop.f32.mrf.mxu0
  %4457 = vdwg.mxu0
  %4458 = vst [vmem:[%s15] sm:$0xff] %v4453
  // Predicated region
  $region62: #{lenet_forward.1} parent=0 // pred_check
    _
  $region63: #{lenet_forward.1} parent=0 // pred_check_branch
    %4460 = sbr.rel (0) target = $region65
  $region64: #{lenet_forward.1} parent=0 // pred_region
    _
  $region65: #{lenet_forward.1} parent=0 // pred_fallthru
    _
  // Predicated region
  $region66: #{lenet_forward.1} parent=0 // pred_check
    _
  $region67: #{lenet_forward.1} parent=0 // pred_check_branch
    %4462 = sbr.rel (0) target = $region69
  $region68: #{lenet_forward.1} parent=0 // pred_region
    _
  $region69: #{lenet_forward.1} parent=0 // pred_fallthru
    _

</llo_original>
